<compile_context>
chip_gen: v6e
topology: v6e:2x2x1
jax: 0.10.0
libtpu: 0.0.40
codegen_flags: <defaults>
</compile_context>

<pallas_src>
import functools
import numpy as np
import jax
import jax.numpy as jnp
from jax import lax
from jax.experimental import pallas as pl
from jax.experimental.pallas import tpu as pltpu

IMG_SIZE = 32
K_NN = 8                       # present in the torch module; unused in forward
IN_CHANNELS = 3
HIDDEN = 16
NUM_CLASSES = 10
NUM_CLASSES_DYNAMIC = 10
# torch module hardcodes GCNConv(163, hidden): 3 + 10*16 = 163
GCN1_IN = IN_CHANNELS + NUM_CLASSES_DYNAMIC * HIDDEN
assert GCN1_IN == 163
CLASS_THRESHOLDS = np.linspace(0.5, 0.01, NUM_CLASSES_DYNAMIC).astype(np.float32)


def _model_kernel(x_ref, pos_ref, ei_ref, dstrow_ref, batch_ref,
                  wsrc_ref, wdst_ref, bfold_ref,        # folded filter+MLP1: (3,160)x2,(1,160)
                  w2b_ref, b2t_ref, thr_ref,            # block-diag MLP2 (160,160),(1,160),(1,160)
                  wg1x_ref, wg1a_ref, bg1_ref,          # GCN1 split: (3,16),(160,16),(1,16)
                  wg2_ref, bg2_ref,                     # GCN2: (16,16),(1,16)
                  wcls_ref, bcls_ref,                   # classifier: (16,10),(1,10)
                  out_ref,
                  *, num_graphs, img_size):
    f32 = jnp.float32
    x = x_ref[...]                        # (N, Cin)  node features == pixel values
    pos = pos_ref[...]                    # (N, 2)
    N = x.shape[0]
    E = ei_ref.shape[0]

    # ---- one-hot incidence, built directly in the orientation used (no .T) ----
    src_col = ei_ref[:, 0:1]              # (E, 1) int32
    dst_col = ei_ref[:, 1:2]              # (E, 1) int32
    dst_row = dstrow_ref[...]             # (1, E) int32
    iota_en = lax.broadcasted_iota(jnp.int32, (E, N), 1)
    src_oh_T = (iota_en == src_col).astype(f32)          # (E, N)  gather rows
    dst_oh_T = (iota_en == dst_col).astype(f32)          # (E, N)
    iota_ne = lax.broadcasted_iota(jnp.int32, (N, E), 0)
    dst_oh = (iota_ne == dst_row).astype(f32)            # (N, E)  scatter

    # ---- gather endpoint features once ----
    x_src = jnp.dot(src_oh_T, x, preferred_element_type=f32)       # (E, Cin)
    x_dst = jnp.dot(dst_oh_T, x, preferred_element_type=f32)       # (E, Cin)
    pos_src = jnp.dot(src_oh_T, pos, preferred_element_type=f32)   # (E, 2)
    pos_dst = jnp.dot(dst_oh_T, pos, preferred_element_type=f32)   # (E, 2)

    # ---- per-edge similarity (replaces dense NxN A_dist/A_pixel kernels) ----
    # a_edge[e] = exp(-||pos_s-pos_d||/img / sigma_d^2) + exp(-||x_s-x_d||/255 / 0.05^2)
    sigma_d = 0.05 * np.pi
    dpos = (pos_src - pos_dst) * (1.0 / img_size)
    dist_pos = jnp.sqrt(jnp.maximum(jnp.sum(dpos * dpos, axis=1, keepdims=True), 0.0))
    dpix = (x_src - x_dst) * (1.0 / 255.0)
    dist_pix = jnp.sqrt(jnp.maximum(jnp.sum(dpix * dpix, axis=1, keepdims=True), 0.0))
    a_edge = (jnp.exp(-dist_pos / (sigma_d * sigma_d))
              + jnp.exp(-dist_pix / (0.05 * 0.05)))                 # (E, 1)

    # ---- batched edge MLP over all classes (lane-dense, C*H = 160 wide) ----
    h1 = jnp.maximum(
        jnp.dot(x_src, wsrc_ref[...], preferred_element_type=f32)
        + jnp.dot(x_dst, wdst_ref[...], preferred_element_type=f32)
        + bfold_ref[...], 0.0)                                      # (E, 160)
    e_out = jnp.dot(h1, w2b_ref[...], preferred_element_type=f32) + b2t_ref[...]   # (E, 160)
    # edge kept for class c iff a_edge >= threshold_c (a_edge is always > 0)
    mask = (a_edge >= thr_ref[...]).astype(f32)                     # (E, 160)
    # global_add_pool over dst for ALL classes in one scatter matmul
    agg_all = jnp.dot(dst_oh, e_out * mask, preferred_element_type=f32)   # (N, 160)

    # ---- GCN adjacency (A + I), degree normalization fused into the matmuls ----
    A_hat = jnp.dot(dst_oh, src_oh_T, preferred_element_type=f32)   # A[i,j] = #edges j->i
    eye = (lax.broadcasted_iota(jnp.int32, (N, N), 0)
           == lax.broadcasted_iota(jnp.int32, (N, N), 1)).astype(f32)
    A_hat = A_hat + eye
    deg = jnp.sum(A_hat, axis=1, keepdims=True)                     # (N, 1)
    d_is = jnp.where(deg > 0.0, lax.rsqrt(deg), 0.0)

    # GCN1: (x|agg_all) @ wg1 split to stay lane-aligned (no 163-wide concat)
    xw1 = (jnp.dot(x, wg1x_ref[...], preferred_element_type=f32)
           + jnp.dot(agg_all, wg1a_ref[...], preferred_element_type=f32))          # (N, 16)
    h1n = jnp.maximum(
        d_is * jnp.dot(A_hat, d_is * xw1, preferred_element_type=f32) + bg1_ref[...], 0.0)
    xw2 = jnp.dot(h1n, wg2_ref[...], preferred_element_type=f32)
    h2n = jnp.maximum(
        d_is * jnp.dot(A_hat, d_is * xw2, preferred_element_type=f32) + bg2_ref[...], 0.0)

    # ---- global mean pool over `batch` ----
    batch_ids = batch_ref[...]                                      # (1, N) int32
    pool_oh = (lax.broadcasted_iota(jnp.int32, (num_graphs, N), 0)
               == batch_ids).astype(f32)                            # (B, N)
    counts = jnp.sum(pool_oh, axis=1, keepdims=True)
    pooled = jnp.dot(pool_oh, h2n, preferred_element_type=f32) / jnp.maximum(counts, 1.0)

    # ---- classifier ----
    out_ref[...] = jnp.dot(pooled, wcls_ref[...], preferred_element_type=f32) + bcls_ref[...]


def build_params(key):
    ks = jax.random.split(key, 12)
    s = 0.1
    wf = jax.random.normal(ks[0], (NUM_CLASSES_DYNAMIC * IN_CHANNELS, HIDDEN), jnp.float32) * s
    bf = jax.random.normal(ks[1], (NUM_CLASSES_DYNAMIC, HIDDEN), jnp.float32) * s
    w1 = jax.random.normal(ks[2], (2 * HIDDEN, HIDDEN), jnp.float32) * s
    b1 = jax.random.normal(ks[3], (1, HIDDEN), jnp.float32) * s
    w2 = jax.random.normal(ks[4], (HIDDEN, HIDDEN), jnp.float32) * s
    b2 = jax.random.normal(ks[5], (1, HIDDEN), jnp.float32) * s
    wg1 = jax.random.normal(ks[6], (GCN1_IN, HIDDEN), jnp.float32) * s
    bg1 = jax.random.normal(ks[7], (1, HIDDEN), jnp.float32) * s
    wg2 = jax.random.normal(ks[8], (HIDDEN, HIDDEN), jnp.float32) * s
    bg2 = jax.random.normal(ks[9], (1, HIDDEN), jnp.float32) * s
    wcls = jax.random.normal(ks[10], (HIDDEN, NUM_CLASSES), jnp.float32) * s
    bcls = jax.random.normal(ks[11], (1, NUM_CLASSES), jnp.float32) * s
    return (wf, bf, w1, b1, w2, b2, wg1, bg1, wg2, bg2, wcls, bcls)


def _fold_params(params):
    """Fold the per-class node filters into the edge-MLP first layer and build
    the block-diagonal second layer, so the kernel runs all 10 classes as
    lane-dense (E,160) matmuls."""
    (wf, bf, w1, b1, w2, b2, wg1, bg1, wg2, bg2, wcls, bcls) = params
    C, H, Cin = NUM_CLASSES_DYNAMIC, HIDDEN, IN_CHANNELS
    w1_src, w1_dst = w1[:H, :], w1[H:, :]                       # (16,16) each
    wf3 = wf.reshape(C, Cin, H)                                 # per-class (3,16)
    # W_src_c = wf_c @ w1_src  -> stack horizontally as (3, 160)
    wsrc = jnp.transpose(jnp.matmul(wf3, w1_src), (1, 0, 2)).reshape(Cin, C * H)
    wdst = jnp.transpose(jnp.matmul(wf3, w1_dst), (1, 0, 2)).reshape(Cin, C * H)
    # folded bias: bf_c @ (w1_src + w1_dst) + b1, stacked -> (1, 160)
    bfold = (jnp.matmul(bf, w1_src + w1_dst) + b1).reshape(1, C * H)
    # block-diagonal second MLP layer -> one (160,160) matmul for all classes
    w2b = jnp.kron(jnp.eye(C, dtype=w2.dtype), w2)              # (160, 160)
    b2t = jnp.tile(b2, (1, C))                                  # (1, 160)
    thr = jnp.repeat(jnp.asarray(CLASS_THRESHOLDS, jnp.float32), H).reshape(1, C * H)
    wg1x, wg1a = wg1[:Cin, :], wg1[Cin:, :]                     # (3,16), (160,16)
    return (wsrc, wdst, bfold, w2b, b2t, thr, wg1x, wg1a, bg1, wg2, bg2, wcls, bcls)


def graph_classification_forward(x, pos, edge_index, batch, params, num_graphs):
    folded = _fold_params(params)
    ei_t = edge_index.T.astype(jnp.int32)            # (E, 2) [src, dst] columns
    dst_row = edge_index[1:2, :].astype(jnp.int32)   # (1, E)
    batch_2d = batch.reshape(1, -1).astype(jnp.int32)
    kernel = functools.partial(_model_kernel,
                               num_graphs=num_graphs,
                               img_size=float(IMG_SIZE))
    vmem = pl.BlockSpec(memory_space=pltpu.MemorySpace.VMEM)
    inputs = (x, pos, ei_t, dst_row, batch_2d) + folded
    return pl.pallas_call(
        kernel,
        out_shape=jax.ShapeDtypeStruct((num_graphs, NUM_CLASSES), jnp.float32),
        in_specs=[vmem] * len(inputs),
        out_specs=vmem,
        compiler_params=pltpu.CompilerParams(vmem_limit_bytes=8 << 20),
    )(*inputs)


if __name__ == "__main__":
    N, E, B = 64, 256, 2
    key = jax.random.PRNGKey(0)
    k_x, k_pos, k_ei, k_p = jax.random.split(key, 4)
    # node features == raw pixel values (the module passes x as pixel_values)
    x = jnp.round(jax.random.uniform(k_x, (N, IN_CHANNELS), jnp.float32, 0.0, 255.0))
    pos = jax.random.uniform(k_pos, (N, 2), jnp.float32, 0.0, float(IMG_SIZE))
    edge_index = jax.random.randint(k_ei, (2, E), 0, N, jnp.int32)
    batch = jnp.repeat(jnp.arange(B, dtype=jnp.int32), N // B)
    params = build_params(k_p)

    out = graph_classification_forward(x, pos, edge_index, batch, params, B)
    out = jax.block_until_ready(out)
    assert out.shape == (B, NUM_CLASSES) and out.dtype == jnp.float32
    assert bool(jnp.all(jnp.isfinite(out)))
    print("KERNEL_OK")
</pallas_src>

<mosaic_0001>
module attributes {stable_mosaic.version = 11 : i64} {
  func.func @_model_kernel(%arg0: memref<64x3xf32, #tpu.memory_space<vmem>>, %arg1: memref<64x2xf32, #tpu.memory_space<vmem>>, %arg2: memref<256x2xi32, #tpu.memory_space<vmem>>, %arg3: memref<1x256xi32, #tpu.memory_space<vmem>>, %arg4: memref<1x64xi32, #tpu.memory_space<vmem>>, %arg5: memref<3x160xf32, #tpu.memory_space<vmem>>, %arg6: memref<3x160xf32, #tpu.memory_space<vmem>>, %arg7: memref<1x160xf32, #tpu.memory_space<vmem>>, %arg8: memref<160x160xf32, #tpu.memory_space<vmem>>, %arg9: memref<1x160xf32, #tpu.memory_space<vmem>>, %arg10: memref<1x160xf32, #tpu.memory_space<vmem>>, %arg11: memref<3x16xf32, #tpu.memory_space<vmem>>, %arg12: memref<160x16xf32, #tpu.memory_space<vmem>>, %arg13: memref<1x16xf32, #tpu.memory_space<vmem>>, %arg14: memref<16x16xf32, #tpu.memory_space<vmem>>, %arg15: memref<1x16xf32, #tpu.memory_space<vmem>>, %arg16: memref<16x10xf32, #tpu.memory_space<vmem>>, %arg17: memref<1x10xf32, #tpu.memory_space<vmem>>, %arg18: memref<2x10xf32, #tpu.memory_space<vmem>>) attributes {dimension_semantics = [], scalar_prefetch = 0 : i64, scratch_operands = 0 : i64, tpu.core_type = #tpu.core_type<tc>} {
    %c0 = arith.constant 0 : index
    %c0_0 = arith.constant 0 : index
    %0 = vector.load %arg0[%c0, %c0_0] : memref<64x3xf32, #tpu.memory_space<vmem>>, vector<64x3xf32>
    %c0_1 = arith.constant 0 : index
    %c0_2 = arith.constant 0 : index
    %1 = vector.load %arg1[%c0_1, %c0_2] : memref<64x2xf32, #tpu.memory_space<vmem>>, vector<64x2xf32>
    %c0_3 = arith.constant 0 : index
    %c0_4 = arith.constant 0 : index
    %2 = vector.load %arg2[%c0_3, %c0_4] : memref<256x2xi32, #tpu.memory_space<vmem>>, vector<256x1xi32>
    %c0_5 = arith.constant 0 : index
    %c1 = arith.constant 1 : index
    %3 = vector.load %arg2[%c0_5, %c1] : memref<256x2xi32, #tpu.memory_space<vmem>>, vector<256x1xi32>
    %c0_6 = arith.constant 0 : index
    %c0_7 = arith.constant 0 : index
    %4 = vector.load %arg3[%c0_6, %c0_7] : memref<1x256xi32, #tpu.memory_space<vmem>>, vector<1x256xi32>
    %5 = tpu.iota {dimensions = array<i32: 1>} : vector<256x64xi32>
    %6 = vector.broadcast %2 : vector<256x1xi32> to vector<256x64xi32>
    %7 = arith.cmpi eq, %5, %6 : vector<256x64xi32>
    %8 = arith.extui %7 : vector<256x64xi1> to vector<256x64xi32>
    %9 = arith.sitofp %8 : vector<256x64xi32> to vector<256x64xf32>
    %10 = vector.broadcast %3 : vector<256x1xi32> to vector<256x64xi32>
    %11 = arith.cmpi eq, %5, %10 : vector<256x64xi32>
    %12 = arith.extui %11 : vector<256x64xi1> to vector<256x64xi32>
    %13 = arith.sitofp %12 : vector<256x64xi32> to vector<256x64xf32>
    %14 = tpu.iota {dimensions = array<i32: 0>} : vector<64x256xi32>
    %15 = vector.broadcast %4 : vector<1x256xi32> to vector<64x256xi32>
    %16 = arith.cmpi eq, %14, %15 : vector<64x256xi32>
    %17 = arith.extui %16 : vector<64x256xi1> to vector<64x256xi32>
    %18 = arith.sitofp %17 : vector<64x256xi32> to vector<64x256xf32>
    %cst = arith.constant dense<0.000000e+00> : vector<256x3xf32>
    %19 = tpu.matmul %9, %0, %cst {dimension_numbers = #tpu.dot_dimension_numbers<[1], [0], [0], [1], [0, 0, 1, 1], [], []>} : vector<256x64xf32>, vector<64x3xf32>, vector<256x3xf32> -> vector<256x3xf32>
    %cst_8 = arith.constant dense<0.000000e+00> : vector<256x3xf32>
    %20 = tpu.matmul %13, %0, %cst_8 {dimension_numbers = #tpu.dot_dimension_numbers<[1], [0], [0], [1], [0, 0, 1, 1], [], []>} : vector<256x64xf32>, vector<64x3xf32>, vector<256x3xf32> -> vector<256x3xf32>
    %cst_9 = arith.constant dense<0.000000e+00> : vector<256x2xf32>
    %21 = tpu.matmul %9, %1, %cst_9 {dimension_numbers = #tpu.dot_dimension_numbers<[1], [0], [0], [1], [0, 0, 1, 1], [], []>} : vector<256x64xf32>, vector<64x2xf32>, vector<256x2xf32> -> vector<256x2xf32>
    %cst_10 = arith.constant dense<0.000000e+00> : vector<256x2xf32>
    %22 = tpu.matmul %13, %1, %cst_10 {dimension_numbers = #tpu.dot_dimension_numbers<[1], [0], [0], [1], [0, 0, 1, 1], [], []>} : vector<256x64xf32>, vector<64x2xf32>, vector<256x2xf32> -> vector<256x2xf32>
    %23 = arith.subf %21, %22 : vector<256x2xf32>
    %cst_11 = arith.constant 3.125000e-02 : f32
    %24 = vector.broadcast %cst_11 : f32 to vector<256x2xf32>
    %25 = arith.mulf %23, %24 : vector<256x2xf32>
    %26 = arith.mulf %25, %25 : vector<256x2xf32>
    %cst_12 = arith.constant dense<0.000000e+00> : vector<256xf32>
    %27 = vector.multi_reduction <add>, %26, %cst_12 [1] : vector<256x2xf32> to vector<256xf32>
    %28 = vector.shape_cast %27 : vector<256xf32> to vector<256x1xf32>
    %cst_13 = arith.constant 0.000000e+00 : f32
    %29 = vector.broadcast %cst_13 : f32 to vector<256x1xf32>
    %30 = arith.maximumf %28, %29 : vector<256x1xf32>
    %31 = math.sqrt %30 : vector<256x1xf32>
    %32 = arith.subf %19, %20 : vector<256x3xf32>
    %cst_14 = arith.constant 0.00392156886 : f32
    %33 = vector.broadcast %cst_14 : f32 to vector<256x3xf32>
    %34 = arith.mulf %32, %33 : vector<256x3xf32>
    %35 = arith.mulf %34, %34 : vector<256x3xf32>
    %cst_15 = arith.constant dense<0.000000e+00> : vector<256xf32>
    %36 = vector.multi_reduction <add>, %35, %cst_15 [1] : vector<256x3xf32> to vector<256xf32>
    %37 = vector.shape_cast %36 : vector<256xf32> to vector<256x1xf32>
    %cst_16 = arith.constant 0.000000e+00 : f32
    %38 = vector.broadcast %cst_16 : f32 to vector<256x1xf32>
    %39 = arith.maximumf %37, %38 : vector<256x1xf32>
    %40 = math.sqrt %39 : vector<256x1xf32>
    %cst_17 = arith.constant 0.000000e+00 : f32
    %41 = vector.broadcast %cst_17 : f32 to vector<256x1xf32>
    %42 = arith.subf %41, %31 : vector<256x1xf32>
    %cst_18 = arith.constant 0.0246740114 : f32
    %43 = vector.broadcast %cst_18 : f32 to vector<256x1xf32>
    %44 = arith.divf %42, %43 : vector<256x1xf32>
    %45 = math.exp %44 : vector<256x1xf32>
    %cst_19 = arith.constant 0.000000e+00 : f32
    %46 = vector.broadcast %cst_19 : f32 to vector<256x1xf32>
    %47 = arith.subf %46, %40 : vector<256x1xf32>
    %cst_20 = arith.constant 2.500000e-03 : f32
    %48 = vector.broadcast %cst_20 : f32 to vector<256x1xf32>
    %49 = arith.divf %47, %48 : vector<256x1xf32>
    %50 = math.exp %49 : vector<256x1xf32>
    %51 = arith.addf %45, %50 : vector<256x1xf32>
    %c0_21 = arith.constant 0 : index
    %c0_22 = arith.constant 0 : index
    %52 = vector.load %arg5[%c0_21, %c0_22] : memref<3x160xf32, #tpu.memory_space<vmem>>, vector<3x160xf32>
    %cst_23 = arith.constant dense<0.000000e+00> : vector<256x160xf32>
    %53 = tpu.matmul %19, %52, %cst_23 {dimension_numbers = #tpu.dot_dimension_numbers<[1], [0], [0], [1], [0, 0, 1, 1], [], []>} : vector<256x3xf32>, vector<3x160xf32>, vector<256x160xf32> -> vector<256x160xf32>
    %c0_24 = arith.constant 0 : index
    %c0_25 = arith.constant 0 : index
    %54 = vector.load %arg6[%c0_24, %c0_25] : memref<3x160xf32, #tpu.memory_space<vmem>>, vector<3x160xf32>
    %cst_26 = arith.constant dense<0.000000e+00> : vector<256x160xf32>
    %55 = tpu.matmul %20, %54, %cst_26 {dimension_numbers = #tpu.dot_dimension_numbers<[1], [0], [0], [1], [0, 0, 1, 1], [], []>} : vector<256x3xf32>, vector<3x160xf32>, vector<256x160xf32> -> vector<256x160xf32>
    %56 = arith.addf %53, %55 : vector<256x160xf32>
    %c0_27 = arith.constant 0 : index
    %c0_28 = arith.constant 0 : index
    %57 = vector.load %arg7[%c0_27, %c0_28] : memref<1x160xf32, #tpu.memory_space<vmem>>, vector<1x160xf32>
    %58 = vector.broadcast %57 : vector<1x160xf32> to vector<256x160xf32>
    %59 = arith.addf %56, %58 : vector<256x160xf32>
    %cst_29 = arith.constant 0.000000e+00 : f32
    %60 = vector.broadcast %cst_29 : f32 to vector<256x160xf32>
    %61 = arith.maximumf %59, %60 : vector<256x160xf32>
    %c0_30 = arith.constant 0 : index
    %c0_31 = arith.constant 0 : index
    %62 = vector.load %arg8[%c0_30, %c0_31] : memref<160x160xf32, #tpu.memory_space<vmem>>, vector<160x160xf32>
    %cst_32 = arith.constant dense<0.000000e+00> : vector<256x160xf32>
    %63 = tpu.matmul %61, %62, %cst_32 {dimension_numbers = #tpu.dot_dimension_numbers<[1], [0], [0], [1], [0, 0, 1, 1], [], []>} : vector<256x160xf32>, vector<160x160xf32>, vector<256x160xf32> -> vector<256x160xf32>
    %c0_33 = arith.constant 0 : index
    %c0_34 = arith.constant 0 : index
    %64 = vector.load %arg9[%c0_33, %c0_34] : memref<1x160xf32, #tpu.memory_space<vmem>>, vector<1x160xf32>
    %65 = vector.broadcast %64 : vector<1x160xf32> to vector<256x160xf32>
    %66 = arith.addf %63, %65 : vector<256x160xf32>
    %c0_35 = arith.constant 0 : index
    %c0_36 = arith.constant 0 : index
    %67 = vector.load %arg10[%c0_35, %c0_36] : memref<1x160xf32, #tpu.memory_space<vmem>>, vector<1x160xf32>
    %68 = vector.broadcast %51 : vector<256x1xf32> to vector<256x160xf32>
    %69 = vector.broadcast %67 : vector<1x160xf32> to vector<256x160xf32>
    %70 = arith.cmpf oge, %68, %69 : vector<256x160xf32>
    %71 = arith.extui %70 : vector<256x160xi1> to vector<256x160xi32>
    %72 = arith.sitofp %71 : vector<256x160xi32> to vector<256x160xf32>
    %73 = arith.mulf %66, %72 : vector<256x160xf32>
    %cst_37 = arith.constant dense<0.000000e+00> : vector<64x160xf32>
    %74 = tpu.matmul %18, %73, %cst_37 {dimension_numbers = #tpu.dot_dimension_numbers<[1], [0], [0], [1], [0, 0, 1, 1], [], []>} : vector<64x256xf32>, vector<256x160xf32>, vector<64x160xf32> -> vector<64x160xf32>
    %cst_38 = arith.constant dense<0.000000e+00> : vector<64x64xf32>
    %75 = tpu.matmul %18, %9, %cst_38 {dimension_numbers = #tpu.dot_dimension_numbers<[1], [0], [0], [1], [0, 0, 1, 1], [], []>} : vector<64x256xf32>, vector<256x64xf32>, vector<64x64xf32> -> vector<64x64xf32>
    %76 = tpu.iota {dimensions = array<i32: 0>} : vector<64x64xi32>
    %77 = tpu.iota {dimensions = array<i32: 1>} : vector<64x64xi32>
    %78 = arith.cmpi eq, %76, %77 : vector<64x64xi32>
    %79 = arith.extui %78 : vector<64x64xi1> to vector<64x64xi32>
    %80 = arith.sitofp %79 : vector<64x64xi32> to vector<64x64xf32>
    %81 = arith.addf %75, %80 : vector<64x64xf32>
    %cst_39 = arith.constant dense<0.000000e+00> : vector<64xf32>
    %82 = vector.multi_reduction <add>, %81, %cst_39 [1] : vector<64x64xf32> to vector<64xf32>
    %83 = vector.shape_cast %82 : vector<64xf32> to vector<64x1xf32>
    %cst_40 = arith.constant 0.000000e+00 : f32
    %84 = vector.broadcast %cst_40 : f32 to vector<64x1xf32>
    %85 = arith.cmpf ogt, %83, %84 : vector<64x1xf32>
    %86 = math.rsqrt %83 : vector<64x1xf32>
    %cst_41 = arith.constant 0.000000e+00 : f32
    %87 = vector.broadcast %cst_41 : f32 to vector<64x1xf32>
    %88 = arith.select %85, %86, %87 : vector<64x1xi1>, vector<64x1xf32>
    %c0_42 = arith.constant 0 : index
    %c0_43 = arith.constant 0 : index
    %89 = vector.load %arg11[%c0_42, %c0_43] : memref<3x16xf32, #tpu.memory_space<vmem>>, vector<3x16xf32>
    %cst_44 = arith.constant dense<0.000000e+00> : vector<64x16xf32>
    %90 = tpu.matmul %0, %89, %cst_44 {dimension_numbers = #tpu.dot_dimension_numbers<[1], [0], [0], [1], [0, 0, 1, 1], [], []>} : vector<64x3xf32>, vector<3x16xf32>, vector<64x16xf32> -> vector<64x16xf32>
    %c0_45 = arith.constant 0 : index
    %c0_46 = arith.constant 0 : index
    %91 = vector.load %arg12[%c0_45, %c0_46] : memref<160x16xf32, #tpu.memory_space<vmem>>, vector<160x16xf32>
    %cst_47 = arith.constant dense<0.000000e+00> : vector<64x16xf32>
    %92 = tpu.matmul %74, %91, %cst_47 {dimension_numbers = #tpu.dot_dimension_numbers<[1], [0], [0], [1], [0, 0, 1, 1], [], []>} : vector<64x160xf32>, vector<160x16xf32>, vector<64x16xf32> -> vector<64x16xf32>
    %93 = arith.addf %90, %92 : vector<64x16xf32>
    %94 = vector.broadcast %88 : vector<64x1xf32> to vector<64x16xf32>
    %95 = arith.mulf %94, %93 : vector<64x16xf32>
    %cst_48 = arith.constant dense<0.000000e+00> : vector<64x16xf32>
    %96 = tpu.matmul %81, %95, %cst_48 {dimension_numbers = #tpu.dot_dimension_numbers<[1], [0], [0], [1], [0, 0, 1, 1], [], []>} : vector<64x64xf32>, vector<64x16xf32>, vector<64x16xf32> -> vector<64x16xf32>
    %97 = vector.broadcast %88 : vector<64x1xf32> to vector<64x16xf32>
    %98 = arith.mulf %97, %96 : vector<64x16xf32>
    %c0_49 = arith.constant 0 : index
    %c0_50 = arith.constant 0 : index
    %99 = vector.load %arg13[%c0_49, %c0_50] : memref<1x16xf32, #tpu.memory_space<vmem>>, vector<1x16xf32>
    %100 = vector.broadcast %99 : vector<1x16xf32> to vector<64x16xf32>
    %101 = arith.addf %98, %100 : vector<64x16xf32>
    %cst_51 = arith.constant 0.000000e+00 : f32
    %102 = vector.broadcast %cst_51 : f32 to vector<64x16xf32>
    %103 = arith.maximumf %101, %102 : vector<64x16xf32>
    %c0_52 = arith.constant 0 : index
    %c0_53 = arith.constant 0 : index
    %104 = vector.load %arg14[%c0_52, %c0_53] : memref<16x16xf32, #tpu.memory_space<vmem>>, vector<16x16xf32>
    %cst_54 = arith.constant dense<0.000000e+00> : vector<64x16xf32>
    %105 = tpu.matmul %103, %104, %cst_54 {dimension_numbers = #tpu.dot_dimension_numbers<[1], [0], [0], [1], [0, 0, 1, 1], [], []>} : vector<64x16xf32>, vector<16x16xf32>, vector<64x16xf32> -> vector<64x16xf32>
    %106 = vector.broadcast %88 : vector<64x1xf32> to vector<64x16xf32>
    %107 = arith.mulf %106, %105 : vector<64x16xf32>
    %cst_55 = arith.constant dense<0.000000e+00> : vector<64x16xf32>
    %108 = tpu.matmul %81, %107, %cst_55 {dimension_numbers = #tpu.dot_dimension_numbers<[1], [0], [0], [1], [0, 0, 1, 1], [], []>} : vector<64x64xf32>, vector<64x16xf32>, vector<64x16xf32> -> vector<64x16xf32>
    %109 = vector.broadcast %88 : vector<64x1xf32> to vector<64x16xf32>
    %110 = arith.mulf %109, %108 : vector<64x16xf32>
    %c0_56 = arith.constant 0 : index
    %c0_57 = arith.constant 0 : index
    %111 = vector.load %arg15[%c0_56, %c0_57] : memref<1x16xf32, #tpu.memory_space<vmem>>, vector<1x16xf32>
    %112 = vector.broadcast %111 : vector<1x16xf32> to vector<64x16xf32>
    %113 = arith.addf %110, %112 : vector<64x16xf32>
    %cst_58 = arith.constant 0.000000e+00 : f32
    %114 = vector.broadcast %cst_58 : f32 to vector<64x16xf32>
    %115 = arith.maximumf %113, %114 : vector<64x16xf32>
    %c0_59 = arith.constant 0 : index
    %c0_60 = arith.constant 0 : index
    %116 = vector.load %arg4[%c0_59, %c0_60] : memref<1x64xi32, #tpu.memory_space<vmem>>, vector<1x64xi32>
    %117 = tpu.iota {dimensions = array<i32: 0>} : vector<2x64xi32>
    %118 = vector.broadcast %116 : vector<1x64xi32> to vector<2x64xi32>
    %119 = arith.cmpi eq, %117, %118 : vector<2x64xi32>
    %120 = arith.extui %119 : vector<2x64xi1> to vector<2x64xi32>
    %121 = arith.sitofp %120 : vector<2x64xi32> to vector<2x64xf32>
    %cst_61 = arith.constant dense<0.000000e+00> : vector<2xf32>
    %122 = vector.multi_reduction <add>, %121, %cst_61 [1] : vector<2x64xf32> to vector<2xf32>
    %123 = vector.shape_cast %122 : vector<2xf32> to vector<2x1xf32>
    %cst_62 = arith.constant dense<0.000000e+00> : vector<2x16xf32>
    %124 = tpu.matmul %121, %115, %cst_62 {dimension_numbers = #tpu.dot_dimension_numbers<[1], [0], [0], [1], [0, 0, 1, 1], [], []>} : vector<2x64xf32>, vector<64x16xf32>, vector<2x16xf32> -> vector<2x16xf32>
    %cst_63 = arith.constant 1.000000e+00 : f32
    %125 = vector.broadcast %cst_63 : f32 to vector<2x1xf32>
    %126 = arith.maximumf %123, %125 : vector<2x1xf32>
    %127 = vector.broadcast %126 : vector<2x1xf32> to vector<2x16xf32>
    %128 = arith.divf %124, %127 : vector<2x16xf32>
    %c0_64 = arith.constant 0 : index
    %c0_65 = arith.constant 0 : index
    %129 = vector.load %arg16[%c0_64, %c0_65] : memref<16x10xf32, #tpu.memory_space<vmem>>, vector<16x10xf32>
    %cst_66 = arith.constant dense<0.000000e+00> : vector<2x10xf32>
    %130 = tpu.matmul %128, %129, %cst_66 {dimension_numbers = #tpu.dot_dimension_numbers<[1], [0], [0], [1], [0, 0, 1, 1], [], []>} : vector<2x16xf32>, vector<16x10xf32>, vector<2x10xf32> -> vector<2x10xf32>
    %c0_67 = arith.constant 0 : index
    %c0_68 = arith.constant 0 : index
    %131 = vector.load %arg17[%c0_67, %c0_68] : memref<1x10xf32, #tpu.memory_space<vmem>>, vector<1x10xf32>
    %132 = vector.broadcast %131 : vector<1x10xf32> to vector<2x10xf32>
    %133 = arith.addf %130, %132 : vector<2x10xf32>
    %c0_69 = arith.constant 0 : index
    %c0_70 = arith.constant 0 : index
    %134 = vector.load %arg18[%c0_69, %c0_70] : memref<2x10xf32, #tpu.memory_space<vmem>>, vector<2x10xf32>
    tpu.vector_store %arg18[%c0_69, %c0_70], %133 {strides = array<i32>} : memref<2x10xf32, #tpu.memory_space<vmem>>, vector<2x10xf32>,
    return
  }
}

</mosaic_0001>

<llo_original>
// kernel: tpu_custom_call.1
$region0: #{tpu_custom_call.1}
  #allocation0 [shape = 'u32[]', space=smem, size = 0x4, offset = 0x4, fixed_abs, tag = 'smem constant byte address 0x4 - core index']
  #allocation1 [shape = 'u32[144,128]{1,0:T(1,128)}', space=vmem, size = 0x12000, scoped, tag = 'internal scratch']
  %s0 = inlined_call_operand.vmem [shape: f32[64,3], index: 0, kind: input, shape index: {}]
  %s1 = inlined_call_operand.vmem [shape: f32[64,2], index: 1, kind: input, shape index: {}]
  %s2 = inlined_call_operand.vmem [shape: s32[256,2], index: 2, kind: input, shape index: {}]
  %s3 = inlined_call_operand.vmem [shape: s32[1,256], index: 3, kind: input, shape index: {}]
  %s4 = inlined_call_operand.vmem [shape: s32[1,64], index: 4, kind: input, shape index: {}]
  %s5 = inlined_call_operand.vmem [shape: f32[3,160], index: 5, kind: input, shape index: {}]
  %s6 = inlined_call_operand.vmem [shape: f32[3,160], index: 6, kind: input, shape index: {}]
  %s7 = inlined_call_operand.vmem [shape: f32[1,160], index: 7, kind: input, shape index: {}]
  %s8 = inlined_call_operand.vmem [shape: f32[160,160], index: 8, kind: input, shape index: {}]
  %s9 = inlined_call_operand.vmem [shape: f32[1,160], index: 9, kind: input, shape index: {}]
  %s10 = inlined_call_operand.vmem [shape: f32[1,160], index: 10, kind: input, shape index: {}]
  %s11 = inlined_call_operand.vmem [shape: f32[3,16], index: 11, kind: input, shape index: {}]
  %s12 = inlined_call_operand.vmem [shape: f32[160,16], index: 12, kind: input, shape index: {}]
  %s13 = inlined_call_operand.vmem [shape: f32[1,16], index: 13, kind: input, shape index: {}]
  %s14 = inlined_call_operand.vmem [shape: f32[16,16], index: 14, kind: input, shape index: {}]
  %s15 = inlined_call_operand.vmem [shape: f32[1,16], index: 15, kind: input, shape index: {}]
  %s16 = inlined_call_operand.vmem [shape: f32[16,10], index: 16, kind: input, shape index: {}]
  %s17 = inlined_call_operand.vmem [shape: f32[1,10], index: 17, kind: input, shape index: {}]
  %s18 = inlined_call_operand.hbm [shape: f32[2,10], index: 18, kind: output, shape index: {}]
  %s19 = sld [smem:[#allocation0]]
  $region82: #{tpu_custom_call.1} parent=0
    _
  %s21 = ssub.s32 1, %s19
  %s22 = scalar_select 0, %s21, %s19
  $region1: #{tpu_custom_call.1} parent=0
    #allocation2 [shape = 'u8[1024]{0}', space=vmem, size = 0x400, scoped, tag = 'output window, operand 0, single buffered']
    #allocation3 [shape = 's32[1]{0}', space=sflag, size = 0x4, scoped, tag = 'scoped memory for tpu_custom_call.1']
    %23 = vsyncpa [#allocation3], 0
    // Predicated region
    $region2: #{tpu_custom_call.1} parent=1 // pred_check
      _
    $region3: #{tpu_custom_call.1} parent=1 // pred_check_branch
      %25 = sbr.rel (0) target = $region5
    $region4: #{tpu_custom_call.1} parent=1 // pred_region
      _
    $region5: #{tpu_custom_call.1} parent=1 // pred_fallthru
      _
    // Predicated region
    $region6: #{tpu_custom_call.1} parent=1 // pred_check
      _
    $region7: #{tpu_custom_call.1} parent=1 // pred_check_branch
      %27 = sbr.rel (0) target = $region9
    $region8: #{tpu_custom_call.1} parent=1 // pred_region
      _
    $region9: #{tpu_custom_call.1} parent=1 // pred_fallthru
      _
    // Predicated region
    $region10: #{tpu_custom_call.1} parent=1 // pred_check
      _
    $region11: #{tpu_custom_call.1} parent=1 // pred_check_branch
      %29 = sbr.rel (0) target = $region13
    $region12: #{tpu_custom_call.1} parent=1 // pred_region
      _
    $region13: #{tpu_custom_call.1} parent=1 // pred_fallthru
      _
    // Predicated region
    $region14: #{tpu_custom_call.1} parent=1 // pred_check
      _
    $region15: #{tpu_custom_call.1} parent=1 // pred_check_branch
      %31 = sbr.rel (0) target = $region17
    $region16: #{tpu_custom_call.1} parent=1 // pred_region
      _
    $region17: #{tpu_custom_call.1} parent=1 // pred_fallthru
      _
    // Predicated region
    $region18: #{tpu_custom_call.1} parent=1 // pred_check
      _
    $region19: #{tpu_custom_call.1} parent=1 // pred_check_branch
      %33 = sbr.rel (0) target = $region21
    $region20: #{tpu_custom_call.1} parent=1 // pred_region
      _
    $region21: #{tpu_custom_call.1} parent=1 // pred_fallthru
      _
    // Predicated region
    $region22: #{tpu_custom_call.1} parent=1 // pred_check
      _
    $region23: #{tpu_custom_call.1} parent=1 // pred_check_branch
      %35 = sbr.rel (0) target = $region25
    $region24: #{tpu_custom_call.1} parent=1 // pred_region
      _
    $region25: #{tpu_custom_call.1} parent=1 // pred_fallthru
      _
    // Predicated region
    $region26: #{tpu_custom_call.1} parent=1 // pred_check
      _
    $region27: #{tpu_custom_call.1} parent=1 // pred_check_branch
      %37 = sbr.rel (0) target = $region29
    $region28: #{tpu_custom_call.1} parent=1 // pred_region
      _
    $region29: #{tpu_custom_call.1} parent=1 // pred_fallthru
      _
    // Predicated region
    $region30: #{tpu_custom_call.1} parent=1 // pred_check
      _
    $region31: #{tpu_custom_call.1} parent=1 // pred_check_branch
      %39 = sbr.rel (0) target = $region33
    $region32: #{tpu_custom_call.1} parent=1 // pred_region
      _
    $region33: #{tpu_custom_call.1} parent=1 // pred_fallthru
      _
    // Predicated region
    $region34: #{tpu_custom_call.1} parent=1 // pred_check
      _
    $region35: #{tpu_custom_call.1} parent=1 // pred_check_branch
      %41 = sbr.rel (0) target = $region37
    $region36: #{tpu_custom_call.1} parent=1 // pred_region
      _
    $region37: #{tpu_custom_call.1} parent=1 // pred_fallthru
      _
    // Predicated region
    $region38: #{tpu_custom_call.1} parent=1 // pred_check
      _
    $region39: #{tpu_custom_call.1} parent=1 // pred_check_branch
      %43 = sbr.rel (0) target = $region41
    $region40: #{tpu_custom_call.1} parent=1 // pred_region
      _
    $region41: #{tpu_custom_call.1} parent=1 // pred_fallthru
      _
    // Predicated region
    $region42: #{tpu_custom_call.1} parent=1 // pred_check
      _
    $region43: #{tpu_custom_call.1} parent=1 // pred_check_branch
      %45 = sbr.rel (0) target = $region45
    $region44: #{tpu_custom_call.1} parent=1 // pred_region
      _
    $region45: #{tpu_custom_call.1} parent=1 // pred_fallthru
      _
    // Predicated region
    $region46: #{tpu_custom_call.1} parent=1 // pred_check
      _
    $region47: #{tpu_custom_call.1} parent=1 // pred_check_branch
      %47 = sbr.rel (0) target = $region49
    $region48: #{tpu_custom_call.1} parent=1 // pred_region
      _
    $region49: #{tpu_custom_call.1} parent=1 // pred_fallthru
      _
    // Predicated region
    $region50: #{tpu_custom_call.1} parent=1 // pred_check
      _
    $region51: #{tpu_custom_call.1} parent=1 // pred_check_branch
      %49 = sbr.rel (0) target = $region53
    $region52: #{tpu_custom_call.1} parent=1 // pred_region
      _
    $region53: #{tpu_custom_call.1} parent=1 // pred_fallthru
      _
    // Predicated region
    $region54: #{tpu_custom_call.1} parent=1 // pred_check
      _
    $region55: #{tpu_custom_call.1} parent=1 // pred_check_branch
      %51 = sbr.rel (0) target = $region57
    $region56: #{tpu_custom_call.1} parent=1 // pred_region
      _
    $region57: #{tpu_custom_call.1} parent=1 // pred_fallthru
      _
    // Predicated region
    $region58: #{tpu_custom_call.1} parent=1 // pred_check
      _
    $region59: #{tpu_custom_call.1} parent=1 // pred_check_branch
      %53 = sbr.rel (0) target = $region61
    $region60: #{tpu_custom_call.1} parent=1 // pred_region
      _
    $region61: #{tpu_custom_call.1} parent=1 // pred_fallthru
      _
    // Predicated region
    $region62: #{tpu_custom_call.1} parent=1 // pred_check
      _
    $region63: #{tpu_custom_call.1} parent=1 // pred_check_branch
      %55 = sbr.rel (0) target = $region65
    $region64: #{tpu_custom_call.1} parent=1 // pred_region
      _
    $region65: #{tpu_custom_call.1} parent=1 // pred_fallthru
      _
    // Predicated region
    $region66: #{tpu_custom_call.1} parent=1 // pred_check
      _
    $region67: #{tpu_custom_call.1} parent=1 // pred_check_branch
      %57 = sbr.rel (0) target = $region69
    $region68: #{tpu_custom_call.1} parent=1 // pred_region
      _
    $region69: #{tpu_custom_call.1} parent=1 // pred_fallthru
      _
    // Predicated region
    $region70: #{tpu_custom_call.1} parent=1 // pred_check
      _
    $region71: #{tpu_custom_call.1} parent=1 // pred_check_branch
      %59 = sbr.rel (0) target = $region73
    $region72: #{tpu_custom_call.1} parent=1 // pred_region
      _
    $region73: #{tpu_custom_call.1} parent=1 // pred_fallthru
      _
    %v60 = vld [vmem:[%s0] sm:$0xff]
    %v61 = vld [vmem:[%s0 + $0x8] sm:$0xff]
    %v62 = vld [vmem:[%s0 + $0x10] sm:$0xff]
    %v63 = vld [vmem:[%s0 + $0x18] sm:$0xff]
    %v64 = vld [vmem:[%s0 + $0x20] sm:$0xff]
    %v65 = vld [vmem:[%s0 + $0x28] sm:$0xff]
    %v66 = vld [vmem:[%s0 + $0x30] sm:$0xff]
    %v67 = vld [vmem:[%s0 + $0x38] sm:$0xff]
    %v68 = vld [vmem:[%s1] sm:$0xff]
    %v69 = vld [vmem:[%s1 + $0x8] sm:$0xff]
    %v70 = vld [vmem:[%s1 + $0x10] sm:$0xff]
    %v71 = vld [vmem:[%s1 + $0x18] sm:$0xff]
    %v72 = vld [vmem:[%s1 + $0x20] sm:$0xff]
    %v73 = vld [vmem:[%s1 + $0x28] sm:$0xff]
    %v74 = vld [vmem:[%s1 + $0x30] sm:$0xff]
    %v75 = vld [vmem:[%s1 + $0x38] sm:$0xff]
    %v76 = vld [vmem:[%s2] sm:$0xff]
    %v77 = vld [vmem:[%s2 + $0x8] sm:$0xff]
    %v78 = vld [vmem:[%s2 + $0x10] sm:$0xff]
    %v79 = vld [vmem:[%s2 + $0x18] sm:$0xff]
    %v80 = vld [vmem:[%s2 + $0x20] sm:$0xff]
    %v81 = vld [vmem:[%s2 + $0x28] sm:$0xff]
    %v82 = vld [vmem:[%s2 + $0x30] sm:$0xff]
    %v83 = vld [vmem:[%s2 + $0x38] sm:$0xff]
    %v84 = vld [vmem:[%s2 + $0x40] sm:$0xff]
    %v85 = vld [vmem:[%s2 + $0x48] sm:$0xff]
    %v86 = vld [vmem:[%s2 + $0x50] sm:$0xff]
    %v87 = vld [vmem:[%s2 + $0x58] sm:$0xff]
    %v88 = vld [vmem:[%s2 + $0x60] sm:$0xff]
    %v89 = vld [vmem:[%s2 + $0x68] sm:$0xff]
    %v90 = vld [vmem:[%s2 + $0x70] sm:$0xff]
    %v91 = vld [vmem:[%s2 + $0x78] sm:$0xff]
    %v92 = vld [vmem:[%s2 + $0x80] sm:$0xff]
    %v93 = vld [vmem:[%s2 + $0x88] sm:$0xff]
    %v94 = vld [vmem:[%s2 + $0x90] sm:$0xff]
    %v95 = vld [vmem:[%s2 + $0x98] sm:$0xff]
    %v96 = vld [vmem:[%s2 + $0xa0] sm:$0xff]
    %v97 = vld [vmem:[%s2 + $0xa8] sm:$0xff]
    %v98 = vld [vmem:[%s2 + $0xb0] sm:$0xff]
    %v99 = vld [vmem:[%s2 + $0xb8] sm:$0xff]
    %v100 = vld [vmem:[%s2 + $0xc0] sm:$0xff]
    %v101 = vld [vmem:[%s2 + $0xc8] sm:$0xff]
    %v102 = vld [vmem:[%s2 + $0xd0] sm:$0xff]
    %v103 = vld [vmem:[%s2 + $0xd8] sm:$0xff]
    %v104 = vld [vmem:[%s2 + $0xe0] sm:$0xff]
    %v105 = vld [vmem:[%s2 + $0xe8] sm:$0xff]
    %v106 = vld [vmem:[%s2 + $0xf0] sm:$0xff]
    %v107 = vld [vmem:[%s2 + $0xf8] sm:$0xff]
    %v108 = vld [vmem:[%s3] sm:$0x3]
    %v109 = vlaneseq
    %v110 = vand.u32 %v109, 127
    %111 = vset.pattern.permute.xlu0 0
    %112 = vperm.xlu0 %111, %v76
    %v113 = vpop.permute.xlu0 %112
    %114 = vset.pattern.permute.xlu0 0
    %115 = vperm.xlu0 %114, %v77
    %v116 = vpop.permute.xlu0 %115
    %117 = vset.pattern.permute.xlu0 0
    %118 = vperm.xlu0 %117, %v78
    %v119 = vpop.permute.xlu0 %118
    %120 = vset.pattern.permute.xlu0 0
    %121 = vperm.xlu0 %120, %v79
    %v122 = vpop.permute.xlu0 %121
    %123 = vset.pattern.permute.xlu0 0
    %124 = vperm.xlu0 %123, %v80
    %v125 = vpop.permute.xlu0 %124
    %126 = vset.pattern.permute.xlu0 0
    %127 = vperm.xlu0 %126, %v81
    %v128 = vpop.permute.xlu0 %127
    %129 = vset.pattern.permute.xlu0 0
    %130 = vperm.xlu0 %129, %v82
    %v131 = vpop.permute.xlu0 %130
    %132 = vset.pattern.permute.xlu0 0
    %133 = vperm.xlu0 %132, %v83
    %v134 = vpop.permute.xlu0 %133
    %135 = vset.pattern.permute.xlu0 0
    %136 = vperm.xlu0 %135, %v84
    %v137 = vpop.permute.xlu0 %136
    %138 = vset.pattern.permute.xlu0 0
    %139 = vperm.xlu0 %138, %v85
    %v140 = vpop.permute.xlu0 %139
    %141 = vset.pattern.permute.xlu0 0
    %142 = vperm.xlu0 %141, %v86
    %v143 = vpop.permute.xlu0 %142
    %144 = vset.pattern.permute.xlu0 0
    %145 = vperm.xlu0 %144, %v87
    %v146 = vpop.permute.xlu0 %145
    %147 = vset.pattern.permute.xlu0 0
    %148 = vperm.xlu0 %147, %v88
    %v149 = vpop.permute.xlu0 %148
    %150 = vset.pattern.permute.xlu0 0
    %151 = vperm.xlu0 %150, %v89
    %v152 = vpop.permute.xlu0 %151
    %153 = vset.pattern.permute.xlu0 0
    %154 = vperm.xlu0 %153, %v90
    %v155 = vpop.permute.xlu0 %154
    %156 = vset.pattern.permute.xlu0 0
    %157 = vperm.xlu0 %156, %v91
    %v158 = vpop.permute.xlu0 %157
    %159 = vset.pattern.permute.xlu0 0
    %160 = vperm.xlu0 %159, %v92
    %v161 = vpop.permute.xlu0 %160
    %162 = vset.pattern.permute.xlu0 0
    %163 = vperm.xlu0 %162, %v93
    %v164 = vpop.permute.xlu0 %163
    %165 = vset.pattern.permute.xlu0 0
    %166 = vperm.xlu0 %165, %v94
    %v167 = vpop.permute.xlu0 %166
    %168 = vset.pattern.permute.xlu0 0
    %169 = vperm.xlu0 %168, %v95
    %v170 = vpop.permute.xlu0 %169
    %171 = vset.pattern.permute.xlu0 0
    %172 = vperm.xlu0 %171, %v96
    %v173 = vpop.permute.xlu0 %172
    %174 = vset.pattern.permute.xlu0 0
    %175 = vperm.xlu0 %174, %v97
    %v176 = vpop.permute.xlu0 %175
    %177 = vset.pattern.permute.xlu0 0
    %178 = vperm.xlu0 %177, %v98
    %v179 = vpop.permute.xlu0 %178
    %180 = vset.pattern.permute.xlu0 0
    %181 = vperm.xlu0 %180, %v99
    %v182 = vpop.permute.xlu0 %181
    %183 = vset.pattern.permute.xlu0 0
    %184 = vperm.xlu0 %183, %v100
    %v185 = vpop.permute.xlu0 %184
    %186 = vset.pattern.permute.xlu0 0
    %187 = vperm.xlu0 %186, %v101
    %v188 = vpop.permute.xlu0 %187
    %189 = vset.pattern.permute.xlu0 0
    %190 = vperm.xlu0 %189, %v102
    %v191 = vpop.permute.xlu0 %190
    %192 = vset.pattern.permute.xlu0 0
    %193 = vperm.xlu0 %192, %v103
    %v194 = vpop.permute.xlu0 %193
    %195 = vset.pattern.permute.xlu0 0
    %196 = vperm.xlu0 %195, %v104
    %v197 = vpop.permute.xlu0 %196
    %198 = vset.pattern.permute.xlu0 0
    %199 = vperm.xlu0 %198, %v105
    %v200 = vpop.permute.xlu0 %199
    %201 = vset.pattern.permute.xlu0 0
    %202 = vperm.xlu0 %201, %v106
    %v203 = vpop.permute.xlu0 %202
    %204 = vset.pattern.permute.xlu0 0
    %205 = vperm.xlu0 %204, %v107
    %v206 = vpop.permute.xlu0 %205
    %vm207 = vcmp.eq.s32.totalorder %v110, %v113
    %vm208 = vcmp.eq.s32.totalorder %v110, %v116
    %vm209 = vcmp.eq.s32.totalorder %v110, %v119
    %vm210 = vcmp.eq.s32.totalorder %v110, %v122
    %vm211 = vcmp.eq.s32.totalorder %v110, %v125
    %vm212 = vcmp.eq.s32.totalorder %v110, %v128
    %vm213 = vcmp.eq.s32.totalorder %v110, %v131
    %vm214 = vcmp.eq.s32.totalorder %v110, %v134
    %vm215 = vcmp.eq.s32.totalorder %v110, %v137
    %vm216 = vcmp.eq.s32.totalorder %v110, %v140
    %vm217 = vcmp.eq.s32.totalorder %v110, %v143
    %vm218 = vcmp.eq.s32.totalorder %v110, %v146
    %vm219 = vcmp.eq.s32.totalorder %v110, %v149
    %vm220 = vcmp.eq.s32.totalorder %v110, %v152
    %vm221 = vcmp.eq.s32.totalorder %v110, %v155
    %vm222 = vcmp.eq.s32.totalorder %v110, %v158
    %vm223 = vcmp.eq.s32.totalorder %v110, %v161
    %vm224 = vcmp.eq.s32.totalorder %v110, %v164
    %vm225 = vcmp.eq.s32.totalorder %v110, %v167
    %vm226 = vcmp.eq.s32.totalorder %v110, %v170
    %vm227 = vcmp.eq.s32.totalorder %v110, %v173
    %vm228 = vcmp.eq.s32.totalorder %v110, %v176
    %vm229 = vcmp.eq.s32.totalorder %v110, %v179
    %vm230 = vcmp.eq.s32.totalorder %v110, %v182
    %vm231 = vcmp.eq.s32.totalorder %v110, %v185
    %vm232 = vcmp.eq.s32.totalorder %v110, %v188
    %vm233 = vcmp.eq.s32.totalorder %v110, %v191
    %vm234 = vcmp.eq.s32.totalorder %v110, %v194
    %vm235 = vcmp.eq.s32.totalorder %v110, %v197
    %vm236 = vcmp.eq.s32.totalorder %v110, %v200
    %vm237 = vcmp.eq.s32.totalorder %v110, %v203
    %vm238 = vcmp.eq.s32.totalorder %v110, %v206
    %v239 = vsel %vm207, 1, 0
    %v240 = vsel %vm208, 1, 0
    %v241 = vsel %vm209, 1, 0
    %v242 = vsel %vm210, 1, 0
    %v243 = vsel %vm211, 1, 0
    %v244 = vsel %vm212, 1, 0
    %v245 = vsel %vm213, 1, 0
    %v246 = vsel %vm214, 1, 0
    %v247 = vsel %vm215, 1, 0
    %v248 = vsel %vm216, 1, 0
    %v249 = vsel %vm217, 1, 0
    %v250 = vsel %vm218, 1, 0
    %v251 = vsel %vm219, 1, 0
    %v252 = vsel %vm220, 1, 0
    %v253 = vsel %vm221, 1, 0
    %v254 = vsel %vm222, 1, 0
    %v255 = vsel %vm223, 1, 0
    %v256 = vsel %vm224, 1, 0
    %v257 = vsel %vm225, 1, 0
    %v258 = vsel %vm226, 1, 0
    %v259 = vsel %vm227, 1, 0
    %v260 = vsel %vm228, 1, 0
    %v261 = vsel %vm229, 1, 0
    %v262 = vsel %vm230, 1, 0
    %v263 = vsel %vm231, 1, 0
    %v264 = vsel %vm232, 1, 0
    %v265 = vsel %vm233, 1, 0
    %v266 = vsel %vm234, 1, 0
    %v267 = vsel %vm235, 1, 0
    %v268 = vsel %vm236, 1, 0
    %v269 = vsel %vm237, 1, 0
    %v270 = vsel %vm238, 1, 0
    %v271 = vcvt.s32.f32 %v239
    %v272 = vcvt.s32.f32 %v240
    %v273 = vcvt.s32.f32 %v241
    %v274 = vcvt.s32.f32 %v242
    %v275 = vcvt.s32.f32 %v243
    %v276 = vcvt.s32.f32 %v244
    %v277 = vcvt.s32.f32 %v245
    %v278 = vcvt.s32.f32 %v246
    %v279 = vcvt.s32.f32 %v247
    %v280 = vcvt.s32.f32 %v248
    %v281 = vcvt.s32.f32 %v249
    %v282 = vcvt.s32.f32 %v250
    %v283 = vcvt.s32.f32 %v251
    %v284 = vcvt.s32.f32 %v252
    %v285 = vcvt.s32.f32 %v253
    %v286 = vcvt.s32.f32 %v254
    %v287 = vcvt.s32.f32 %v255
    %v288 = vcvt.s32.f32 %v256
    %v289 = vcvt.s32.f32 %v257
    %v290 = vcvt.s32.f32 %v258
    %v291 = vcvt.s32.f32 %v259
    %v292 = vcvt.s32.f32 %v260
    %v293 = vcvt.s32.f32 %v261
    %v294 = vcvt.s32.f32 %v262
    %v295 = vcvt.s32.f32 %v263
    %v296 = vcvt.s32.f32 %v264
    %v297 = vcvt.s32.f32 %v265
    %v298 = vcvt.s32.f32 %v266
    %v299 = vcvt.s32.f32 %v267
    %v300 = vcvt.s32.f32 %v268
    %v301 = vcvt.s32.f32 %v269
    %v302 = vcvt.s32.f32 %v270
    %303 = vset.pattern.permute.xlu0 1
    %304 = vperm.xlu0 %303, %v76
    %v305 = vpop.permute.xlu0 %304
    %306 = vset.pattern.permute.xlu0 1
    %307 = vperm.xlu0 %306, %v77
    %v308 = vpop.permute.xlu0 %307
    %309 = vset.pattern.permute.xlu0 1
    %310 = vperm.xlu0 %309, %v78
    %v311 = vpop.permute.xlu0 %310
    %312 = vset.pattern.permute.xlu0 1
    %313 = vperm.xlu0 %312, %v79
    %v314 = vpop.permute.xlu0 %313
    %315 = vset.pattern.permute.xlu0 1
    %316 = vperm.xlu0 %315, %v80
    %v317 = vpop.permute.xlu0 %316
    %318 = vset.pattern.permute.xlu0 1
    %319 = vperm.xlu0 %318, %v81
    %v320 = vpop.permute.xlu0 %319
    %321 = vset.pattern.permute.xlu0 1
    %322 = vperm.xlu0 %321, %v82
    %v323 = vpop.permute.xlu0 %322
    %324 = vset.pattern.permute.xlu0 1
    %325 = vperm.xlu0 %324, %v83
    %v326 = vpop.permute.xlu0 %325
    %327 = vset.pattern.permute.xlu0 1
    %328 = vperm.xlu0 %327, %v84
    %v329 = vpop.permute.xlu0 %328
    %330 = vset.pattern.permute.xlu0 1
    %331 = vperm.xlu0 %330, %v85
    %v332 = vpop.permute.xlu0 %331
    %333 = vset.pattern.permute.xlu0 1
    %334 = vperm.xlu0 %333, %v86
    %v335 = vpop.permute.xlu0 %334
    %336 = vset.pattern.permute.xlu0 1
    %337 = vperm.xlu0 %336, %v87
    %v338 = vpop.permute.xlu0 %337
    %339 = vset.pattern.permute.xlu0 1
    %340 = vperm.xlu0 %339, %v88
    %v341 = vpop.permute.xlu0 %340
    %342 = vset.pattern.permute.xlu0 1
    %343 = vperm.xlu0 %342, %v89
    %v344 = vpop.permute.xlu0 %343
    %345 = vset.pattern.permute.xlu0 1
    %346 = vperm.xlu0 %345, %v90
    %v347 = vpop.permute.xlu0 %346
    %348 = vset.pattern.permute.xlu0 1
    %349 = vperm.xlu0 %348, %v91
    %v350 = vpop.permute.xlu0 %349
    %351 = vset.pattern.permute.xlu0 1
    %352 = vperm.xlu0 %351, %v92
    %v353 = vpop.permute.xlu0 %352
    %354 = vset.pattern.permute.xlu0 1
    %355 = vperm.xlu0 %354, %v93
    %v356 = vpop.permute.xlu0 %355
    %357 = vset.pattern.permute.xlu0 1
    %358 = vperm.xlu0 %357, %v94
    %v359 = vpop.permute.xlu0 %358
    %360 = vset.pattern.permute.xlu0 1
    %361 = vperm.xlu0 %360, %v95
    %v362 = vpop.permute.xlu0 %361
    %363 = vset.pattern.permute.xlu0 1
    %364 = vperm.xlu0 %363, %v96
    %v365 = vpop.permute.xlu0 %364
    %366 = vset.pattern.permute.xlu0 1
    %367 = vperm.xlu0 %366, %v97
    %v368 = vpop.permute.xlu0 %367
    %369 = vset.pattern.permute.xlu0 1
    %370 = vperm.xlu0 %369, %v98
    %v371 = vpop.permute.xlu0 %370
    %372 = vset.pattern.permute.xlu0 1
    %373 = vperm.xlu0 %372, %v99
    %v374 = vpop.permute.xlu0 %373
    %375 = vset.pattern.permute.xlu0 1
    %376 = vperm.xlu0 %375, %v100
    %v377 = vpop.permute.xlu0 %376
    %378 = vset.pattern.permute.xlu0 1
    %379 = vperm.xlu0 %378, %v101
    %v380 = vpop.permute.xlu0 %379
    %381 = vset.pattern.permute.xlu0 1
    %382 = vperm.xlu0 %381, %v102
    %v383 = vpop.permute.xlu0 %382
    %384 = vset.pattern.permute.xlu0 1
    %385 = vperm.xlu0 %384, %v103
    %v386 = vpop.permute.xlu0 %385
    %387 = vset.pattern.permute.xlu0 1
    %388 = vperm.xlu0 %387, %v104
    %v389 = vpop.permute.xlu0 %388
    %390 = vset.pattern.permute.xlu0 1
    %391 = vperm.xlu0 %390, %v105
    %v392 = vpop.permute.xlu0 %391
    %393 = vset.pattern.permute.xlu0 1
    %394 = vperm.xlu0 %393, %v106
    %v395 = vpop.permute.xlu0 %394
    %396 = vset.pattern.permute.xlu0 1
    %397 = vperm.xlu0 %396, %v107
    %v398 = vpop.permute.xlu0 %397
    %vm399 = vcmp.eq.s32.totalorder %v110, %v305
    %vm400 = vcmp.eq.s32.totalorder %v110, %v308
    %vm401 = vcmp.eq.s32.totalorder %v110, %v311
    %vm402 = vcmp.eq.s32.totalorder %v110, %v314
    %vm403 = vcmp.eq.s32.totalorder %v110, %v317
    %vm404 = vcmp.eq.s32.totalorder %v110, %v320
    %vm405 = vcmp.eq.s32.totalorder %v110, %v323
    %vm406 = vcmp.eq.s32.totalorder %v110, %v326
    %vm407 = vcmp.eq.s32.totalorder %v110, %v329
    %vm408 = vcmp.eq.s32.totalorder %v110, %v332
    %vm409 = vcmp.eq.s32.totalorder %v110, %v335
    %vm410 = vcmp.eq.s32.totalorder %v110, %v338
    %vm411 = vcmp.eq.s32.totalorder %v110, %v341
    %vm412 = vcmp.eq.s32.totalorder %v110, %v344
    %vm413 = vcmp.eq.s32.totalorder %v110, %v347
    %vm414 = vcmp.eq.s32.totalorder %v110, %v350
    %vm415 = vcmp.eq.s32.totalorder %v110, %v353
    %vm416 = vcmp.eq.s32.totalorder %v110, %v356
    %vm417 = vcmp.eq.s32.totalorder %v110, %v359
    %vm418 = vcmp.eq.s32.totalorder %v110, %v362
    %vm419 = vcmp.eq.s32.totalorder %v110, %v365
    %vm420 = vcmp.eq.s32.totalorder %v110, %v368
    %vm421 = vcmp.eq.s32.totalorder %v110, %v371
    %vm422 = vcmp.eq.s32.totalorder %v110, %v374
    %vm423 = vcmp.eq.s32.totalorder %v110, %v377
    %vm424 = vcmp.eq.s32.totalorder %v110, %v380
    %vm425 = vcmp.eq.s32.totalorder %v110, %v383
    %vm426 = vcmp.eq.s32.totalorder %v110, %v386
    %vm427 = vcmp.eq.s32.totalorder %v110, %v389
    %vm428 = vcmp.eq.s32.totalorder %v110, %v392
    %vm429 = vcmp.eq.s32.totalorder %v110, %v395
    %vm430 = vcmp.eq.s32.totalorder %v110, %v398
    %v431 = vsel %vm399, 1, 0
    %v432 = vsel %vm400, 1, 0
    %v433 = vsel %vm401, 1, 0
    %v434 = vsel %vm402, 1, 0
    %v435 = vsel %vm403, 1, 0
    %v436 = vsel %vm404, 1, 0
    %v437 = vsel %vm405, 1, 0
    %v438 = vsel %vm406, 1, 0
    %v439 = vsel %vm407, 1, 0
    %v440 = vsel %vm408, 1, 0
    %v441 = vsel %vm409, 1, 0
    %v442 = vsel %vm410, 1, 0
    %v443 = vsel %vm411, 1, 0
    %v444 = vsel %vm412, 1, 0
    %v445 = vsel %vm413, 1, 0
    %v446 = vsel %vm414, 1, 0
    %v447 = vsel %vm415, 1, 0
    %v448 = vsel %vm416, 1, 0
    %v449 = vsel %vm417, 1, 0
    %v450 = vsel %vm418, 1, 0
    %v451 = vsel %vm419, 1, 0
    %v452 = vsel %vm420, 1, 0
    %v453 = vsel %vm421, 1, 0
    %v454 = vsel %vm422, 1, 0
    %v455 = vsel %vm423, 1, 0
    %v456 = vsel %vm424, 1, 0
    %v457 = vsel %vm425, 1, 0
    %v458 = vsel %vm426, 1, 0
    %v459 = vsel %vm427, 1, 0
    %v460 = vsel %vm428, 1, 0
    %v461 = vsel %vm429, 1, 0
    %v462 = vsel %vm430, 1, 0
    %v463 = vcvt.s32.f32 %v431
    %v464 = vcvt.s32.f32 %v432
    %v465 = vcvt.s32.f32 %v433
    %v466 = vcvt.s32.f32 %v434
    %v467 = vcvt.s32.f32 %v435
    %v468 = vcvt.s32.f32 %v436
    %v469 = vcvt.s32.f32 %v437
    %v470 = vcvt.s32.f32 %v438
    %v471 = vcvt.s32.f32 %v439
    %v472 = vcvt.s32.f32 %v440
    %v473 = vcvt.s32.f32 %v441
    %v474 = vcvt.s32.f32 %v442
    %v475 = vcvt.s32.f32 %v443
    %v476 = vcvt.s32.f32 %v444
    %v477 = vcvt.s32.f32 %v445
    %v478 = vcvt.s32.f32 %v446
    %v479 = vcvt.s32.f32 %v447
    %v480 = vcvt.s32.f32 %v448
    %v481 = vcvt.s32.f32 %v449
    %v482 = vcvt.s32.f32 %v450
    %v483 = vcvt.s32.f32 %v451
    %v484 = vcvt.s32.f32 %v452
    %v485 = vcvt.s32.f32 %v453
    %v486 = vcvt.s32.f32 %v454
    %v487 = vcvt.s32.f32 %v455
    %v488 = vcvt.s32.f32 %v456
    %v489 = vcvt.s32.f32 %v457
    %v490 = vcvt.s32.f32 %v458
    %v491 = vcvt.s32.f32 %v459
    %v492 = vcvt.s32.f32 %v460
    %v493 = vcvt.s32.f32 %v461
    %v494 = vcvt.s32.f32 %v462
    %v495 = vlaneseq
    %v496 = vshrl.u32 %v495, 7
    %v497 = vadd.s32 %v496, 8
    %v498 = vadd.s32 %v496, 16
    %v499 = vadd.s32 %v496, 24
    %v500 = vadd.s32 %v496, 32
    %v501 = vadd.s32 %v496, 40
    %v502 = vadd.s32 %v496, 48
    %v503 = vadd.s32 %v496, 56
    %v504 = vlaneseq
    %v505 = vshrl.u32 %v504, 7
    %v506 = vsub.s32 0, %v505
    %v507 = vrot.slane %v108, %v506
    %v508 = vlaneseq
    %v509 = vshrl.u32 %v508, 7
    %v510 = vsub.s32 1, %v509
    %v511 = vrot.slane %v108, %v510
    %vm512 = vcmp.eq.s32.totalorder %v496, %v507
    %vm513 = vcmp.eq.s32.totalorder %v496, %v511
    %vm514 = vcmp.eq.s32.totalorder %v497, %v507
    %vm515 = vcmp.eq.s32.totalorder %v497, %v511
    %vm516 = vcmp.eq.s32.totalorder %v498, %v507
    %vm517 = vcmp.eq.s32.totalorder %v498, %v511
    %vm518 = vcmp.eq.s32.totalorder %v499, %v507
    %vm519 = vcmp.eq.s32.totalorder %v499, %v511
    %vm520 = vcmp.eq.s32.totalorder %v500, %v507
    %vm521 = vcmp.eq.s32.totalorder %v500, %v511
    %vm522 = vcmp.eq.s32.totalorder %v501, %v507
    %vm523 = vcmp.eq.s32.totalorder %v501, %v511
    %vm524 = vcmp.eq.s32.totalorder %v502, %v507
    %vm525 = vcmp.eq.s32.totalorder %v502, %v511
    %vm526 = vcmp.eq.s32.totalorder %v503, %v507
    %vm527 = vcmp.eq.s32.totalorder %v503, %v511
    %v528 = vsel %vm512, 1, 0
    %v529 = vsel %vm513, 1, 0
    %v530 = vsel %vm514, 1, 0
    %v531 = vsel %vm515, 1, 0
    %v532 = vsel %vm516, 1, 0
    %v533 = vsel %vm517, 1, 0
    %v534 = vsel %vm518, 1, 0
    %v535 = vsel %vm519, 1, 0
    %v536 = vsel %vm520, 1, 0
    %v537 = vsel %vm521, 1, 0
    %v538 = vsel %vm522, 1, 0
    %v539 = vsel %vm523, 1, 0
    %v540 = vsel %vm524, 1, 0
    %v541 = vsel %vm525, 1, 0
    %v542 = vsel %vm526, 1, 0
    %v543 = vsel %vm527, 1, 0
    %v544 = vcvt.s32.f32 %v528
    %v545 = vcvt.s32.f32 %v529
    %v546 = vcvt.s32.f32 %v530
    %v547 = vcvt.s32.f32 %v531
    %v548 = vcvt.s32.f32 %v532
    %v549 = vcvt.s32.f32 %v533
    %v550 = vcvt.s32.f32 %v534
    %v551 = vcvt.s32.f32 %v535
    %v552 = vcvt.s32.f32 %v536
    %v553 = vcvt.s32.f32 %v537
    %v554 = vcvt.s32.f32 %v538
    %v555 = vcvt.s32.f32 %v539
    %v556 = vcvt.s32.f32 %v540
    %v557 = vcvt.s32.f32 %v541
    %v558 = vcvt.s32.f32 %v542
    %v559 = vcvt.s32.f32 %v543
    %vm560 = vcmask 523264
    %v562 = vsel %vm560, %v271, 0
    %v565 = vsel %vm560, %v272, 0
    %v568 = vsel %vm560, %v273, 0
    %v571 = vsel %vm560, %v274, 0
    %v574 = vsel %vm560, %v275, 0
    %v577 = vsel %vm560, %v276, 0
    %v580 = vsel %vm560, %v277, 0
    %v583 = vsel %vm560, %v278, 0
    %v586 = vsel %vm560, %v279, 0
    %v589 = vsel %vm560, %v280, 0
    %v592 = vsel %vm560, %v281, 0
    %v595 = vsel %vm560, %v282, 0
    %v598 = vsel %vm560, %v283, 0
    %v601 = vsel %vm560, %v284, 0
    %v604 = vsel %vm560, %v285, 0
    %v607 = vsel %vm560, %v286, 0
    %v610 = vsel %vm560, %v287, 0
    %v613 = vsel %vm560, %v288, 0
    %v616 = vsel %vm560, %v289, 0
    %v619 = vsel %vm560, %v290, 0
    %v622 = vsel %vm560, %v291, 0
    %v625 = vsel %vm560, %v292, 0
    %v628 = vsel %vm560, %v293, 0
    %v631 = vsel %vm560, %v294, 0
    %v634 = vsel %vm560, %v295, 0
    %v637 = vsel %vm560, %v296, 0
    %v640 = vsel %vm560, %v297, 0
    %v643 = vsel %vm560, %v298, 0
    %v646 = vsel %vm560, %v299, 0
    %v649 = vsel %vm560, %v300, 0
    %v652 = vsel %vm560, %v301, 0
    %v655 = vsel %vm560, %v302, 0
    %657 = vmatprep.subr.mxu0 0.0
    %658 = vmatpush1.msra.mxu0 0.0
    %659 = vmatprep.subr.mxu0 0.0
    %660 = vmatpush1.msra.mxu0 0.0
    %661 = vmatprep.subr.mxu0 0.0
    %662 = vmatpush1.msra.mxu0 0.0
    %663 = vmatprep.subr.mxu0 0.0
    %664 = vmatpush1.msra.mxu0 0.0
    %665 = vmatprep.subr.mxu0 0.0
    %666 = vmatpush1.msra.mxu0 0.0
    %667 = vmatprep.subr.mxu0 0.0
    %668 = vmatpush1.msra.mxu0 0.0
    %669 = vmatprep.subr.mxu0 0.0
    %670 = vmatpush1.msra.mxu0 0.0
    %671 = vmatprep.subr.mxu0 0.0
    %672 = vmatpush1.msra.mxu0 0.0
    %673 = vmatprep.subr.mxu0 0.0
    %674 = vmatpush1.msra.mxu0 %v67
    %675 = vmatprep.subr.mxu0 0.0
    %676 = vmatpush1.msra.mxu0 %v66
    %677 = vmatprep.subr.mxu0 0.0
    %678 = vmatpush1.msra.mxu0 %v65
    %679 = vmatprep.subr.mxu0 0.0
    %680 = vmatpush1.msra.mxu0 %v64
    %681 = vmatprep.subr.mxu0 0.0
    %682 = vmatpush1.msra.mxu0 %v63
    %683 = vmatprep.subr.mxu0 0.0
    %684 = vmatpush1.msra.mxu0 %v62
    %685 = vmatprep.subr.mxu0 0.0
    %686 = vmatpush1.msra.mxu0 %v61
    %687 = vmatprep.subr.mxu0 0.0
    %688 = vmatpush1.msra.mxu0 %v60
    %689 = vmatprep.subr.mxu0 0.0
    %690 = vmatpush2.msra.mxu0 0.0
    %691 = vmatprep.subr.mxu0 0.0
    %692 = vmatpush2.msra.mxu0 0.0
    %693 = vmatprep.subr.mxu0 0.0
    %694 = vmatpush2.msra.mxu0 0.0
    %695 = vmatprep.subr.mxu0 0.0
    %696 = vmatpush2.msra.mxu0 0.0
    %697 = vmatprep.subr.mxu0 0.0
    %698 = vmatpush2.msra.mxu0 0.0
    %699 = vmatprep.subr.mxu0 0.0
    %700 = vmatpush2.msra.mxu0 0.0
    %701 = vmatprep.subr.mxu0 0.0
    %702 = vmatpush2.msra.mxu0 0.0
    %703 = vmatprep.subr.mxu0 0.0
    %704 = vmatpush2.msra.mxu0 0.0
    %705 = vmatprep.subr.mxu0 0.0
    %706 = vmatpush2.msra.mxu0 0.0
    %707 = vmatprep.subr.mxu0 0.0
    %708 = vmatpush2.msra.mxu0 0.0
    %709 = vmatprep.subr.mxu0 0.0
    %710 = vmatpush2.msra.mxu0 0.0
    %711 = vmatprep.subr.mxu0 0.0
    %712 = vmatpush2.msra.mxu0 0.0
    %713 = vmatprep.subr.mxu0 0.0
    %714 = vmatpush2.msra.mxu0 0.0
    %715 = vmatprep.subr.mxu0 0.0
    %716 = vmatpush2.msra.mxu0 0.0
    %717 = vmatprep.subr.mxu0 0.0
    %718 = vmatpush2.msra.mxu0 0.0
    %719 = vmatprep.subr.mxu0 0.0
    %720 = vmatpush2.msra.mxu0 0.0
    %721 = vmatprep.mubr.f32.mxu0 0.0
    %722 = vmatmul.mubr.f32.gmra.mxu0 %v562
    %v723 = vpop.f32.mrf.mxu0
    %v724 = vadd.f32 0.0, %v723
    %v725 = vpop.f32.mrf.mxu0
    %726 = vmatprep.mubr.f32.mxu0 0.0
    %727 = vmatmul.mubr.f32.gmra.mxu0 %v565
    %v728 = vpop.f32.mrf.mxu0
    %v729 = vadd.f32 0.0, %v728
    %v730 = vpop.f32.mrf.mxu0
    %731 = vmatprep.mubr.f32.mxu0 0.0
    %732 = vmatmul.mubr.f32.gmra.mxu0 %v568
    %v733 = vpop.f32.mrf.mxu0
    %v734 = vadd.f32 0.0, %v733
    %v735 = vpop.f32.mrf.mxu0
    %736 = vmatprep.mubr.f32.mxu0 0.0
    %737 = vmatmul.mubr.f32.gmra.mxu0 %v571
    %v738 = vpop.f32.mrf.mxu0
    %v739 = vadd.f32 0.0, %v738
    %v740 = vpop.f32.mrf.mxu0
    %741 = vmatprep.mubr.f32.mxu0 0.0
    %742 = vmatmul.mubr.f32.gmra.mxu0 %v574
    %v743 = vpop.f32.mrf.mxu0
    %v744 = vadd.f32 0.0, %v743
    %v745 = vpop.f32.mrf.mxu0
    %746 = vmatprep.mubr.f32.mxu0 0.0
    %747 = vmatmul.mubr.f32.gmra.mxu0 %v577
    %v748 = vpop.f32.mrf.mxu0
    %v749 = vadd.f32 0.0, %v748
    %v750 = vpop.f32.mrf.mxu0
    %751 = vmatprep.mubr.f32.mxu0 0.0
    %752 = vmatmul.mubr.f32.gmra.mxu0 %v580
    %v753 = vpop.f32.mrf.mxu0
    %v754 = vadd.f32 0.0, %v753
    %v755 = vpop.f32.mrf.mxu0
    %756 = vmatprep.mubr.f32.mxu0 0.0
    %757 = vmatmul.mubr.f32.gmra.mxu0 %v583
    %v758 = vpop.f32.mrf.mxu0
    %v759 = vadd.f32 0.0, %v758
    %v760 = vpop.f32.mrf.mxu0
    %761 = vmatprep.mubr.f32.mxu0 0.0
    %762 = vmatmul.mubr.f32.gmra.mxu0 %v586
    %v763 = vpop.f32.mrf.mxu0
    %v764 = vadd.f32 0.0, %v763
    %v765 = vpop.f32.mrf.mxu0
    %766 = vmatprep.mubr.f32.mxu0 0.0
    %767 = vmatmul.mubr.f32.gmra.mxu0 %v589
    %v768 = vpop.f32.mrf.mxu0
    %v769 = vadd.f32 0.0, %v768
    %v770 = vpop.f32.mrf.mxu0
    %771 = vmatprep.mubr.f32.mxu0 0.0
    %772 = vmatmul.mubr.f32.gmra.mxu0 %v592
    %v773 = vpop.f32.mrf.mxu0
    %v774 = vadd.f32 0.0, %v773
    %v775 = vpop.f32.mrf.mxu0
    %776 = vmatprep.mubr.f32.mxu0 0.0
    %777 = vmatmul.mubr.f32.gmra.mxu0 %v595
    %v778 = vpop.f32.mrf.mxu0
    %v779 = vadd.f32 0.0, %v778
    %v780 = vpop.f32.mrf.mxu0
    %781 = vmatprep.mubr.f32.mxu0 0.0
    %782 = vmatmul.mubr.f32.gmra.mxu0 %v598
    %v783 = vpop.f32.mrf.mxu0
    %v784 = vadd.f32 0.0, %v783
    %v785 = vpop.f32.mrf.mxu0
    %786 = vmatprep.mubr.f32.mxu0 0.0
    %787 = vmatmul.mubr.f32.gmra.mxu0 %v601
    %v788 = vpop.f32.mrf.mxu0
    %v789 = vadd.f32 0.0, %v788
    %v790 = vpop.f32.mrf.mxu0
    %791 = vmatprep.mubr.f32.mxu0 0.0
    %792 = vmatmul.mubr.f32.gmra.mxu0 %v604
    %v793 = vpop.f32.mrf.mxu0
    %v794 = vadd.f32 0.0, %v793
    %v795 = vpop.f32.mrf.mxu0
    %796 = vmatprep.mubr.f32.mxu0 0.0
    %797 = vmatmul.mubr.f32.gmra.mxu0 %v607
    %v798 = vpop.f32.mrf.mxu0
    %v799 = vadd.f32 0.0, %v798
    %v800 = vpop.f32.mrf.mxu0
    %801 = vmatprep.mubr.f32.mxu0 0.0
    %802 = vmatmul.mubr.f32.gmra.mxu0 %v610
    %v803 = vpop.f32.mrf.mxu0
    %v804 = vadd.f32 0.0, %v803
    %v805 = vpop.f32.mrf.mxu0
    %806 = vmatprep.mubr.f32.mxu0 0.0
    %807 = vmatmul.mubr.f32.gmra.mxu0 %v613
    %v808 = vpop.f32.mrf.mxu0
    %v809 = vadd.f32 0.0, %v808
    %v810 = vpop.f32.mrf.mxu0
    %811 = vmatprep.mubr.f32.mxu0 0.0
    %812 = vmatmul.mubr.f32.gmra.mxu0 %v616
    %v813 = vpop.f32.mrf.mxu0
    %v814 = vadd.f32 0.0, %v813
    %v815 = vpop.f32.mrf.mxu0
    %816 = vmatprep.mubr.f32.mxu0 0.0
    %817 = vmatmul.mubr.f32.gmra.mxu0 %v619
    %v818 = vpop.f32.mrf.mxu0
    %v819 = vadd.f32 0.0, %v818
    %v820 = vpop.f32.mrf.mxu0
    %821 = vmatprep.mubr.f32.mxu0 0.0
    %822 = vmatmul.mubr.f32.gmra.mxu0 %v622
    %v823 = vpop.f32.mrf.mxu0
    %v824 = vadd.f32 0.0, %v823
    %v825 = vpop.f32.mrf.mxu0
    %826 = vmatprep.mubr.f32.mxu0 0.0
    %827 = vmatmul.mubr.f32.gmra.mxu0 %v625
    %v828 = vpop.f32.mrf.mxu0
    %v829 = vadd.f32 0.0, %v828
    %v830 = vpop.f32.mrf.mxu0
    %831 = vmatprep.mubr.f32.mxu0 0.0
    %832 = vmatmul.mubr.f32.gmra.mxu0 %v628
    %v833 = vpop.f32.mrf.mxu0
    %v834 = vadd.f32 0.0, %v833
    %v835 = vpop.f32.mrf.mxu0
    %836 = vmatprep.mubr.f32.mxu0 0.0
    %837 = vmatmul.mubr.f32.gmra.mxu0 %v631
    %v838 = vpop.f32.mrf.mxu0
    %v839 = vadd.f32 0.0, %v838
    %v840 = vpop.f32.mrf.mxu0
    %841 = vmatprep.mubr.f32.mxu0 0.0
    %842 = vmatmul.mubr.f32.gmra.mxu0 %v634
    %v843 = vpop.f32.mrf.mxu0
    %v844 = vadd.f32 0.0, %v843
    %v845 = vpop.f32.mrf.mxu0
    %846 = vmatprep.mubr.f32.mxu0 0.0
    %847 = vmatmul.mubr.f32.gmra.mxu0 %v637
    %v848 = vpop.f32.mrf.mxu0
    %v849 = vadd.f32 0.0, %v848
    %v850 = vpop.f32.mrf.mxu0
    %851 = vmatprep.mubr.f32.mxu0 0.0
    %852 = vmatmul.mubr.f32.gmra.mxu0 %v640
    %v853 = vpop.f32.mrf.mxu0
    %v854 = vadd.f32 0.0, %v853
    %v855 = vpop.f32.mrf.mxu0
    %856 = vmatprep.mubr.f32.mxu0 0.0
    %857 = vmatmul.mubr.f32.gmra.mxu0 %v643
    %v858 = vpop.f32.mrf.mxu0
    %v859 = vadd.f32 0.0, %v858
    %v860 = vpop.f32.mrf.mxu0
    %861 = vmatprep.mubr.f32.mxu0 0.0
    %862 = vmatmul.mubr.f32.gmra.mxu0 %v646
    %v863 = vpop.f32.mrf.mxu0
    %v864 = vadd.f32 0.0, %v863
    %v865 = vpop.f32.mrf.mxu0
    %866 = vmatprep.mubr.f32.mxu0 0.0
    %867 = vmatmul.mubr.f32.gmra.mxu0 %v649
    %v868 = vpop.f32.mrf.mxu0
    %v869 = vadd.f32 0.0, %v868
    %v870 = vpop.f32.mrf.mxu0
    %871 = vmatprep.mubr.f32.mxu0 0.0
    %872 = vmatmul.mubr.f32.gmra.mxu0 %v652
    %v873 = vpop.f32.mrf.mxu0
    %v874 = vadd.f32 0.0, %v873
    %v875 = vpop.f32.mrf.mxu0
    %876 = vmatprep.mubr.f32.mxu0 0.0
    %877 = vmatmul.mubr.f32.gmra.mxu0 %v655
    %v878 = vpop.f32.mrf.mxu0
    %v879 = vadd.f32 0.0, %v878
    %v880 = vpop.f32.mrf.mxu0
    %881 = vdwg.mxu0
    %v883 = vsel %vm560, %v463, 0
    %v886 = vsel %vm560, %v464, 0
    %v889 = vsel %vm560, %v465, 0
    %v892 = vsel %vm560, %v466, 0
    %v895 = vsel %vm560, %v467, 0
    %v898 = vsel %vm560, %v468, 0
    %v901 = vsel %vm560, %v469, 0
    %v904 = vsel %vm560, %v470, 0
    %v907 = vsel %vm560, %v471, 0
    %v910 = vsel %vm560, %v472, 0
    %v913 = vsel %vm560, %v473, 0
    %v916 = vsel %vm560, %v474, 0
    %v919 = vsel %vm560, %v475, 0
    %v922 = vsel %vm560, %v476, 0
    %v925 = vsel %vm560, %v477, 0
    %v928 = vsel %vm560, %v478, 0
    %v931 = vsel %vm560, %v479, 0
    %v934 = vsel %vm560, %v480, 0
    %v937 = vsel %vm560, %v481, 0
    %v940 = vsel %vm560, %v482, 0
    %v943 = vsel %vm560, %v483, 0
    %v946 = vsel %vm560, %v484, 0
    %v949 = vsel %vm560, %v485, 0
    %v952 = vsel %vm560, %v486, 0
    %v955 = vsel %vm560, %v487, 0
    %v958 = vsel %vm560, %v488, 0
    %v961 = vsel %vm560, %v489, 0
    %v964 = vsel %vm560, %v490, 0
    %v967 = vsel %vm560, %v491, 0
    %v970 = vsel %vm560, %v492, 0
    %v973 = vsel %vm560, %v493, 0
    %v976 = vsel %vm560, %v494, 0
    %978 = vmatprep.subr.mxu0 0.0
    %979 = vmatpush1.msra.mxu0 0.0
    %980 = vmatprep.subr.mxu0 0.0
    %981 = vmatpush1.msra.mxu0 0.0
    %982 = vmatprep.subr.mxu0 0.0
    %983 = vmatpush1.msra.mxu0 0.0
    %984 = vmatprep.subr.mxu0 0.0
    %985 = vmatpush1.msra.mxu0 0.0
    %986 = vmatprep.subr.mxu0 0.0
    %987 = vmatpush1.msra.mxu0 0.0
    %988 = vmatprep.subr.mxu0 0.0
    %989 = vmatpush1.msra.mxu0 0.0
    %990 = vmatprep.subr.mxu0 0.0
    %991 = vmatpush1.msra.mxu0 0.0
    %992 = vmatprep.subr.mxu0 0.0
    %993 = vmatpush1.msra.mxu0 0.0
    %994 = vmatprep.subr.mxu0 0.0
    %995 = vmatpush1.msra.mxu0 %v67
    %996 = vmatprep.subr.mxu0 0.0
    %997 = vmatpush1.msra.mxu0 %v66
    %998 = vmatprep.subr.mxu0 0.0
    %999 = vmatpush1.msra.mxu0 %v65
    %1000 = vmatprep.subr.mxu0 0.0
    %1001 = vmatpush1.msra.mxu0 %v64
    %1002 = vmatprep.subr.mxu0 0.0
    %1003 = vmatpush1.msra.mxu0 %v63
    %1004 = vmatprep.subr.mxu0 0.0
    %1005 = vmatpush1.msra.mxu0 %v62
    %1006 = vmatprep.subr.mxu0 0.0
    %1007 = vmatpush1.msra.mxu0 %v61
    %1008 = vmatprep.subr.mxu0 0.0
    %1009 = vmatpush1.msra.mxu0 %v60
    %1010 = vmatprep.subr.mxu0 0.0
    %1011 = vmatpush2.msra.mxu0 0.0
    %1012 = vmatprep.subr.mxu0 0.0
    %1013 = vmatpush2.msra.mxu0 0.0
    %1014 = vmatprep.subr.mxu0 0.0
    %1015 = vmatpush2.msra.mxu0 0.0
    %1016 = vmatprep.subr.mxu0 0.0
    %1017 = vmatpush2.msra.mxu0 0.0
    %1018 = vmatprep.subr.mxu0 0.0
    %1019 = vmatpush2.msra.mxu0 0.0
    %1020 = vmatprep.subr.mxu0 0.0
    %1021 = vmatpush2.msra.mxu0 0.0
    %1022 = vmatprep.subr.mxu0 0.0
    %1023 = vmatpush2.msra.mxu0 0.0
    %1024 = vmatprep.subr.mxu0 0.0
    %1025 = vmatpush2.msra.mxu0 0.0
    %1026 = vmatprep.subr.mxu0 0.0
    %1027 = vmatpush2.msra.mxu0 0.0
    %1028 = vmatprep.subr.mxu0 0.0
    %1029 = vmatpush2.msra.mxu0 0.0
    %1030 = vmatprep.subr.mxu0 0.0
    %1031 = vmatpush2.msra.mxu0 0.0
    %1032 = vmatprep.subr.mxu0 0.0
    %1033 = vmatpush2.msra.mxu0 0.0
    %1034 = vmatprep.subr.mxu0 0.0
    %1035 = vmatpush2.msra.mxu0 0.0
    %1036 = vmatprep.subr.mxu0 0.0
    %1037 = vmatpush2.msra.mxu0 0.0
    %1038 = vmatprep.subr.mxu0 0.0
    %1039 = vmatpush2.msra.mxu0 0.0
    %1040 = vmatprep.subr.mxu0 0.0
    %1041 = vmatpush2.msra.mxu0 0.0
    %1042 = vmatprep.mubr.f32.mxu0 0.0
    %1043 = vmatmul.mubr.f32.gmra.mxu0 %v883
    %v1044 = vpop.f32.mrf.mxu0
    %v1045 = vadd.f32 0.0, %v1044
    %v1046 = vpop.f32.mrf.mxu0
    %1047 = vmatprep.mubr.f32.mxu0 0.0
    %1048 = vmatmul.mubr.f32.gmra.mxu0 %v886
    %v1049 = vpop.f32.mrf.mxu0
    %v1050 = vadd.f32 0.0, %v1049
    %v1051 = vpop.f32.mrf.mxu0
    %1052 = vmatprep.mubr.f32.mxu0 0.0
    %1053 = vmatmul.mubr.f32.gmra.mxu0 %v889
    %v1054 = vpop.f32.mrf.mxu0
    %v1055 = vadd.f32 0.0, %v1054
    %v1056 = vpop.f32.mrf.mxu0
    %1057 = vmatprep.mubr.f32.mxu0 0.0
    %1058 = vmatmul.mubr.f32.gmra.mxu0 %v892
    %v1059 = vpop.f32.mrf.mxu0
    %v1060 = vadd.f32 0.0, %v1059
    %v1061 = vpop.f32.mrf.mxu0
    %1062 = vmatprep.mubr.f32.mxu0 0.0
    %1063 = vmatmul.mubr.f32.gmra.mxu0 %v895
    %v1064 = vpop.f32.mrf.mxu0
    %v1065 = vadd.f32 0.0, %v1064
    %v1066 = vpop.f32.mrf.mxu0
    %1067 = vmatprep.mubr.f32.mxu0 0.0
    %1068 = vmatmul.mubr.f32.gmra.mxu0 %v898
    %v1069 = vpop.f32.mrf.mxu0
    %v1070 = vadd.f32 0.0, %v1069
    %v1071 = vpop.f32.mrf.mxu0
    %1072 = vmatprep.mubr.f32.mxu0 0.0
    %1073 = vmatmul.mubr.f32.gmra.mxu0 %v901
    %v1074 = vpop.f32.mrf.mxu0
    %v1075 = vadd.f32 0.0, %v1074
    %v1076 = vpop.f32.mrf.mxu0
    %1077 = vmatprep.mubr.f32.mxu0 0.0
    %1078 = vmatmul.mubr.f32.gmra.mxu0 %v904
    %v1079 = vpop.f32.mrf.mxu0
    %v1080 = vadd.f32 0.0, %v1079
    %v1081 = vpop.f32.mrf.mxu0
    %1082 = vmatprep.mubr.f32.mxu0 0.0
    %1083 = vmatmul.mubr.f32.gmra.mxu0 %v907
    %v1084 = vpop.f32.mrf.mxu0
    %v1085 = vadd.f32 0.0, %v1084
    %v1086 = vpop.f32.mrf.mxu0
    %1087 = vmatprep.mubr.f32.mxu0 0.0
    %1088 = vmatmul.mubr.f32.gmra.mxu0 %v910
    %v1089 = vpop.f32.mrf.mxu0
    %v1090 = vadd.f32 0.0, %v1089
    %v1091 = vpop.f32.mrf.mxu0
    %1092 = vmatprep.mubr.f32.mxu0 0.0
    %1093 = vmatmul.mubr.f32.gmra.mxu0 %v913
    %v1094 = vpop.f32.mrf.mxu0
    %v1095 = vadd.f32 0.0, %v1094
    %v1096 = vpop.f32.mrf.mxu0
    %1097 = vmatprep.mubr.f32.mxu0 0.0
    %1098 = vmatmul.mubr.f32.gmra.mxu0 %v916
    %v1099 = vpop.f32.mrf.mxu0
    %v1100 = vadd.f32 0.0, %v1099
    %v1101 = vpop.f32.mrf.mxu0
    %1102 = vmatprep.mubr.f32.mxu0 0.0
    %1103 = vmatmul.mubr.f32.gmra.mxu0 %v919
    %v1104 = vpop.f32.mrf.mxu0
    %v1105 = vadd.f32 0.0, %v1104
    %v1106 = vpop.f32.mrf.mxu0
    %1107 = vmatprep.mubr.f32.mxu0 0.0
    %1108 = vmatmul.mubr.f32.gmra.mxu0 %v922
    %v1109 = vpop.f32.mrf.mxu0
    %v1110 = vadd.f32 0.0, %v1109
    %v1111 = vpop.f32.mrf.mxu0
    %1112 = vmatprep.mubr.f32.mxu0 0.0
    %1113 = vmatmul.mubr.f32.gmra.mxu0 %v925
    %v1114 = vpop.f32.mrf.mxu0
    %v1115 = vadd.f32 0.0, %v1114
    %v1116 = vpop.f32.mrf.mxu0
    %1117 = vmatprep.mubr.f32.mxu0 0.0
    %1118 = vmatmul.mubr.f32.gmra.mxu0 %v928
    %v1119 = vpop.f32.mrf.mxu0
    %v1120 = vadd.f32 0.0, %v1119
    %v1121 = vpop.f32.mrf.mxu0
    %1122 = vmatprep.mubr.f32.mxu0 0.0
    %1123 = vmatmul.mubr.f32.gmra.mxu0 %v931
    %v1124 = vpop.f32.mrf.mxu0
    %v1125 = vadd.f32 0.0, %v1124
    %v1126 = vpop.f32.mrf.mxu0
    %1127 = vmatprep.mubr.f32.mxu0 0.0
    %1128 = vmatmul.mubr.f32.gmra.mxu0 %v934
    %v1129 = vpop.f32.mrf.mxu0
    %v1130 = vadd.f32 0.0, %v1129
    %v1131 = vpop.f32.mrf.mxu0
    %1132 = vmatprep.mubr.f32.mxu0 0.0
    %1133 = vmatmul.mubr.f32.gmra.mxu0 %v937
    %v1134 = vpop.f32.mrf.mxu0
    %v1135 = vadd.f32 0.0, %v1134
    %v1136 = vpop.f32.mrf.mxu0
    %1137 = vmatprep.mubr.f32.mxu0 0.0
    %1138 = vmatmul.mubr.f32.gmra.mxu0 %v940
    %v1139 = vpop.f32.mrf.mxu0
    %v1140 = vadd.f32 0.0, %v1139
    %v1141 = vpop.f32.mrf.mxu0
    %1142 = vmatprep.mubr.f32.mxu0 0.0
    %1143 = vmatmul.mubr.f32.gmra.mxu0 %v943
    %v1144 = vpop.f32.mrf.mxu0
    %v1145 = vadd.f32 0.0, %v1144
    %v1146 = vpop.f32.mrf.mxu0
    %1147 = vmatprep.mubr.f32.mxu0 0.0
    %1148 = vmatmul.mubr.f32.gmra.mxu0 %v946
    %v1149 = vpop.f32.mrf.mxu0
    %v1150 = vadd.f32 0.0, %v1149
    %v1151 = vpop.f32.mrf.mxu0
    %1152 = vmatprep.mubr.f32.mxu0 0.0
    %1153 = vmatmul.mubr.f32.gmra.mxu0 %v949
    %v1154 = vpop.f32.mrf.mxu0
    %v1155 = vadd.f32 0.0, %v1154
    %v1156 = vpop.f32.mrf.mxu0
    %1157 = vmatprep.mubr.f32.mxu0 0.0
    %1158 = vmatmul.mubr.f32.gmra.mxu0 %v952
    %v1159 = vpop.f32.mrf.mxu0
    %v1160 = vadd.f32 0.0, %v1159
    %v1161 = vpop.f32.mrf.mxu0
    %1162 = vmatprep.mubr.f32.mxu0 0.0
    %1163 = vmatmul.mubr.f32.gmra.mxu0 %v955
    %v1164 = vpop.f32.mrf.mxu0
    %v1165 = vadd.f32 0.0, %v1164
    %v1166 = vpop.f32.mrf.mxu0
    %1167 = vmatprep.mubr.f32.mxu0 0.0
    %1168 = vmatmul.mubr.f32.gmra.mxu0 %v958
    %v1169 = vpop.f32.mrf.mxu0
    %v1170 = vadd.f32 0.0, %v1169
    %v1171 = vpop.f32.mrf.mxu0
    %1172 = vmatprep.mubr.f32.mxu0 0.0
    %1173 = vmatmul.mubr.f32.gmra.mxu0 %v961
    %v1174 = vpop.f32.mrf.mxu0
    %v1175 = vadd.f32 0.0, %v1174
    %v1176 = vpop.f32.mrf.mxu0
    %1177 = vmatprep.mubr.f32.mxu0 0.0
    %1178 = vmatmul.mubr.f32.gmra.mxu0 %v964
    %v1179 = vpop.f32.mrf.mxu0
    %v1180 = vadd.f32 0.0, %v1179
    %v1181 = vpop.f32.mrf.mxu0
    %1182 = vmatprep.mubr.f32.mxu0 0.0
    %1183 = vmatmul.mubr.f32.gmra.mxu0 %v967
    %v1184 = vpop.f32.mrf.mxu0
    %v1185 = vadd.f32 0.0, %v1184
    %v1186 = vpop.f32.mrf.mxu0
    %1187 = vmatprep.mubr.f32.mxu0 0.0
    %1188 = vmatmul.mubr.f32.gmra.mxu0 %v970
    %v1189 = vpop.f32.mrf.mxu0
    %v1190 = vadd.f32 0.0, %v1189
    %v1191 = vpop.f32.mrf.mxu0
    %1192 = vmatprep.mubr.f32.mxu0 0.0
    %1193 = vmatmul.mubr.f32.gmra.mxu0 %v973
    %v1194 = vpop.f32.mrf.mxu0
    %v1195 = vadd.f32 0.0, %v1194
    %v1196 = vpop.f32.mrf.mxu0
    %1197 = vmatprep.mubr.f32.mxu0 0.0
    %1198 = vmatmul.mubr.f32.gmra.mxu0 %v976
    %v1199 = vpop.f32.mrf.mxu0
    %v1200 = vadd.f32 0.0, %v1199
    %v1201 = vpop.f32.mrf.mxu0
    %1202 = vdwg.mxu0
    %1203 = vmatprep.subr.mxu0 0.0
    %1204 = vmatpush1.msra.mxu0 0.0
    %1205 = vmatprep.subr.mxu0 0.0
    %1206 = vmatpush1.msra.mxu0 0.0
    %1207 = vmatprep.subr.mxu0 0.0
    %1208 = vmatpush1.msra.mxu0 0.0
    %1209 = vmatprep.subr.mxu0 0.0
    %1210 = vmatpush1.msra.mxu0 0.0
    %1211 = vmatprep.subr.mxu0 0.0
    %1212 = vmatpush1.msra.mxu0 0.0
    %1213 = vmatprep.subr.mxu0 0.0
    %1214 = vmatpush1.msra.mxu0 0.0
    %1215 = vmatprep.subr.mxu0 0.0
    %1216 = vmatpush1.msra.mxu0 0.0
    %1217 = vmatprep.subr.mxu0 0.0
    %1218 = vmatpush1.msra.mxu0 0.0
    %1219 = vmatprep.subr.mxu0 0.0
    %1220 = vmatpush1.msra.mxu0 %v75
    %1221 = vmatprep.subr.mxu0 0.0
    %1222 = vmatpush1.msra.mxu0 %v74
    %1223 = vmatprep.subr.mxu0 0.0
    %1224 = vmatpush1.msra.mxu0 %v73
    %1225 = vmatprep.subr.mxu0 0.0
    %1226 = vmatpush1.msra.mxu0 %v72
    %1227 = vmatprep.subr.mxu0 0.0
    %1228 = vmatpush1.msra.mxu0 %v71
    %1229 = vmatprep.subr.mxu0 0.0
    %1230 = vmatpush1.msra.mxu0 %v70
    %1231 = vmatprep.subr.mxu0 0.0
    %1232 = vmatpush1.msra.mxu0 %v69
    %1233 = vmatprep.subr.mxu0 0.0
    %1234 = vmatpush1.msra.mxu0 %v68
    %1235 = vmatprep.subr.mxu0 0.0
    %1236 = vmatpush2.msra.mxu0 0.0
    %1237 = vmatprep.subr.mxu0 0.0
    %1238 = vmatpush2.msra.mxu0 0.0
    %1239 = vmatprep.subr.mxu0 0.0
    %1240 = vmatpush2.msra.mxu0 0.0
    %1241 = vmatprep.subr.mxu0 0.0
    %1242 = vmatpush2.msra.mxu0 0.0
    %1243 = vmatprep.subr.mxu0 0.0
    %1244 = vmatpush2.msra.mxu0 0.0
    %1245 = vmatprep.subr.mxu0 0.0
    %1246 = vmatpush2.msra.mxu0 0.0
    %1247 = vmatprep.subr.mxu0 0.0
    %1248 = vmatpush2.msra.mxu0 0.0
    %1249 = vmatprep.subr.mxu0 0.0
    %1250 = vmatpush2.msra.mxu0 0.0
    %1251 = vmatprep.subr.mxu0 0.0
    %1252 = vmatpush2.msra.mxu0 0.0
    %1253 = vmatprep.subr.mxu0 0.0
    %1254 = vmatpush2.msra.mxu0 0.0
    %1255 = vmatprep.subr.mxu0 0.0
    %1256 = vmatpush2.msra.mxu0 0.0
    %1257 = vmatprep.subr.mxu0 0.0
    %1258 = vmatpush2.msra.mxu0 0.0
    %1259 = vmatprep.subr.mxu0 0.0
    %1260 = vmatpush2.msra.mxu0 0.0
    %1261 = vmatprep.subr.mxu0 0.0
    %1262 = vmatpush2.msra.mxu0 0.0
    %1263 = vmatprep.subr.mxu0 0.0
    %1264 = vmatpush2.msra.mxu0 0.0
    %1265 = vmatprep.subr.mxu0 0.0
    %1266 = vmatpush2.msra.mxu0 0.0
    %1267 = vmatprep.mubr.f32.mxu0 0.0
    %1268 = vmatmul.mubr.f32.gmra.mxu0 %v562
    %v1269 = vpop.f32.mrf.mxu0
    %v1270 = vadd.f32 0.0, %v1269
    %v1271 = vpop.f32.mrf.mxu0
    %1272 = vmatprep.mubr.f32.mxu0 0.0
    %1273 = vmatmul.mubr.f32.gmra.mxu0 %v565
    %v1274 = vpop.f32.mrf.mxu0
    %v1275 = vadd.f32 0.0, %v1274
    %v1276 = vpop.f32.mrf.mxu0
    %1277 = vmatprep.mubr.f32.mxu0 0.0
    %1278 = vmatmul.mubr.f32.gmra.mxu0 %v568
    %v1279 = vpop.f32.mrf.mxu0
    %v1280 = vadd.f32 0.0, %v1279
    %v1281 = vpop.f32.mrf.mxu0
    %1282 = vmatprep.mubr.f32.mxu0 0.0
    %1283 = vmatmul.mubr.f32.gmra.mxu0 %v571
    %v1284 = vpop.f32.mrf.mxu0
    %v1285 = vadd.f32 0.0, %v1284
    %v1286 = vpop.f32.mrf.mxu0
    %1287 = vmatprep.mubr.f32.mxu0 0.0
    %1288 = vmatmul.mubr.f32.gmra.mxu0 %v574
    %v1289 = vpop.f32.mrf.mxu0
    %v1290 = vadd.f32 0.0, %v1289
    %v1291 = vpop.f32.mrf.mxu0
    %1292 = vmatprep.mubr.f32.mxu0 0.0
    %1293 = vmatmul.mubr.f32.gmra.mxu0 %v577
    %v1294 = vpop.f32.mrf.mxu0
    %v1295 = vadd.f32 0.0, %v1294
    %v1296 = vpop.f32.mrf.mxu0
    %1297 = vmatprep.mubr.f32.mxu0 0.0
    %1298 = vmatmul.mubr.f32.gmra.mxu0 %v580
    %v1299 = vpop.f32.mrf.mxu0
    %v1300 = vadd.f32 0.0, %v1299
    %v1301 = vpop.f32.mrf.mxu0
    %1302 = vmatprep.mubr.f32.mxu0 0.0
    %1303 = vmatmul.mubr.f32.gmra.mxu0 %v583
    %v1304 = vpop.f32.mrf.mxu0
    %v1305 = vadd.f32 0.0, %v1304
    %v1306 = vpop.f32.mrf.mxu0
    %1307 = vmatprep.mubr.f32.mxu0 0.0
    %1308 = vmatmul.mubr.f32.gmra.mxu0 %v586
    %v1309 = vpop.f32.mrf.mxu0
    %v1310 = vadd.f32 0.0, %v1309
    %v1311 = vpop.f32.mrf.mxu0
    %1312 = vmatprep.mubr.f32.mxu0 0.0
    %1313 = vmatmul.mubr.f32.gmra.mxu0 %v589
    %v1314 = vpop.f32.mrf.mxu0
    %v1315 = vadd.f32 0.0, %v1314
    %v1316 = vpop.f32.mrf.mxu0
    %1317 = vmatprep.mubr.f32.mxu0 0.0
    %1318 = vmatmul.mubr.f32.gmra.mxu0 %v592
    %v1319 = vpop.f32.mrf.mxu0
    %v1320 = vadd.f32 0.0, %v1319
    %v1321 = vpop.f32.mrf.mxu0
    %1322 = vmatprep.mubr.f32.mxu0 0.0
    %1323 = vmatmul.mubr.f32.gmra.mxu0 %v595
    %v1324 = vpop.f32.mrf.mxu0
    %v1325 = vadd.f32 0.0, %v1324
    %v1326 = vpop.f32.mrf.mxu0
    %1327 = vmatprep.mubr.f32.mxu0 0.0
    %1328 = vmatmul.mubr.f32.gmra.mxu0 %v598
    %v1329 = vpop.f32.mrf.mxu0
    %v1330 = vadd.f32 0.0, %v1329
    %v1331 = vpop.f32.mrf.mxu0
    %1332 = vmatprep.mubr.f32.mxu0 0.0
    %1333 = vmatmul.mubr.f32.gmra.mxu0 %v601
    %v1334 = vpop.f32.mrf.mxu0
    %v1335 = vadd.f32 0.0, %v1334
    %v1336 = vpop.f32.mrf.mxu0
    %1337 = vmatprep.mubr.f32.mxu0 0.0
    %1338 = vmatmul.mubr.f32.gmra.mxu0 %v604
    %v1339 = vpop.f32.mrf.mxu0
    %v1340 = vadd.f32 0.0, %v1339
    %v1341 = vpop.f32.mrf.mxu0
    %1342 = vmatprep.mubr.f32.mxu0 0.0
    %1343 = vmatmul.mubr.f32.gmra.mxu0 %v607
    %v1344 = vpop.f32.mrf.mxu0
    %v1345 = vadd.f32 0.0, %v1344
    %v1346 = vpop.f32.mrf.mxu0
    %1347 = vmatprep.mubr.f32.mxu0 0.0
    %1348 = vmatmul.mubr.f32.gmra.mxu0 %v610
    %v1349 = vpop.f32.mrf.mxu0
    %v1350 = vadd.f32 0.0, %v1349
    %v1351 = vpop.f32.mrf.mxu0
    %1352 = vmatprep.mubr.f32.mxu0 0.0
    %1353 = vmatmul.mubr.f32.gmra.mxu0 %v613
    %v1354 = vpop.f32.mrf.mxu0
    %v1355 = vadd.f32 0.0, %v1354
    %v1356 = vpop.f32.mrf.mxu0
    %1357 = vmatprep.mubr.f32.mxu0 0.0
    %1358 = vmatmul.mubr.f32.gmra.mxu0 %v616
    %v1359 = vpop.f32.mrf.mxu0
    %v1360 = vadd.f32 0.0, %v1359
    %v1361 = vpop.f32.mrf.mxu0
    %1362 = vmatprep.mubr.f32.mxu0 0.0
    %1363 = vmatmul.mubr.f32.gmra.mxu0 %v619
    %v1364 = vpop.f32.mrf.mxu0
    %v1365 = vadd.f32 0.0, %v1364
    %v1366 = vpop.f32.mrf.mxu0
    %1367 = vmatprep.mubr.f32.mxu0 0.0
    %1368 = vmatmul.mubr.f32.gmra.mxu0 %v622
    %v1369 = vpop.f32.mrf.mxu0
    %v1370 = vadd.f32 0.0, %v1369
    %v1371 = vpop.f32.mrf.mxu0
    %1372 = vmatprep.mubr.f32.mxu0 0.0
    %1373 = vmatmul.mubr.f32.gmra.mxu0 %v625
    %v1374 = vpop.f32.mrf.mxu0
    %v1375 = vadd.f32 0.0, %v1374
    %v1376 = vpop.f32.mrf.mxu0
    %1377 = vmatprep.mubr.f32.mxu0 0.0
    %1378 = vmatmul.mubr.f32.gmra.mxu0 %v628
    %v1379 = vpop.f32.mrf.mxu0
    %v1380 = vadd.f32 0.0, %v1379
    %v1381 = vpop.f32.mrf.mxu0
    %1382 = vmatprep.mubr.f32.mxu0 0.0
    %1383 = vmatmul.mubr.f32.gmra.mxu0 %v631
    %v1384 = vpop.f32.mrf.mxu0
    %v1385 = vadd.f32 0.0, %v1384
    %v1386 = vpop.f32.mrf.mxu0
    %1387 = vmatprep.mubr.f32.mxu0 0.0
    %1388 = vmatmul.mubr.f32.gmra.mxu0 %v634
    %v1389 = vpop.f32.mrf.mxu0
    %v1390 = vadd.f32 0.0, %v1389
    %v1391 = vpop.f32.mrf.mxu0
    %1392 = vmatprep.mubr.f32.mxu0 0.0
    %1393 = vmatmul.mubr.f32.gmra.mxu0 %v637
    %v1394 = vpop.f32.mrf.mxu0
    %v1395 = vadd.f32 0.0, %v1394
    %v1396 = vpop.f32.mrf.mxu0
    %1397 = vmatprep.mubr.f32.mxu0 0.0
    %1398 = vmatmul.mubr.f32.gmra.mxu0 %v640
    %v1399 = vpop.f32.mrf.mxu0
    %v1400 = vadd.f32 0.0, %v1399
    %v1401 = vpop.f32.mrf.mxu0
    %1402 = vmatprep.mubr.f32.mxu0 0.0
    %1403 = vmatmul.mubr.f32.gmra.mxu0 %v643
    %v1404 = vpop.f32.mrf.mxu0
    %v1405 = vadd.f32 0.0, %v1404
    %v1406 = vpop.f32.mrf.mxu0
    %1407 = vmatprep.mubr.f32.mxu0 0.0
    %1408 = vmatmul.mubr.f32.gmra.mxu0 %v646
    %v1409 = vpop.f32.mrf.mxu0
    %v1410 = vadd.f32 0.0, %v1409
    %v1411 = vpop.f32.mrf.mxu0
    %1412 = vmatprep.mubr.f32.mxu0 0.0
    %1413 = vmatmul.mubr.f32.gmra.mxu0 %v649
    %v1414 = vpop.f32.mrf.mxu0
    %v1415 = vadd.f32 0.0, %v1414
    %v1416 = vpop.f32.mrf.mxu0
    %1417 = vmatprep.mubr.f32.mxu0 0.0
    %1418 = vmatmul.mubr.f32.gmra.mxu0 %v652
    %v1419 = vpop.f32.mrf.mxu0
    %v1420 = vadd.f32 0.0, %v1419
    %v1421 = vpop.f32.mrf.mxu0
    %1422 = vmatprep.mubr.f32.mxu0 0.0
    %1423 = vmatmul.mubr.f32.gmra.mxu0 %v655
    %v1424 = vpop.f32.mrf.mxu0
    %v1425 = vadd.f32 0.0, %v1424
    %v1426 = vpop.f32.mrf.mxu0
    %1427 = vdwg.mxu0
    %1428 = vmatprep.subr.mxu0 0.0
    %1429 = vmatpush1.msra.mxu0 0.0
    %1430 = vmatprep.subr.mxu0 0.0
    %1431 = vmatpush1.msra.mxu0 0.0
    %1432 = vmatprep.subr.mxu0 0.0
    %1433 = vmatpush1.msra.mxu0 0.0
    %1434 = vmatprep.subr.mxu0 0.0
    %1435 = vmatpush1.msra.mxu0 0.0
    %1436 = vmatprep.subr.mxu0 0.0
    %1437 = vmatpush1.msra.mxu0 0.0
    %1438 = vmatprep.subr.mxu0 0.0
    %1439 = vmatpush1.msra.mxu0 0.0
    %1440 = vmatprep.subr.mxu0 0.0
    %1441 = vmatpush1.msra.mxu0 0.0
    %1442 = vmatprep.subr.mxu0 0.0
    %1443 = vmatpush1.msra.mxu0 0.0
    %1444 = vmatprep.subr.mxu0 0.0
    %1445 = vmatpush1.msra.mxu0 %v75
    %1446 = vmatprep.subr.mxu0 0.0
    %1447 = vmatpush1.msra.mxu0 %v74
    %1448 = vmatprep.subr.mxu0 0.0
    %1449 = vmatpush1.msra.mxu0 %v73
    %1450 = vmatprep.subr.mxu0 0.0
    %1451 = vmatpush1.msra.mxu0 %v72
    %1452 = vmatprep.subr.mxu0 0.0
    %1453 = vmatpush1.msra.mxu0 %v71
    %1454 = vmatprep.subr.mxu0 0.0
    %1455 = vmatpush1.msra.mxu0 %v70
    %1456 = vmatprep.subr.mxu0 0.0
    %1457 = vmatpush1.msra.mxu0 %v69
    %1458 = vmatprep.subr.mxu0 0.0
    %1459 = vmatpush1.msra.mxu0 %v68
    %1460 = vmatprep.subr.mxu0 0.0
    %1461 = vmatpush2.msra.mxu0 0.0
    %1462 = vmatprep.subr.mxu0 0.0
    %1463 = vmatpush2.msra.mxu0 0.0
    %1464 = vmatprep.subr.mxu0 0.0
    %1465 = vmatpush2.msra.mxu0 0.0
    %1466 = vmatprep.subr.mxu0 0.0
    %1467 = vmatpush2.msra.mxu0 0.0
    %1468 = vmatprep.subr.mxu0 0.0
    %1469 = vmatpush2.msra.mxu0 0.0
    %1470 = vmatprep.subr.mxu0 0.0
    %1471 = vmatpush2.msra.mxu0 0.0
    %1472 = vmatprep.subr.mxu0 0.0
    %1473 = vmatpush2.msra.mxu0 0.0
    %1474 = vmatprep.subr.mxu0 0.0
    %1475 = vmatpush2.msra.mxu0 0.0
    %1476 = vmatprep.subr.mxu0 0.0
    %1477 = vmatpush2.msra.mxu0 0.0
    %1478 = vmatprep.subr.mxu0 0.0
    %1479 = vmatpush2.msra.mxu0 0.0
    %1480 = vmatprep.subr.mxu0 0.0
    %1481 = vmatpush2.msra.mxu0 0.0
    %1482 = vmatprep.subr.mxu0 0.0
    %1483 = vmatpush2.msra.mxu0 0.0
    %1484 = vmatprep.subr.mxu0 0.0
    %1485 = vmatpush2.msra.mxu0 0.0
    %1486 = vmatprep.subr.mxu0 0.0
    %1487 = vmatpush2.msra.mxu0 0.0
    %1488 = vmatprep.subr.mxu0 0.0
    %1489 = vmatpush2.msra.mxu0 0.0
    %1490 = vmatprep.subr.mxu0 0.0
    %1491 = vmatpush2.msra.mxu0 0.0
    %1492 = vmatprep.mubr.f32.mxu0 0.0
    %1493 = vmatmul.mubr.f32.gmra.mxu0 %v883
    %v1494 = vpop.f32.mrf.mxu0
    %v1495 = vadd.f32 0.0, %v1494
    %v1496 = vpop.f32.mrf.mxu0
    %1497 = vmatprep.mubr.f32.mxu0 0.0
    %1498 = vmatmul.mubr.f32.gmra.mxu0 %v886
    %v1499 = vpop.f32.mrf.mxu0
    %v1500 = vadd.f32 0.0, %v1499
    %v1501 = vpop.f32.mrf.mxu0
    %1502 = vmatprep.mubr.f32.mxu0 0.0
    %1503 = vmatmul.mubr.f32.gmra.mxu0 %v889
    %v1504 = vpop.f32.mrf.mxu0
    %v1505 = vadd.f32 0.0, %v1504
    %v1506 = vpop.f32.mrf.mxu0
    %1507 = vmatprep.mubr.f32.mxu0 0.0
    %1508 = vmatmul.mubr.f32.gmra.mxu0 %v892
    %v1509 = vpop.f32.mrf.mxu0
    %v1510 = vadd.f32 0.0, %v1509
    %v1511 = vpop.f32.mrf.mxu0
    %1512 = vmatprep.mubr.f32.mxu0 0.0
    %1513 = vmatmul.mubr.f32.gmra.mxu0 %v895
    %v1514 = vpop.f32.mrf.mxu0
    %v1515 = vadd.f32 0.0, %v1514
    %v1516 = vpop.f32.mrf.mxu0
    %1517 = vmatprep.mubr.f32.mxu0 0.0
    %1518 = vmatmul.mubr.f32.gmra.mxu0 %v898
    %v1519 = vpop.f32.mrf.mxu0
    %v1520 = vadd.f32 0.0, %v1519
    %v1521 = vpop.f32.mrf.mxu0
    %1522 = vmatprep.mubr.f32.mxu0 0.0
    %1523 = vmatmul.mubr.f32.gmra.mxu0 %v901
    %v1524 = vpop.f32.mrf.mxu0
    %v1525 = vadd.f32 0.0, %v1524
    %v1526 = vpop.f32.mrf.mxu0
    %1527 = vmatprep.mubr.f32.mxu0 0.0
    %1528 = vmatmul.mubr.f32.gmra.mxu0 %v904
    %v1529 = vpop.f32.mrf.mxu0
    %v1530 = vadd.f32 0.0, %v1529
    %v1531 = vpop.f32.mrf.mxu0
    %1532 = vmatprep.mubr.f32.mxu0 0.0
    %1533 = vmatmul.mubr.f32.gmra.mxu0 %v907
    %v1534 = vpop.f32.mrf.mxu0
    %v1535 = vadd.f32 0.0, %v1534
    %v1536 = vpop.f32.mrf.mxu0
    %1537 = vmatprep.mubr.f32.mxu0 0.0
    %1538 = vmatmul.mubr.f32.gmra.mxu0 %v910
    %v1539 = vpop.f32.mrf.mxu0
    %v1540 = vadd.f32 0.0, %v1539
    %v1541 = vpop.f32.mrf.mxu0
    %1542 = vmatprep.mubr.f32.mxu0 0.0
    %1543 = vmatmul.mubr.f32.gmra.mxu0 %v913
    %v1544 = vpop.f32.mrf.mxu0
    %v1545 = vadd.f32 0.0, %v1544
    %v1546 = vpop.f32.mrf.mxu0
    %1547 = vmatprep.mubr.f32.mxu0 0.0
    %1548 = vmatmul.mubr.f32.gmra.mxu0 %v916
    %v1549 = vpop.f32.mrf.mxu0
    %v1550 = vadd.f32 0.0, %v1549
    %v1551 = vpop.f32.mrf.mxu0
    %1552 = vmatprep.mubr.f32.mxu0 0.0
    %1553 = vmatmul.mubr.f32.gmra.mxu0 %v919
    %v1554 = vpop.f32.mrf.mxu0
    %v1555 = vadd.f32 0.0, %v1554
    %v1556 = vpop.f32.mrf.mxu0
    %1557 = vmatprep.mubr.f32.mxu0 0.0
    %1558 = vmatmul.mubr.f32.gmra.mxu0 %v922
    %v1559 = vpop.f32.mrf.mxu0
    %v1560 = vadd.f32 0.0, %v1559
    %v1561 = vpop.f32.mrf.mxu0
    %1562 = vmatprep.mubr.f32.mxu0 0.0
    %1563 = vmatmul.mubr.f32.gmra.mxu0 %v925
    %v1564 = vpop.f32.mrf.mxu0
    %v1565 = vadd.f32 0.0, %v1564
    %v1566 = vpop.f32.mrf.mxu0
    %1567 = vmatprep.mubr.f32.mxu0 0.0
    %1568 = vmatmul.mubr.f32.gmra.mxu0 %v928
    %v1569 = vpop.f32.mrf.mxu0
    %v1570 = vadd.f32 0.0, %v1569
    %v1571 = vpop.f32.mrf.mxu0
    %1572 = vmatprep.mubr.f32.mxu0 0.0
    %1573 = vmatmul.mubr.f32.gmra.mxu0 %v931
    %v1574 = vpop.f32.mrf.mxu0
    %v1575 = vadd.f32 0.0, %v1574
    %v1576 = vpop.f32.mrf.mxu0
    %1577 = vmatprep.mubr.f32.mxu0 0.0
    %1578 = vmatmul.mubr.f32.gmra.mxu0 %v934
    %v1579 = vpop.f32.mrf.mxu0
    %v1580 = vadd.f32 0.0, %v1579
    %v1581 = vpop.f32.mrf.mxu0
    %1582 = vmatprep.mubr.f32.mxu0 0.0
    %1583 = vmatmul.mubr.f32.gmra.mxu0 %v937
    %v1584 = vpop.f32.mrf.mxu0
    %v1585 = vadd.f32 0.0, %v1584
    %v1586 = vpop.f32.mrf.mxu0
    %1587 = vmatprep.mubr.f32.mxu0 0.0
    %1588 = vmatmul.mubr.f32.gmra.mxu0 %v940
    %v1589 = vpop.f32.mrf.mxu0
    %v1590 = vadd.f32 0.0, %v1589
    %v1591 = vpop.f32.mrf.mxu0
    %1592 = vmatprep.mubr.f32.mxu0 0.0
    %1593 = vmatmul.mubr.f32.gmra.mxu0 %v943
    %v1594 = vpop.f32.mrf.mxu0
    %v1595 = vadd.f32 0.0, %v1594
    %v1596 = vpop.f32.mrf.mxu0
    %1597 = vmatprep.mubr.f32.mxu0 0.0
    %1598 = vmatmul.mubr.f32.gmra.mxu0 %v946
    %v1599 = vpop.f32.mrf.mxu0
    %v1600 = vadd.f32 0.0, %v1599
    %v1601 = vpop.f32.mrf.mxu0
    %1602 = vmatprep.mubr.f32.mxu0 0.0
    %1603 = vmatmul.mubr.f32.gmra.mxu0 %v949
    %v1604 = vpop.f32.mrf.mxu0
    %v1605 = vadd.f32 0.0, %v1604
    %v1606 = vpop.f32.mrf.mxu0
    %1607 = vmatprep.mubr.f32.mxu0 0.0
    %1608 = vmatmul.mubr.f32.gmra.mxu0 %v952
    %v1609 = vpop.f32.mrf.mxu0
    %v1610 = vadd.f32 0.0, %v1609
    %v1611 = vpop.f32.mrf.mxu0
    %1612 = vmatprep.mubr.f32.mxu0 0.0
    %1613 = vmatmul.mubr.f32.gmra.mxu0 %v955
    %v1614 = vpop.f32.mrf.mxu0
    %v1615 = vadd.f32 0.0, %v1614
    %v1616 = vpop.f32.mrf.mxu0
    %1617 = vmatprep.mubr.f32.mxu0 0.0
    %1618 = vmatmul.mubr.f32.gmra.mxu0 %v958
    %v1619 = vpop.f32.mrf.mxu0
    %v1620 = vadd.f32 0.0, %v1619
    %v1621 = vpop.f32.mrf.mxu0
    %1622 = vmatprep.mubr.f32.mxu0 0.0
    %1623 = vmatmul.mubr.f32.gmra.mxu0 %v961
    %v1624 = vpop.f32.mrf.mxu0
    %v1625 = vadd.f32 0.0, %v1624
    %v1626 = vpop.f32.mrf.mxu0
    %1627 = vmatprep.mubr.f32.mxu0 0.0
    %1628 = vmatmul.mubr.f32.gmra.mxu0 %v964
    %v1629 = vpop.f32.mrf.mxu0
    %v1630 = vadd.f32 0.0, %v1629
    %v1631 = vpop.f32.mrf.mxu0
    %1632 = vmatprep.mubr.f32.mxu0 0.0
    %1633 = vmatmul.mubr.f32.gmra.mxu0 %v967
    %v1634 = vpop.f32.mrf.mxu0
    %v1635 = vadd.f32 0.0, %v1634
    %v1636 = vpop.f32.mrf.mxu0
    %1637 = vmatprep.mubr.f32.mxu0 0.0
    %1638 = vmatmul.mubr.f32.gmra.mxu0 %v970
    %v1639 = vpop.f32.mrf.mxu0
    %v1640 = vadd.f32 0.0, %v1639
    %v1641 = vpop.f32.mrf.mxu0
    %1642 = vmatprep.mubr.f32.mxu0 0.0
    %1643 = vmatmul.mubr.f32.gmra.mxu0 %v973
    %v1644 = vpop.f32.mrf.mxu0
    %v1645 = vadd.f32 0.0, %v1644
    %v1646 = vpop.f32.mrf.mxu0
    %1647 = vmatprep.mubr.f32.mxu0 0.0
    %1648 = vmatmul.mubr.f32.gmra.mxu0 %v976
    %v1649 = vpop.f32.mrf.mxu0
    %v1650 = vadd.f32 0.0, %v1649
    %v1651 = vpop.f32.mrf.mxu0
    %1652 = vdwg.mxu0
    %v1653 = vsub.f32 %v1270, %v1495
    %v1654 = vsub.f32 %v1275, %v1500
    %v1655 = vsub.f32 %v1280, %v1505
    %v1656 = vsub.f32 %v1285, %v1510
    %v1657 = vsub.f32 %v1290, %v1515
    %v1658 = vsub.f32 %v1295, %v1520
    %v1659 = vsub.f32 %v1300, %v1525
    %v1660 = vsub.f32 %v1305, %v1530
    %v1661 = vsub.f32 %v1310, %v1535
    %v1662 = vsub.f32 %v1315, %v1540
    %v1663 = vsub.f32 %v1320, %v1545
    %v1664 = vsub.f32 %v1325, %v1550
    %v1665 = vsub.f32 %v1330, %v1555
    %v1666 = vsub.f32 %v1335, %v1560
    %v1667 = vsub.f32 %v1340, %v1565
    %v1668 = vsub.f32 %v1345, %v1570
    %v1669 = vsub.f32 %v1350, %v1575
    %v1670 = vsub.f32 %v1355, %v1580
    %v1671 = vsub.f32 %v1360, %v1585
    %v1672 = vsub.f32 %v1365, %v1590
    %v1673 = vsub.f32 %v1370, %v1595
    %v1674 = vsub.f32 %v1375, %v1600
    %v1675 = vsub.f32 %v1380, %v1605
    %v1676 = vsub.f32 %v1385, %v1610
    %v1677 = vsub.f32 %v1390, %v1615
    %v1678 = vsub.f32 %v1395, %v1620
    %v1679 = vsub.f32 %v1400, %v1625
    %v1680 = vsub.f32 %v1405, %v1630
    %v1681 = vsub.f32 %v1410, %v1635
    %v1682 = vsub.f32 %v1415, %v1640
    %v1683 = vsub.f32 %v1420, %v1645
    %v1684 = vsub.f32 %v1425, %v1650
    %v1685 = vmul.f32 %v1653, 0.03125
    %v1686 = vmul.f32 %v1654, 0.03125
    %v1687 = vmul.f32 %v1655, 0.03125
    %v1688 = vmul.f32 %v1656, 0.03125
    %v1689 = vmul.f32 %v1657, 0.03125
    %v1690 = vmul.f32 %v1658, 0.03125
    %v1691 = vmul.f32 %v1659, 0.03125
    %v1692 = vmul.f32 %v1660, 0.03125
    %v1693 = vmul.f32 %v1661, 0.03125
    %v1694 = vmul.f32 %v1662, 0.03125
    %v1695 = vmul.f32 %v1663, 0.03125
    %v1696 = vmul.f32 %v1664, 0.03125
    %v1697 = vmul.f32 %v1665, 0.03125
    %v1698 = vmul.f32 %v1666, 0.03125
    %v1699 = vmul.f32 %v1667, 0.03125
    %v1700 = vmul.f32 %v1668, 0.03125
    %v1701 = vmul.f32 %v1669, 0.03125
    %v1702 = vmul.f32 %v1670, 0.03125
    %v1703 = vmul.f32 %v1671, 0.03125
    %v1704 = vmul.f32 %v1672, 0.03125
    %v1705 = vmul.f32 %v1673, 0.03125
    %v1706 = vmul.f32 %v1674, 0.03125
    %v1707 = vmul.f32 %v1675, 0.03125
    %v1708 = vmul.f32 %v1676, 0.03125
    %v1709 = vmul.f32 %v1677, 0.03125
    %v1710 = vmul.f32 %v1678, 0.03125
    %v1711 = vmul.f32 %v1679, 0.03125
    %v1712 = vmul.f32 %v1680, 0.03125
    %v1713 = vmul.f32 %v1681, 0.03125
    %v1714 = vmul.f32 %v1682, 0.03125
    %v1715 = vmul.f32 %v1683, 0.03125
    %v1716 = vmul.f32 %v1684, 0.03125
    %v1717 = vmul.f32 %v1685, %v1685
    %v1718 = vmul.f32 %v1686, %v1686
    %v1719 = vmul.f32 %v1687, %v1687
    %v1720 = vmul.f32 %v1688, %v1688
    %v1721 = vmul.f32 %v1689, %v1689
    %v1722 = vmul.f32 %v1690, %v1690
    %v1723 = vmul.f32 %v1691, %v1691
    %v1724 = vmul.f32 %v1692, %v1692
    %v1725 = vmul.f32 %v1693, %v1693
    %v1726 = vmul.f32 %v1694, %v1694
    %v1727 = vmul.f32 %v1695, %v1695
    %v1728 = vmul.f32 %v1696, %v1696
    %v1729 = vmul.f32 %v1697, %v1697
    %v1730 = vmul.f32 %v1698, %v1698
    %v1731 = vmul.f32 %v1699, %v1699
    %v1732 = vmul.f32 %v1700, %v1700
    %v1733 = vmul.f32 %v1701, %v1701
    %v1734 = vmul.f32 %v1702, %v1702
    %v1735 = vmul.f32 %v1703, %v1703
    %v1736 = vmul.f32 %v1704, %v1704
    %v1737 = vmul.f32 %v1705, %v1705
    %v1738 = vmul.f32 %v1706, %v1706
    %v1739 = vmul.f32 %v1707, %v1707
    %v1740 = vmul.f32 %v1708, %v1708
    %v1741 = vmul.f32 %v1709, %v1709
    %v1742 = vmul.f32 %v1710, %v1710
    %v1743 = vmul.f32 %v1711, %v1711
    %v1744 = vmul.f32 %v1712, %v1712
    %v1745 = vmul.f32 %v1713, %v1713
    %v1746 = vmul.f32 %v1714, %v1714
    %v1747 = vmul.f32 %v1715, %v1715
    %v1748 = vmul.f32 %v1716, %v1716
    %vm1749 = vcmask 15360
    %v1750 = vsel %vm1749, %v1717, 0.0
    %1751 = vadd.xlane.f32.xlu0 %v1750
    %v1752 = vpop.xlane.xlu0 %1751
    %v1753 = vsel %vm1749, %v1718, 0.0
    %1754 = vadd.xlane.f32.xlu0 %v1753
    %v1755 = vpop.xlane.xlu0 %1754
    %v1756 = vsel %vm1749, %v1719, 0.0
    %1757 = vadd.xlane.f32.xlu0 %v1756
    %v1758 = vpop.xlane.xlu0 %1757
    %v1759 = vsel %vm1749, %v1720, 0.0
    %1760 = vadd.xlane.f32.xlu0 %v1759
    %v1761 = vpop.xlane.xlu0 %1760
    %v1762 = vsel %vm1749, %v1721, 0.0
    %1763 = vadd.xlane.f32.xlu0 %v1762
    %v1764 = vpop.xlane.xlu0 %1763
    %v1765 = vsel %vm1749, %v1722, 0.0
    %1766 = vadd.xlane.f32.xlu0 %v1765
    %v1767 = vpop.xlane.xlu0 %1766
    %v1768 = vsel %vm1749, %v1723, 0.0
    %1769 = vadd.xlane.f32.xlu0 %v1768
    %v1770 = vpop.xlane.xlu0 %1769
    %v1771 = vsel %vm1749, %v1724, 0.0
    %1772 = vadd.xlane.f32.xlu0 %v1771
    %v1773 = vpop.xlane.xlu0 %1772
    %v1774 = vsel %vm1749, %v1725, 0.0
    %1775 = vadd.xlane.f32.xlu0 %v1774
    %v1776 = vpop.xlane.xlu0 %1775
    %v1777 = vsel %vm1749, %v1726, 0.0
    %1778 = vadd.xlane.f32.xlu0 %v1777
    %v1779 = vpop.xlane.xlu0 %1778
    %v1780 = vsel %vm1749, %v1727, 0.0
    %1781 = vadd.xlane.f32.xlu0 %v1780
    %v1782 = vpop.xlane.xlu0 %1781
    %v1783 = vsel %vm1749, %v1728, 0.0
    %1784 = vadd.xlane.f32.xlu0 %v1783
    %v1785 = vpop.xlane.xlu0 %1784
    %v1786 = vsel %vm1749, %v1729, 0.0
    %1787 = vadd.xlane.f32.xlu0 %v1786
    %v1788 = vpop.xlane.xlu0 %1787
    %v1789 = vsel %vm1749, %v1730, 0.0
    %1790 = vadd.xlane.f32.xlu0 %v1789
    %v1791 = vpop.xlane.xlu0 %1790
    %v1792 = vsel %vm1749, %v1731, 0.0
    %1793 = vadd.xlane.f32.xlu0 %v1792
    %v1794 = vpop.xlane.xlu0 %1793
    %v1795 = vsel %vm1749, %v1732, 0.0
    %1796 = vadd.xlane.f32.xlu0 %v1795
    %v1797 = vpop.xlane.xlu0 %1796
    %v1798 = vsel %vm1749, %v1733, 0.0
    %1799 = vadd.xlane.f32.xlu0 %v1798
    %v1800 = vpop.xlane.xlu0 %1799
    %v1801 = vsel %vm1749, %v1734, 0.0
    %1802 = vadd.xlane.f32.xlu0 %v1801
    %v1803 = vpop.xlane.xlu0 %1802
    %v1804 = vsel %vm1749, %v1735, 0.0
    %1805 = vadd.xlane.f32.xlu0 %v1804
    %v1806 = vpop.xlane.xlu0 %1805
    %v1807 = vsel %vm1749, %v1736, 0.0
    %1808 = vadd.xlane.f32.xlu0 %v1807
    %v1809 = vpop.xlane.xlu0 %1808
    %v1810 = vsel %vm1749, %v1737, 0.0
    %1811 = vadd.xlane.f32.xlu0 %v1810
    %v1812 = vpop.xlane.xlu0 %1811
    %v1813 = vsel %vm1749, %v1738, 0.0
    %1814 = vadd.xlane.f32.xlu0 %v1813
    %v1815 = vpop.xlane.xlu0 %1814
    %v1816 = vsel %vm1749, %v1739, 0.0
    %1817 = vadd.xlane.f32.xlu0 %v1816
    %v1818 = vpop.xlane.xlu0 %1817
    %v1819 = vsel %vm1749, %v1740, 0.0
    %1820 = vadd.xlane.f32.xlu0 %v1819
    %v1821 = vpop.xlane.xlu0 %1820
    %v1822 = vsel %vm1749, %v1741, 0.0
    %1823 = vadd.xlane.f32.xlu0 %v1822
    %v1824 = vpop.xlane.xlu0 %1823
    %v1825 = vsel %vm1749, %v1742, 0.0
    %1826 = vadd.xlane.f32.xlu0 %v1825
    %v1827 = vpop.xlane.xlu0 %1826
    %v1828 = vsel %vm1749, %v1743, 0.0
    %1829 = vadd.xlane.f32.xlu0 %v1828
    %v1830 = vpop.xlane.xlu0 %1829
    %v1831 = vsel %vm1749, %v1744, 0.0
    %1832 = vadd.xlane.f32.xlu0 %v1831
    %v1833 = vpop.xlane.xlu0 %1832
    %v1834 = vsel %vm1749, %v1745, 0.0
    %1835 = vadd.xlane.f32.xlu0 %v1834
    %v1836 = vpop.xlane.xlu0 %1835
    %v1837 = vsel %vm1749, %v1746, 0.0
    %1838 = vadd.xlane.f32.xlu0 %v1837
    %v1839 = vpop.xlane.xlu0 %1838
    %v1840 = vsel %vm1749, %v1747, 0.0
    %1841 = vadd.xlane.f32.xlu0 %v1840
    %v1842 = vpop.xlane.xlu0 %1841
    %v1843 = vsel %vm1749, %v1748, 0.0
    %1844 = vadd.xlane.f32.xlu0 %v1843
    %v1845 = vpop.xlane.xlu0 %1844
    %v1846 = vmax.f32 %v1752, 0.0
    %v1847 = vmax.f32 %v1755, 0.0
    %v1848 = vmax.f32 %v1758, 0.0
    %v1849 = vmax.f32 %v1761, 0.0
    %v1850 = vmax.f32 %v1764, 0.0
    %v1851 = vmax.f32 %v1767, 0.0
    %v1852 = vmax.f32 %v1770, 0.0
    %v1853 = vmax.f32 %v1773, 0.0
    %v1854 = vmax.f32 %v1776, 0.0
    %v1855 = vmax.f32 %v1779, 0.0
    %v1856 = vmax.f32 %v1782, 0.0
    %v1857 = vmax.f32 %v1785, 0.0
    %v1858 = vmax.f32 %v1788, 0.0
    %v1859 = vmax.f32 %v1791, 0.0
    %v1860 = vmax.f32 %v1794, 0.0
    %v1861 = vmax.f32 %v1797, 0.0
    %v1862 = vmax.f32 %v1800, 0.0
    %v1863 = vmax.f32 %v1803, 0.0
    %v1864 = vmax.f32 %v1806, 0.0
    %v1865 = vmax.f32 %v1809, 0.0
    %v1866 = vmax.f32 %v1812, 0.0
    %v1867 = vmax.f32 %v1815, 0.0
    %v1868 = vmax.f32 %v1818, 0.0
    %v1869 = vmax.f32 %v1821, 0.0
    %v1870 = vmax.f32 %v1824, 0.0
    %v1871 = vmax.f32 %v1827, 0.0
    %v1872 = vmax.f32 %v1830, 0.0
    %v1873 = vmax.f32 %v1833, 0.0
    %v1874 = vmax.f32 %v1836, 0.0
    %v1875 = vmax.f32 %v1839, 0.0
    %v1876 = vmax.f32 %v1842, 0.0
    %v1877 = vmax.f32 %v1845, 0.0
    %v1878 = vrsqrt.pop %v1846
    %v1879 = vmul.f32 %v1846, %v1878
    %vm1880 = vcmp.eq.f32.partialorder %v1846, inf
    %v1881 = vsel %vm1880, %v1846, %v1879
    %vm1882 = vcmp.eq.f32.partialorder %v1846, 0.0
    %v1883 = vand.u32 %v1846, 2147483648
    %v1884 = vsel %vm1882, %v1883, %v1881
    %v1885 = vrsqrt.pop %v1847
    %v1886 = vmul.f32 %v1847, %v1885
    %vm1887 = vcmp.eq.f32.partialorder %v1847, inf
    %v1888 = vsel %vm1887, %v1847, %v1886
    %vm1889 = vcmp.eq.f32.partialorder %v1847, 0.0
    %v1890 = vand.u32 %v1847, 2147483648
    %v1891 = vsel %vm1889, %v1890, %v1888
    %v1892 = vrsqrt.pop %v1848
    %v1893 = vmul.f32 %v1848, %v1892
    %vm1894 = vcmp.eq.f32.partialorder %v1848, inf
    %v1895 = vsel %vm1894, %v1848, %v1893
    %vm1896 = vcmp.eq.f32.partialorder %v1848, 0.0
    %v1897 = vand.u32 %v1848, 2147483648
    %v1898 = vsel %vm1896, %v1897, %v1895
    %v1899 = vrsqrt.pop %v1849
    %v1900 = vmul.f32 %v1849, %v1899
    %vm1901 = vcmp.eq.f32.partialorder %v1849, inf
    %v1902 = vsel %vm1901, %v1849, %v1900
    %vm1903 = vcmp.eq.f32.partialorder %v1849, 0.0
    %v1904 = vand.u32 %v1849, 2147483648
    %v1905 = vsel %vm1903, %v1904, %v1902
    %v1906 = vrsqrt.pop %v1850
    %v1907 = vmul.f32 %v1850, %v1906
    %vm1908 = vcmp.eq.f32.partialorder %v1850, inf
    %v1909 = vsel %vm1908, %v1850, %v1907
    %vm1910 = vcmp.eq.f32.partialorder %v1850, 0.0
    %v1911 = vand.u32 %v1850, 2147483648
    %v1912 = vsel %vm1910, %v1911, %v1909
    %v1913 = vrsqrt.pop %v1851
    %v1914 = vmul.f32 %v1851, %v1913
    %vm1915 = vcmp.eq.f32.partialorder %v1851, inf
    %v1916 = vsel %vm1915, %v1851, %v1914
    %vm1917 = vcmp.eq.f32.partialorder %v1851, 0.0
    %v1918 = vand.u32 %v1851, 2147483648
    %v1919 = vsel %vm1917, %v1918, %v1916
    %v1920 = vrsqrt.pop %v1852
    %v1921 = vmul.f32 %v1852, %v1920
    %vm1922 = vcmp.eq.f32.partialorder %v1852, inf
    %v1923 = vsel %vm1922, %v1852, %v1921
    %vm1924 = vcmp.eq.f32.partialorder %v1852, 0.0
    %v1925 = vand.u32 %v1852, 2147483648
    %v1926 = vsel %vm1924, %v1925, %v1923
    %v1927 = vrsqrt.pop %v1853
    %v1928 = vmul.f32 %v1853, %v1927
    %vm1929 = vcmp.eq.f32.partialorder %v1853, inf
    %v1930 = vsel %vm1929, %v1853, %v1928
    %vm1931 = vcmp.eq.f32.partialorder %v1853, 0.0
    %v1932 = vand.u32 %v1853, 2147483648
    %v1933 = vsel %vm1931, %v1932, %v1930
    %v1934 = vrsqrt.pop %v1854
    %v1935 = vmul.f32 %v1854, %v1934
    %vm1936 = vcmp.eq.f32.partialorder %v1854, inf
    %v1937 = vsel %vm1936, %v1854, %v1935
    %vm1938 = vcmp.eq.f32.partialorder %v1854, 0.0
    %v1939 = vand.u32 %v1854, 2147483648
    %v1940 = vsel %vm1938, %v1939, %v1937
    %v1941 = vrsqrt.pop %v1855
    %v1942 = vmul.f32 %v1855, %v1941
    %vm1943 = vcmp.eq.f32.partialorder %v1855, inf
    %v1944 = vsel %vm1943, %v1855, %v1942
    %vm1945 = vcmp.eq.f32.partialorder %v1855, 0.0
    %v1946 = vand.u32 %v1855, 2147483648
    %v1947 = vsel %vm1945, %v1946, %v1944
    %v1948 = vrsqrt.pop %v1856
    %v1949 = vmul.f32 %v1856, %v1948
    %vm1950 = vcmp.eq.f32.partialorder %v1856, inf
    %v1951 = vsel %vm1950, %v1856, %v1949
    %vm1952 = vcmp.eq.f32.partialorder %v1856, 0.0
    %v1953 = vand.u32 %v1856, 2147483648
    %v1954 = vsel %vm1952, %v1953, %v1951
    %v1955 = vrsqrt.pop %v1857
    %v1956 = vmul.f32 %v1857, %v1955
    %vm1957 = vcmp.eq.f32.partialorder %v1857, inf
    %v1958 = vsel %vm1957, %v1857, %v1956
    %vm1959 = vcmp.eq.f32.partialorder %v1857, 0.0
    %v1960 = vand.u32 %v1857, 2147483648
    %v1961 = vsel %vm1959, %v1960, %v1958
    %v1962 = vrsqrt.pop %v1858
    %v1963 = vmul.f32 %v1858, %v1962
    %vm1964 = vcmp.eq.f32.partialorder %v1858, inf
    %v1965 = vsel %vm1964, %v1858, %v1963
    %vm1966 = vcmp.eq.f32.partialorder %v1858, 0.0
    %v1967 = vand.u32 %v1858, 2147483648
    %v1968 = vsel %vm1966, %v1967, %v1965
    %v1969 = vrsqrt.pop %v1859
    %v1970 = vmul.f32 %v1859, %v1969
    %vm1971 = vcmp.eq.f32.partialorder %v1859, inf
    %v1972 = vsel %vm1971, %v1859, %v1970
    %vm1973 = vcmp.eq.f32.partialorder %v1859, 0.0
    %v1974 = vand.u32 %v1859, 2147483648
    %v1975 = vsel %vm1973, %v1974, %v1972
    %v1976 = vrsqrt.pop %v1860
    %v1977 = vmul.f32 %v1860, %v1976
    %vm1978 = vcmp.eq.f32.partialorder %v1860, inf
    %v1979 = vsel %vm1978, %v1860, %v1977
    %vm1980 = vcmp.eq.f32.partialorder %v1860, 0.0
    %v1981 = vand.u32 %v1860, 2147483648
    %v1982 = vsel %vm1980, %v1981, %v1979
    %v1983 = vrsqrt.pop %v1861
    %v1984 = vmul.f32 %v1861, %v1983
    %vm1985 = vcmp.eq.f32.partialorder %v1861, inf
    %v1986 = vsel %vm1985, %v1861, %v1984
    %vm1987 = vcmp.eq.f32.partialorder %v1861, 0.0
    %v1988 = vand.u32 %v1861, 2147483648
    %v1989 = vsel %vm1987, %v1988, %v1986
    %v1990 = vrsqrt.pop %v1862
    %v1991 = vmul.f32 %v1862, %v1990
    %vm1992 = vcmp.eq.f32.partialorder %v1862, inf
    %v1993 = vsel %vm1992, %v1862, %v1991
    %vm1994 = vcmp.eq.f32.partialorder %v1862, 0.0
    %v1995 = vand.u32 %v1862, 2147483648
    %v1996 = vsel %vm1994, %v1995, %v1993
    %v1997 = vrsqrt.pop %v1863
    %v1998 = vmul.f32 %v1863, %v1997
    %vm1999 = vcmp.eq.f32.partialorder %v1863, inf
    %v2000 = vsel %vm1999, %v1863, %v1998
    %vm2001 = vcmp.eq.f32.partialorder %v1863, 0.0
    %v2002 = vand.u32 %v1863, 2147483648
    %v2003 = vsel %vm2001, %v2002, %v2000
    %v2004 = vrsqrt.pop %v1864
    %v2005 = vmul.f32 %v1864, %v2004
    %vm2006 = vcmp.eq.f32.partialorder %v1864, inf
    %v2007 = vsel %vm2006, %v1864, %v2005
    %vm2008 = vcmp.eq.f32.partialorder %v1864, 0.0
    %v2009 = vand.u32 %v1864, 2147483648
    %v2010 = vsel %vm2008, %v2009, %v2007
    %v2011 = vrsqrt.pop %v1865
    %v2012 = vmul.f32 %v1865, %v2011
    %vm2013 = vcmp.eq.f32.partialorder %v1865, inf
    %v2014 = vsel %vm2013, %v1865, %v2012
    %vm2015 = vcmp.eq.f32.partialorder %v1865, 0.0
    %v2016 = vand.u32 %v1865, 2147483648
    %v2017 = vsel %vm2015, %v2016, %v2014
    %v2018 = vrsqrt.pop %v1866
    %v2019 = vmul.f32 %v1866, %v2018
    %vm2020 = vcmp.eq.f32.partialorder %v1866, inf
    %v2021 = vsel %vm2020, %v1866, %v2019
    %vm2022 = vcmp.eq.f32.partialorder %v1866, 0.0
    %v2023 = vand.u32 %v1866, 2147483648
    %v2024 = vsel %vm2022, %v2023, %v2021
    %v2025 = vrsqrt.pop %v1867
    %v2026 = vmul.f32 %v1867, %v2025
    %vm2027 = vcmp.eq.f32.partialorder %v1867, inf
    %v2028 = vsel %vm2027, %v1867, %v2026
    %vm2029 = vcmp.eq.f32.partialorder %v1867, 0.0
    %v2030 = vand.u32 %v1867, 2147483648
    %v2031 = vsel %vm2029, %v2030, %v2028
    %v2032 = vrsqrt.pop %v1868
    %v2033 = vmul.f32 %v1868, %v2032
    %vm2034 = vcmp.eq.f32.partialorder %v1868, inf
    %v2035 = vsel %vm2034, %v1868, %v2033
    %vm2036 = vcmp.eq.f32.partialorder %v1868, 0.0
    %v2037 = vand.u32 %v1868, 2147483648
    %v2038 = vsel %vm2036, %v2037, %v2035
    %v2039 = vrsqrt.pop %v1869
    %v2040 = vmul.f32 %v1869, %v2039
    %vm2041 = vcmp.eq.f32.partialorder %v1869, inf
    %v2042 = vsel %vm2041, %v1869, %v2040
    %vm2043 = vcmp.eq.f32.partialorder %v1869, 0.0
    %v2044 = vand.u32 %v1869, 2147483648
    %v2045 = vsel %vm2043, %v2044, %v2042
    %v2046 = vrsqrt.pop %v1870
    %v2047 = vmul.f32 %v1870, %v2046
    %vm2048 = vcmp.eq.f32.partialorder %v1870, inf
    %v2049 = vsel %vm2048, %v1870, %v2047
    %vm2050 = vcmp.eq.f32.partialorder %v1870, 0.0
    %v2051 = vand.u32 %v1870, 2147483648
    %v2052 = vsel %vm2050, %v2051, %v2049
    %v2053 = vrsqrt.pop %v1871
    %v2054 = vmul.f32 %v1871, %v2053
    %vm2055 = vcmp.eq.f32.partialorder %v1871, inf
    %v2056 = vsel %vm2055, %v1871, %v2054
    %vm2057 = vcmp.eq.f32.partialorder %v1871, 0.0
    %v2058 = vand.u32 %v1871, 2147483648
    %v2059 = vsel %vm2057, %v2058, %v2056
    %v2060 = vrsqrt.pop %v1872
    %v2061 = vmul.f32 %v1872, %v2060
    %vm2062 = vcmp.eq.f32.partialorder %v1872, inf
    %v2063 = vsel %vm2062, %v1872, %v2061
    %vm2064 = vcmp.eq.f32.partialorder %v1872, 0.0
    %v2065 = vand.u32 %v1872, 2147483648
    %v2066 = vsel %vm2064, %v2065, %v2063
    %v2067 = vrsqrt.pop %v1873
    %v2068 = vmul.f32 %v1873, %v2067
    %vm2069 = vcmp.eq.f32.partialorder %v1873, inf
    %v2070 = vsel %vm2069, %v1873, %v2068
    %vm2071 = vcmp.eq.f32.partialorder %v1873, 0.0
    %v2072 = vand.u32 %v1873, 2147483648
    %v2073 = vsel %vm2071, %v2072, %v2070
    %v2074 = vrsqrt.pop %v1874
    %v2075 = vmul.f32 %v1874, %v2074
    %vm2076 = vcmp.eq.f32.partialorder %v1874, inf
    %v2077 = vsel %vm2076, %v1874, %v2075
    %vm2078 = vcmp.eq.f32.partialorder %v1874, 0.0
    %v2079 = vand.u32 %v1874, 2147483648
    %v2080 = vsel %vm2078, %v2079, %v2077
    %v2081 = vrsqrt.pop %v1875
    %v2082 = vmul.f32 %v1875, %v2081
    %vm2083 = vcmp.eq.f32.partialorder %v1875, inf
    %v2084 = vsel %vm2083, %v1875, %v2082
    %vm2085 = vcmp.eq.f32.partialorder %v1875, 0.0
    %v2086 = vand.u32 %v1875, 2147483648
    %v2087 = vsel %vm2085, %v2086, %v2084
    %v2088 = vrsqrt.pop %v1876
    %v2089 = vmul.f32 %v1876, %v2088
    %vm2090 = vcmp.eq.f32.partialorder %v1876, inf
    %v2091 = vsel %vm2090, %v1876, %v2089
    %vm2092 = vcmp.eq.f32.partialorder %v1876, 0.0
    %v2093 = vand.u32 %v1876, 2147483648
    %v2094 = vsel %vm2092, %v2093, %v2091
    %v2095 = vrsqrt.pop %v1877
    %v2096 = vmul.f32 %v1877, %v2095
    %vm2097 = vcmp.eq.f32.partialorder %v1877, inf
    %v2098 = vsel %vm2097, %v1877, %v2096
    %vm2099 = vcmp.eq.f32.partialorder %v1877, 0.0
    %v2100 = vand.u32 %v1877, 2147483648
    %v2101 = vsel %vm2099, %v2100, %v2098
    %v2102 = vsub.f32 %v724, %v1045
    %v2103 = vsub.f32 %v729, %v1050
    %v2104 = vsub.f32 %v734, %v1055
    %v2105 = vsub.f32 %v739, %v1060
    %v2106 = vsub.f32 %v744, %v1065
    %v2107 = vsub.f32 %v749, %v1070
    %v2108 = vsub.f32 %v754, %v1075
    %v2109 = vsub.f32 %v759, %v1080
    %v2110 = vsub.f32 %v764, %v1085
    %v2111 = vsub.f32 %v769, %v1090
    %v2112 = vsub.f32 %v774, %v1095
    %v2113 = vsub.f32 %v779, %v1100
    %v2114 = vsub.f32 %v784, %v1105
    %v2115 = vsub.f32 %v789, %v1110
    %v2116 = vsub.f32 %v794, %v1115
    %v2117 = vsub.f32 %v799, %v1120
    %v2118 = vsub.f32 %v804, %v1125
    %v2119 = vsub.f32 %v809, %v1130
    %v2120 = vsub.f32 %v814, %v1135
    %v2121 = vsub.f32 %v819, %v1140
    %v2122 = vsub.f32 %v824, %v1145
    %v2123 = vsub.f32 %v829, %v1150
    %v2124 = vsub.f32 %v834, %v1155
    %v2125 = vsub.f32 %v839, %v1160
    %v2126 = vsub.f32 %v844, %v1165
    %v2127 = vsub.f32 %v849, %v1170
    %v2128 = vsub.f32 %v854, %v1175
    %v2129 = vsub.f32 %v859, %v1180
    %v2130 = vsub.f32 %v864, %v1185
    %v2131 = vsub.f32 %v869, %v1190
    %v2132 = vsub.f32 %v874, %v1195
    %v2133 = vsub.f32 %v879, %v1200
    %v2134 = vmul.f32 %v2102, 0.003921569
    %v2135 = vmul.f32 %v2103, 0.003921569
    %v2136 = vmul.f32 %v2104, 0.003921569
    %v2137 = vmul.f32 %v2105, 0.003921569
    %v2138 = vmul.f32 %v2106, 0.003921569
    %v2139 = vmul.f32 %v2107, 0.003921569
    %v2140 = vmul.f32 %v2108, 0.003921569
    %v2141 = vmul.f32 %v2109, 0.003921569
    %v2142 = vmul.f32 %v2110, 0.003921569
    %v2143 = vmul.f32 %v2111, 0.003921569
    %v2144 = vmul.f32 %v2112, 0.003921569
    %v2145 = vmul.f32 %v2113, 0.003921569
    %v2146 = vmul.f32 %v2114, 0.003921569
    %v2147 = vmul.f32 %v2115, 0.003921569
    %v2148 = vmul.f32 %v2116, 0.003921569
    %v2149 = vmul.f32 %v2117, 0.003921569
    %v2150 = vmul.f32 %v2118, 0.003921569
    %v2151 = vmul.f32 %v2119, 0.003921569
    %v2152 = vmul.f32 %v2120, 0.003921569
    %v2153 = vmul.f32 %v2121, 0.003921569
    %v2154 = vmul.f32 %v2122, 0.003921569
    %v2155 = vmul.f32 %v2123, 0.003921569
    %v2156 = vmul.f32 %v2124, 0.003921569
    %v2157 = vmul.f32 %v2125, 0.003921569
    %v2158 = vmul.f32 %v2126, 0.003921569
    %v2159 = vmul.f32 %v2127, 0.003921569
    %v2160 = vmul.f32 %v2128, 0.003921569
    %v2161 = vmul.f32 %v2129, 0.003921569
    %v2162 = vmul.f32 %v2130, 0.003921569
    %v2163 = vmul.f32 %v2131, 0.003921569
    %v2164 = vmul.f32 %v2132, 0.003921569
    %v2165 = vmul.f32 %v2133, 0.003921569
    %v2166 = vmul.f32 %v2134, %v2134
    %v2167 = vmul.f32 %v2135, %v2135
    %v2168 = vmul.f32 %v2136, %v2136
    %v2169 = vmul.f32 %v2137, %v2137
    %v2170 = vmul.f32 %v2138, %v2138
    %v2171 = vmul.f32 %v2139, %v2139
    %v2172 = vmul.f32 %v2140, %v2140
    %v2173 = vmul.f32 %v2141, %v2141
    %v2174 = vmul.f32 %v2142, %v2142
    %v2175 = vmul.f32 %v2143, %v2143
    %v2176 = vmul.f32 %v2144, %v2144
    %v2177 = vmul.f32 %v2145, %v2145
    %v2178 = vmul.f32 %v2146, %v2146
    %v2179 = vmul.f32 %v2147, %v2147
    %v2180 = vmul.f32 %v2148, %v2148
    %v2181 = vmul.f32 %v2149, %v2149
    %v2182 = vmul.f32 %v2150, %v2150
    %v2183 = vmul.f32 %v2151, %v2151
    %v2184 = vmul.f32 %v2152, %v2152
    %v2185 = vmul.f32 %v2153, %v2153
    %v2186 = vmul.f32 %v2154, %v2154
    %v2187 = vmul.f32 %v2155, %v2155
    %v2188 = vmul.f32 %v2156, %v2156
    %v2189 = vmul.f32 %v2157, %v2157
    %v2190 = vmul.f32 %v2158, %v2158
    %v2191 = vmul.f32 %v2159, %v2159
    %v2192 = vmul.f32 %v2160, %v2160
    %v2193 = vmul.f32 %v2161, %v2161
    %v2194 = vmul.f32 %v2162, %v2162
    %v2195 = vmul.f32 %v2163, %v2163
    %v2196 = vmul.f32 %v2164, %v2164
    %v2197 = vmul.f32 %v2165, %v2165
    %vm2198 = vcmask 23552
    %v2199 = vsel %vm2198, %v2166, 0.0
    %2200 = vadd.xlane.f32.xlu0 %v2199
    %v2201 = vpop.xlane.xlu0 %2200
    %v2202 = vsel %vm2198, %v2167, 0.0
    %2203 = vadd.xlane.f32.xlu0 %v2202
    %v2204 = vpop.xlane.xlu0 %2203
    %v2205 = vsel %vm2198, %v2168, 0.0
    %2206 = vadd.xlane.f32.xlu0 %v2205
    %v2207 = vpop.xlane.xlu0 %2206
    %v2208 = vsel %vm2198, %v2169, 0.0
    %2209 = vadd.xlane.f32.xlu0 %v2208
    %v2210 = vpop.xlane.xlu0 %2209
    %v2211 = vsel %vm2198, %v2170, 0.0
    %2212 = vadd.xlane.f32.xlu0 %v2211
    %v2213 = vpop.xlane.xlu0 %2212
    %v2214 = vsel %vm2198, %v2171, 0.0
    %2215 = vadd.xlane.f32.xlu0 %v2214
    %v2216 = vpop.xlane.xlu0 %2215
    %v2217 = vsel %vm2198, %v2172, 0.0
    %2218 = vadd.xlane.f32.xlu0 %v2217
    %v2219 = vpop.xlane.xlu0 %2218
    %v2220 = vsel %vm2198, %v2173, 0.0
    %2221 = vadd.xlane.f32.xlu0 %v2220
    %v2222 = vpop.xlane.xlu0 %2221
    %v2223 = vsel %vm2198, %v2174, 0.0
    %2224 = vadd.xlane.f32.xlu0 %v2223
    %v2225 = vpop.xlane.xlu0 %2224
    %v2226 = vsel %vm2198, %v2175, 0.0
    %2227 = vadd.xlane.f32.xlu0 %v2226
    %v2228 = vpop.xlane.xlu0 %2227
    %v2229 = vsel %vm2198, %v2176, 0.0
    %2230 = vadd.xlane.f32.xlu0 %v2229
    %v2231 = vpop.xlane.xlu0 %2230
    %v2232 = vsel %vm2198, %v2177, 0.0
    %2233 = vadd.xlane.f32.xlu0 %v2232
    %v2234 = vpop.xlane.xlu0 %2233
    %v2235 = vsel %vm2198, %v2178, 0.0
    %2236 = vadd.xlane.f32.xlu0 %v2235
    %v2237 = vpop.xlane.xlu0 %2236
    %v2238 = vsel %vm2198, %v2179, 0.0
    %2239 = vadd.xlane.f32.xlu0 %v2238
    %v2240 = vpop.xlane.xlu0 %2239
    %v2241 = vsel %vm2198, %v2180, 0.0
    %2242 = vadd.xlane.f32.xlu0 %v2241
    %v2243 = vpop.xlane.xlu0 %2242
    %v2244 = vsel %vm2198, %v2181, 0.0
    %2245 = vadd.xlane.f32.xlu0 %v2244
    %v2246 = vpop.xlane.xlu0 %2245
    %v2247 = vsel %vm2198, %v2182, 0.0
    %2248 = vadd.xlane.f32.xlu0 %v2247
    %v2249 = vpop.xlane.xlu0 %2248
    %v2250 = vsel %vm2198, %v2183, 0.0
    %2251 = vadd.xlane.f32.xlu0 %v2250
    %v2252 = vpop.xlane.xlu0 %2251
    %v2253 = vsel %vm2198, %v2184, 0.0
    %2254 = vadd.xlane.f32.xlu0 %v2253
    %v2255 = vpop.xlane.xlu0 %2254
    %v2256 = vsel %vm2198, %v2185, 0.0
    %2257 = vadd.xlane.f32.xlu0 %v2256
    %v2258 = vpop.xlane.xlu0 %2257
    %v2259 = vsel %vm2198, %v2186, 0.0
    %2260 = vadd.xlane.f32.xlu0 %v2259
    %v2261 = vpop.xlane.xlu0 %2260
    %v2262 = vsel %vm2198, %v2187, 0.0
    %2263 = vadd.xlane.f32.xlu0 %v2262
    %v2264 = vpop.xlane.xlu0 %2263
    %v2265 = vsel %vm2198, %v2188, 0.0
    %2266 = vadd.xlane.f32.xlu0 %v2265
    %v2267 = vpop.xlane.xlu0 %2266
    %v2268 = vsel %vm2198, %v2189, 0.0
    %2269 = vadd.xlane.f32.xlu0 %v2268
    %v2270 = vpop.xlane.xlu0 %2269
    %v2271 = vsel %vm2198, %v2190, 0.0
    %2272 = vadd.xlane.f32.xlu0 %v2271
    %v2273 = vpop.xlane.xlu0 %2272
    %v2274 = vsel %vm2198, %v2191, 0.0
    %2275 = vadd.xlane.f32.xlu0 %v2274
    %v2276 = vpop.xlane.xlu0 %2275
    %v2277 = vsel %vm2198, %v2192, 0.0
    %2278 = vadd.xlane.f32.xlu0 %v2277
    %v2279 = vpop.xlane.xlu0 %2278
    %v2280 = vsel %vm2198, %v2193, 0.0
    %2281 = vadd.xlane.f32.xlu0 %v2280
    %v2282 = vpop.xlane.xlu0 %2281
    %v2283 = vsel %vm2198, %v2194, 0.0
    %2284 = vadd.xlane.f32.xlu0 %v2283
    %v2285 = vpop.xlane.xlu0 %2284
    %v2286 = vsel %vm2198, %v2195, 0.0
    %2287 = vadd.xlane.f32.xlu0 %v2286
    %v2288 = vpop.xlane.xlu0 %2287
    %v2289 = vsel %vm2198, %v2196, 0.0
    %2290 = vadd.xlane.f32.xlu0 %v2289
    %v2291 = vpop.xlane.xlu0 %2290
    %v2292 = vsel %vm2198, %v2197, 0.0
    %2293 = vadd.xlane.f32.xlu0 %v2292
    %v2294 = vpop.xlane.xlu0 %2293
    %v2295 = vmax.f32 %v2201, 0.0
    %v2296 = vmax.f32 %v2204, 0.0
    %v2297 = vmax.f32 %v2207, 0.0
    %v2298 = vmax.f32 %v2210, 0.0
    %v2299 = vmax.f32 %v2213, 0.0
    %v2300 = vmax.f32 %v2216, 0.0
    %v2301 = vmax.f32 %v2219, 0.0
    %v2302 = vmax.f32 %v2222, 0.0
    %v2303 = vmax.f32 %v2225, 0.0
    %v2304 = vmax.f32 %v2228, 0.0
    %v2305 = vmax.f32 %v2231, 0.0
    %v2306 = vmax.f32 %v2234, 0.0
    %v2307 = vmax.f32 %v2237, 0.0
    %v2308 = vmax.f32 %v2240, 0.0
    %v2309 = vmax.f32 %v2243, 0.0
    %v2310 = vmax.f32 %v2246, 0.0
    %v2311 = vmax.f32 %v2249, 0.0
    %v2312 = vmax.f32 %v2252, 0.0
    %v2313 = vmax.f32 %v2255, 0.0
    %v2314 = vmax.f32 %v2258, 0.0
    %v2315 = vmax.f32 %v2261, 0.0
    %v2316 = vmax.f32 %v2264, 0.0
    %v2317 = vmax.f32 %v2267, 0.0
    %v2318 = vmax.f32 %v2270, 0.0
    %v2319 = vmax.f32 %v2273, 0.0
    %v2320 = vmax.f32 %v2276, 0.0
    %v2321 = vmax.f32 %v2279, 0.0
    %v2322 = vmax.f32 %v2282, 0.0
    %v2323 = vmax.f32 %v2285, 0.0
    %v2324 = vmax.f32 %v2288, 0.0
    %v2325 = vmax.f32 %v2291, 0.0
    %v2326 = vmax.f32 %v2294, 0.0
    %v2327 = vrsqrt.pop %v2295
    %v2328 = vmul.f32 %v2295, %v2327
    %vm2329 = vcmp.eq.f32.partialorder %v2295, inf
    %v2330 = vsel %vm2329, %v2295, %v2328
    %vm2331 = vcmp.eq.f32.partialorder %v2295, 0.0
    %v2332 = vand.u32 %v2295, 2147483648
    %v2333 = vsel %vm2331, %v2332, %v2330
    %v2334 = vrsqrt.pop %v2296
    %v2335 = vmul.f32 %v2296, %v2334
    %vm2336 = vcmp.eq.f32.partialorder %v2296, inf
    %v2337 = vsel %vm2336, %v2296, %v2335
    %vm2338 = vcmp.eq.f32.partialorder %v2296, 0.0
    %v2339 = vand.u32 %v2296, 2147483648
    %v2340 = vsel %vm2338, %v2339, %v2337
    %v2341 = vrsqrt.pop %v2297
    %v2342 = vmul.f32 %v2297, %v2341
    %vm2343 = vcmp.eq.f32.partialorder %v2297, inf
    %v2344 = vsel %vm2343, %v2297, %v2342
    %vm2345 = vcmp.eq.f32.partialorder %v2297, 0.0
    %v2346 = vand.u32 %v2297, 2147483648
    %v2347 = vsel %vm2345, %v2346, %v2344
    %v2348 = vrsqrt.pop %v2298
    %v2349 = vmul.f32 %v2298, %v2348
    %vm2350 = vcmp.eq.f32.partialorder %v2298, inf
    %v2351 = vsel %vm2350, %v2298, %v2349
    %vm2352 = vcmp.eq.f32.partialorder %v2298, 0.0
    %v2353 = vand.u32 %v2298, 2147483648
    %v2354 = vsel %vm2352, %v2353, %v2351
    %v2355 = vrsqrt.pop %v2299
    %v2356 = vmul.f32 %v2299, %v2355
    %vm2357 = vcmp.eq.f32.partialorder %v2299, inf
    %v2358 = vsel %vm2357, %v2299, %v2356
    %vm2359 = vcmp.eq.f32.partialorder %v2299, 0.0
    %v2360 = vand.u32 %v2299, 2147483648
    %v2361 = vsel %vm2359, %v2360, %v2358
    %v2362 = vrsqrt.pop %v2300
    %v2363 = vmul.f32 %v2300, %v2362
    %vm2364 = vcmp.eq.f32.partialorder %v2300, inf
    %v2365 = vsel %vm2364, %v2300, %v2363
    %vm2366 = vcmp.eq.f32.partialorder %v2300, 0.0
    %v2367 = vand.u32 %v2300, 2147483648
    %v2368 = vsel %vm2366, %v2367, %v2365
    %v2369 = vrsqrt.pop %v2301
    %v2370 = vmul.f32 %v2301, %v2369
    %vm2371 = vcmp.eq.f32.partialorder %v2301, inf
    %v2372 = vsel %vm2371, %v2301, %v2370
    %vm2373 = vcmp.eq.f32.partialorder %v2301, 0.0
    %v2374 = vand.u32 %v2301, 2147483648
    %v2375 = vsel %vm2373, %v2374, %v2372
    %v2376 = vrsqrt.pop %v2302
    %v2377 = vmul.f32 %v2302, %v2376
    %vm2378 = vcmp.eq.f32.partialorder %v2302, inf
    %v2379 = vsel %vm2378, %v2302, %v2377
    %vm2380 = vcmp.eq.f32.partialorder %v2302, 0.0
    %v2381 = vand.u32 %v2302, 2147483648
    %v2382 = vsel %vm2380, %v2381, %v2379
    %v2383 = vrsqrt.pop %v2303
    %v2384 = vmul.f32 %v2303, %v2383
    %vm2385 = vcmp.eq.f32.partialorder %v2303, inf
    %v2386 = vsel %vm2385, %v2303, %v2384
    %vm2387 = vcmp.eq.f32.partialorder %v2303, 0.0
    %v2388 = vand.u32 %v2303, 2147483648
    %v2389 = vsel %vm2387, %v2388, %v2386
    %v2390 = vrsqrt.pop %v2304
    %v2391 = vmul.f32 %v2304, %v2390
    %vm2392 = vcmp.eq.f32.partialorder %v2304, inf
    %v2393 = vsel %vm2392, %v2304, %v2391
    %vm2394 = vcmp.eq.f32.partialorder %v2304, 0.0
    %v2395 = vand.u32 %v2304, 2147483648
    %v2396 = vsel %vm2394, %v2395, %v2393
    %v2397 = vrsqrt.pop %v2305
    %v2398 = vmul.f32 %v2305, %v2397
    %vm2399 = vcmp.eq.f32.partialorder %v2305, inf
    %v2400 = vsel %vm2399, %v2305, %v2398
    %vm2401 = vcmp.eq.f32.partialorder %v2305, 0.0
    %v2402 = vand.u32 %v2305, 2147483648
    %v2403 = vsel %vm2401, %v2402, %v2400
    %v2404 = vrsqrt.pop %v2306
    %v2405 = vmul.f32 %v2306, %v2404
    %vm2406 = vcmp.eq.f32.partialorder %v2306, inf
    %v2407 = vsel %vm2406, %v2306, %v2405
    %vm2408 = vcmp.eq.f32.partialorder %v2306, 0.0
    %v2409 = vand.u32 %v2306, 2147483648
    %v2410 = vsel %vm2408, %v2409, %v2407
    %v2411 = vrsqrt.pop %v2307
    %v2412 = vmul.f32 %v2307, %v2411
    %vm2413 = vcmp.eq.f32.partialorder %v2307, inf
    %v2414 = vsel %vm2413, %v2307, %v2412
    %vm2415 = vcmp.eq.f32.partialorder %v2307, 0.0
    %v2416 = vand.u32 %v2307, 2147483648
    %v2417 = vsel %vm2415, %v2416, %v2414
    %v2418 = vrsqrt.pop %v2308
    %v2419 = vmul.f32 %v2308, %v2418
    %vm2420 = vcmp.eq.f32.partialorder %v2308, inf
    %v2421 = vsel %vm2420, %v2308, %v2419
    %vm2422 = vcmp.eq.f32.partialorder %v2308, 0.0
    %v2423 = vand.u32 %v2308, 2147483648
    %v2424 = vsel %vm2422, %v2423, %v2421
    %v2425 = vrsqrt.pop %v2309
    %v2426 = vmul.f32 %v2309, %v2425
    %vm2427 = vcmp.eq.f32.partialorder %v2309, inf
    %v2428 = vsel %vm2427, %v2309, %v2426
    %vm2429 = vcmp.eq.f32.partialorder %v2309, 0.0
    %v2430 = vand.u32 %v2309, 2147483648
    %v2431 = vsel %vm2429, %v2430, %v2428
    %v2432 = vrsqrt.pop %v2310
    %v2433 = vmul.f32 %v2310, %v2432
    %vm2434 = vcmp.eq.f32.partialorder %v2310, inf
    %v2435 = vsel %vm2434, %v2310, %v2433
    %vm2436 = vcmp.eq.f32.partialorder %v2310, 0.0
    %v2437 = vand.u32 %v2310, 2147483648
    %v2438 = vsel %vm2436, %v2437, %v2435
    %v2439 = vrsqrt.pop %v2311
    %v2440 = vmul.f32 %v2311, %v2439
    %vm2441 = vcmp.eq.f32.partialorder %v2311, inf
    %v2442 = vsel %vm2441, %v2311, %v2440
    %vm2443 = vcmp.eq.f32.partialorder %v2311, 0.0
    %v2444 = vand.u32 %v2311, 2147483648
    %v2445 = vsel %vm2443, %v2444, %v2442
    %v2446 = vrsqrt.pop %v2312
    %v2447 = vmul.f32 %v2312, %v2446
    %vm2448 = vcmp.eq.f32.partialorder %v2312, inf
    %v2449 = vsel %vm2448, %v2312, %v2447
    %vm2450 = vcmp.eq.f32.partialorder %v2312, 0.0
    %v2451 = vand.u32 %v2312, 2147483648
    %v2452 = vsel %vm2450, %v2451, %v2449
    %v2453 = vrsqrt.pop %v2313
    %v2454 = vmul.f32 %v2313, %v2453
    %vm2455 = vcmp.eq.f32.partialorder %v2313, inf
    %v2456 = vsel %vm2455, %v2313, %v2454
    %vm2457 = vcmp.eq.f32.partialorder %v2313, 0.0
    %v2458 = vand.u32 %v2313, 2147483648
    %v2459 = vsel %vm2457, %v2458, %v2456
    %v2460 = vrsqrt.pop %v2314
    %v2461 = vmul.f32 %v2314, %v2460
    %vm2462 = vcmp.eq.f32.partialorder %v2314, inf
    %v2463 = vsel %vm2462, %v2314, %v2461
    %vm2464 = vcmp.eq.f32.partialorder %v2314, 0.0
    %v2465 = vand.u32 %v2314, 2147483648
    %v2466 = vsel %vm2464, %v2465, %v2463
    %v2467 = vrsqrt.pop %v2315
    %v2468 = vmul.f32 %v2315, %v2467
    %vm2469 = vcmp.eq.f32.partialorder %v2315, inf
    %v2470 = vsel %vm2469, %v2315, %v2468
    %vm2471 = vcmp.eq.f32.partialorder %v2315, 0.0
    %v2472 = vand.u32 %v2315, 2147483648
    %v2473 = vsel %vm2471, %v2472, %v2470
    %v2474 = vrsqrt.pop %v2316
    %v2475 = vmul.f32 %v2316, %v2474
    %vm2476 = vcmp.eq.f32.partialorder %v2316, inf
    %v2477 = vsel %vm2476, %v2316, %v2475
    %vm2478 = vcmp.eq.f32.partialorder %v2316, 0.0
    %v2479 = vand.u32 %v2316, 2147483648
    %v2480 = vsel %vm2478, %v2479, %v2477
    %v2481 = vrsqrt.pop %v2317
    %v2482 = vmul.f32 %v2317, %v2481
    %vm2483 = vcmp.eq.f32.partialorder %v2317, inf
    %v2484 = vsel %vm2483, %v2317, %v2482
    %vm2485 = vcmp.eq.f32.partialorder %v2317, 0.0
    %v2486 = vand.u32 %v2317, 2147483648
    %v2487 = vsel %vm2485, %v2486, %v2484
    %v2488 = vrsqrt.pop %v2318
    %v2489 = vmul.f32 %v2318, %v2488
    %vm2490 = vcmp.eq.f32.partialorder %v2318, inf
    %v2491 = vsel %vm2490, %v2318, %v2489
    %vm2492 = vcmp.eq.f32.partialorder %v2318, 0.0
    %v2493 = vand.u32 %v2318, 2147483648
    %v2494 = vsel %vm2492, %v2493, %v2491
    %v2495 = vrsqrt.pop %v2319
    %v2496 = vmul.f32 %v2319, %v2495
    %vm2497 = vcmp.eq.f32.partialorder %v2319, inf
    %v2498 = vsel %vm2497, %v2319, %v2496
    %vm2499 = vcmp.eq.f32.partialorder %v2319, 0.0
    %v2500 = vand.u32 %v2319, 2147483648
    %v2501 = vsel %vm2499, %v2500, %v2498
    %v2502 = vrsqrt.pop %v2320
    %v2503 = vmul.f32 %v2320, %v2502
    %vm2504 = vcmp.eq.f32.partialorder %v2320, inf
    %v2505 = vsel %vm2504, %v2320, %v2503
    %vm2506 = vcmp.eq.f32.partialorder %v2320, 0.0
    %v2507 = vand.u32 %v2320, 2147483648
    %v2508 = vsel %vm2506, %v2507, %v2505
    %v2509 = vrsqrt.pop %v2321
    %v2510 = vmul.f32 %v2321, %v2509
    %vm2511 = vcmp.eq.f32.partialorder %v2321, inf
    %v2512 = vsel %vm2511, %v2321, %v2510
    %vm2513 = vcmp.eq.f32.partialorder %v2321, 0.0
    %v2514 = vand.u32 %v2321, 2147483648
    %v2515 = vsel %vm2513, %v2514, %v2512
    %v2516 = vrsqrt.pop %v2322
    %v2517 = vmul.f32 %v2322, %v2516
    %vm2518 = vcmp.eq.f32.partialorder %v2322, inf
    %v2519 = vsel %vm2518, %v2322, %v2517
    %vm2520 = vcmp.eq.f32.partialorder %v2322, 0.0
    %v2521 = vand.u32 %v2322, 2147483648
    %v2522 = vsel %vm2520, %v2521, %v2519
    %v2523 = vrsqrt.pop %v2323
    %v2524 = vmul.f32 %v2323, %v2523
    %vm2525 = vcmp.eq.f32.partialorder %v2323, inf
    %v2526 = vsel %vm2525, %v2323, %v2524
    %vm2527 = vcmp.eq.f32.partialorder %v2323, 0.0
    %v2528 = vand.u32 %v2323, 2147483648
    %v2529 = vsel %vm2527, %v2528, %v2526
    %v2530 = vrsqrt.pop %v2324
    %v2531 = vmul.f32 %v2324, %v2530
    %vm2532 = vcmp.eq.f32.partialorder %v2324, inf
    %v2533 = vsel %vm2532, %v2324, %v2531
    %vm2534 = vcmp.eq.f32.partialorder %v2324, 0.0
    %v2535 = vand.u32 %v2324, 2147483648
    %v2536 = vsel %vm2534, %v2535, %v2533
    %v2537 = vrsqrt.pop %v2325
    %v2538 = vmul.f32 %v2325, %v2537
    %vm2539 = vcmp.eq.f32.partialorder %v2325, inf
    %v2540 = vsel %vm2539, %v2325, %v2538
    %vm2541 = vcmp.eq.f32.partialorder %v2325, 0.0
    %v2542 = vand.u32 %v2325, 2147483648
    %v2543 = vsel %vm2541, %v2542, %v2540
    %v2544 = vrsqrt.pop %v2326
    %v2545 = vmul.f32 %v2326, %v2544
    %vm2546 = vcmp.eq.f32.partialorder %v2326, inf
    %v2547 = vsel %vm2546, %v2326, %v2545
    %vm2548 = vcmp.eq.f32.partialorder %v2326, 0.0
    %v2549 = vand.u32 %v2326, 2147483648
    %v2550 = vsel %vm2548, %v2549, %v2547
    %v2551 = vsub.f32 0.0, %v1884
    %v2552 = vsub.f32 0.0, %v1891
    %v2553 = vsub.f32 0.0, %v1898
    %v2554 = vsub.f32 0.0, %v1905
    %v2555 = vsub.f32 0.0, %v1912
    %v2556 = vsub.f32 0.0, %v1919
    %v2557 = vsub.f32 0.0, %v1926
    %v2558 = vsub.f32 0.0, %v1933
    %v2559 = vsub.f32 0.0, %v1940
    %v2560 = vsub.f32 0.0, %v1947
    %v2561 = vsub.f32 0.0, %v1954
    %v2562 = vsub.f32 0.0, %v1961
    %v2563 = vsub.f32 0.0, %v1968
    %v2564 = vsub.f32 0.0, %v1975
    %v2565 = vsub.f32 0.0, %v1982
    %v2566 = vsub.f32 0.0, %v1989
    %v2567 = vsub.f32 0.0, %v1996
    %v2568 = vsub.f32 0.0, %v2003
    %v2569 = vsub.f32 0.0, %v2010
    %v2570 = vsub.f32 0.0, %v2017
    %v2571 = vsub.f32 0.0, %v2024
    %v2572 = vsub.f32 0.0, %v2031
    %v2573 = vsub.f32 0.0, %v2038
    %v2574 = vsub.f32 0.0, %v2045
    %v2575 = vsub.f32 0.0, %v2052
    %v2576 = vsub.f32 0.0, %v2059
    %v2577 = vsub.f32 0.0, %v2066
    %v2578 = vsub.f32 0.0, %v2073
    %v2579 = vsub.f32 0.0, %v2080
    %v2580 = vsub.f32 0.0, %v2087
    %v2581 = vsub.f32 0.0, %v2094
    %v2582 = vsub.f32 0.0, %v2101
    %v2583 = vrcp.pop 0.024674011
    %v2584 = vmul.f32 %v2551, %v2583
    %v2585 = vmul.f32 %v2552, %v2583
    %v2586 = vmul.f32 %v2553, %v2583
    %v2587 = vmul.f32 %v2554, %v2583
    %v2588 = vmul.f32 %v2555, %v2583
    %v2589 = vmul.f32 %v2556, %v2583
    %v2590 = vmul.f32 %v2557, %v2583
    %v2591 = vmul.f32 %v2558, %v2583
    %v2592 = vmul.f32 %v2559, %v2583
    %v2593 = vmul.f32 %v2560, %v2583
    %v2594 = vmul.f32 %v2561, %v2583
    %v2595 = vmul.f32 %v2562, %v2583
    %v2596 = vmul.f32 %v2563, %v2583
    %v2597 = vmul.f32 %v2564, %v2583
    %v2598 = vmul.f32 %v2565, %v2583
    %v2599 = vmul.f32 %v2566, %v2583
    %v2600 = vmul.f32 %v2567, %v2583
    %v2601 = vmul.f32 %v2568, %v2583
    %v2602 = vmul.f32 %v2569, %v2583
    %v2603 = vmul.f32 %v2570, %v2583
    %v2604 = vmul.f32 %v2571, %v2583
    %v2605 = vmul.f32 %v2572, %v2583
    %v2606 = vmul.f32 %v2573, %v2583
    %v2607 = vmul.f32 %v2574, %v2583
    %v2608 = vmul.f32 %v2575, %v2583
    %v2609 = vmul.f32 %v2576, %v2583
    %v2610 = vmul.f32 %v2577, %v2583
    %v2611 = vmul.f32 %v2578, %v2583
    %v2612 = vmul.f32 %v2579, %v2583
    %v2613 = vmul.f32 %v2580, %v2583
    %v2614 = vmul.f32 %v2581, %v2583
    %v2615 = vmul.f32 %v2582, %v2583
    %v2616 = vmul.f32 %v2584, 1.442695
    %v2617 = vpow.pop %v2616
    %v2618 = vmul.f32 %v2585, 1.442695
    %v2619 = vpow.pop %v2618
    %v2620 = vmul.f32 %v2586, 1.442695
    %v2621 = vpow.pop %v2620
    %v2622 = vmul.f32 %v2587, 1.442695
    %v2623 = vpow.pop %v2622
    %v2624 = vmul.f32 %v2588, 1.442695
    %v2625 = vpow.pop %v2624
    %v2626 = vmul.f32 %v2589, 1.442695
    %v2627 = vpow.pop %v2626
    %v2628 = vmul.f32 %v2590, 1.442695
    %v2629 = vpow.pop %v2628
    %v2630 = vmul.f32 %v2591, 1.442695
    %v2631 = vpow.pop %v2630
    %v2632 = vmul.f32 %v2592, 1.442695
    %v2633 = vpow.pop %v2632
    %v2634 = vmul.f32 %v2593, 1.442695
    %v2635 = vpow.pop %v2634
    %v2636 = vmul.f32 %v2594, 1.442695
    %v2637 = vpow.pop %v2636
    %v2638 = vmul.f32 %v2595, 1.442695
    %v2639 = vpow.pop %v2638
    %v2640 = vmul.f32 %v2596, 1.442695
    %v2641 = vpow.pop %v2640
    %v2642 = vmul.f32 %v2597, 1.442695
    %v2643 = vpow.pop %v2642
    %v2644 = vmul.f32 %v2598, 1.442695
    %v2645 = vpow.pop %v2644
    %v2646 = vmul.f32 %v2599, 1.442695
    %v2647 = vpow.pop %v2646
    %v2648 = vmul.f32 %v2600, 1.442695
    %v2649 = vpow.pop %v2648
    %v2650 = vmul.f32 %v2601, 1.442695
    %v2651 = vpow.pop %v2650
    %v2652 = vmul.f32 %v2602, 1.442695
    %v2653 = vpow.pop %v2652
    %v2654 = vmul.f32 %v2603, 1.442695
    %v2655 = vpow.pop %v2654
    %v2656 = vmul.f32 %v2604, 1.442695
    %v2657 = vpow.pop %v2656
    %v2658 = vmul.f32 %v2605, 1.442695
    %v2659 = vpow.pop %v2658
    %v2660 = vmul.f32 %v2606, 1.442695
    %v2661 = vpow.pop %v2660
    %v2662 = vmul.f32 %v2607, 1.442695
    %v2663 = vpow.pop %v2662
    %v2664 = vmul.f32 %v2608, 1.442695
    %v2665 = vpow.pop %v2664
    %v2666 = vmul.f32 %v2609, 1.442695
    %v2667 = vpow.pop %v2666
    %v2668 = vmul.f32 %v2610, 1.442695
    %v2669 = vpow.pop %v2668
    %v2670 = vmul.f32 %v2611, 1.442695
    %v2671 = vpow.pop %v2670
    %v2672 = vmul.f32 %v2612, 1.442695
    %v2673 = vpow.pop %v2672
    %v2674 = vmul.f32 %v2613, 1.442695
    %v2675 = vpow.pop %v2674
    %v2676 = vmul.f32 %v2614, 1.442695
    %v2677 = vpow.pop %v2676
    %v2678 = vmul.f32 %v2615, 1.442695
    %v2679 = vpow.pop %v2678
    %v2680 = vsub.f32 0.0, %v2333
    %v2681 = vsub.f32 0.0, %v2340
    %v2682 = vsub.f32 0.0, %v2347
    %v2683 = vsub.f32 0.0, %v2354
    %v2684 = vsub.f32 0.0, %v2361
    %v2685 = vsub.f32 0.0, %v2368
    %v2686 = vsub.f32 0.0, %v2375
    %v2687 = vsub.f32 0.0, %v2382
    %v2688 = vsub.f32 0.0, %v2389
    %v2689 = vsub.f32 0.0, %v2396
    %v2690 = vsub.f32 0.0, %v2403
    %v2691 = vsub.f32 0.0, %v2410
    %v2692 = vsub.f32 0.0, %v2417
    %v2693 = vsub.f32 0.0, %v2424
    %v2694 = vsub.f32 0.0, %v2431
    %v2695 = vsub.f32 0.0, %v2438
    %v2696 = vsub.f32 0.0, %v2445
    %v2697 = vsub.f32 0.0, %v2452
    %v2698 = vsub.f32 0.0, %v2459
    %v2699 = vsub.f32 0.0, %v2466
    %v2700 = vsub.f32 0.0, %v2473
    %v2701 = vsub.f32 0.0, %v2480
    %v2702 = vsub.f32 0.0, %v2487
    %v2703 = vsub.f32 0.0, %v2494
    %v2704 = vsub.f32 0.0, %v2501
    %v2705 = vsub.f32 0.0, %v2508
    %v2706 = vsub.f32 0.0, %v2515
    %v2707 = vsub.f32 0.0, %v2522
    %v2708 = vsub.f32 0.0, %v2529
    %v2709 = vsub.f32 0.0, %v2536
    %v2710 = vsub.f32 0.0, %v2543
    %v2711 = vsub.f32 0.0, %v2550
    %v2712 = vrcp.pop 0.0025
    %v2713 = vmul.f32 %v2680, %v2712
    %v2714 = vmul.f32 %v2681, %v2712
    %v2715 = vmul.f32 %v2682, %v2712
    %v2716 = vmul.f32 %v2683, %v2712
    %v2717 = vmul.f32 %v2684, %v2712
    %v2718 = vmul.f32 %v2685, %v2712
    %v2719 = vmul.f32 %v2686, %v2712
    %v2720 = vmul.f32 %v2687, %v2712
    %v2721 = vmul.f32 %v2688, %v2712
    %v2722 = vmul.f32 %v2689, %v2712
    %v2723 = vmul.f32 %v2690, %v2712
    %v2724 = vmul.f32 %v2691, %v2712
    %v2725 = vmul.f32 %v2692, %v2712
    %v2726 = vmul.f32 %v2693, %v2712
    %v2727 = vmul.f32 %v2694, %v2712
    %v2728 = vmul.f32 %v2695, %v2712
    %v2729 = vmul.f32 %v2696, %v2712
    %v2730 = vmul.f32 %v2697, %v2712
    %v2731 = vmul.f32 %v2698, %v2712
    %v2732 = vmul.f32 %v2699, %v2712
    %v2733 = vmul.f32 %v2700, %v2712
    %v2734 = vmul.f32 %v2701, %v2712
    %v2735 = vmul.f32 %v2702, %v2712
    %v2736 = vmul.f32 %v2703, %v2712
    %v2737 = vmul.f32 %v2704, %v2712
    %v2738 = vmul.f32 %v2705, %v2712
    %v2739 = vmul.f32 %v2706, %v2712
    %v2740 = vmul.f32 %v2707, %v2712
    %v2741 = vmul.f32 %v2708, %v2712
    %v2742 = vmul.f32 %v2709, %v2712
    %v2743 = vmul.f32 %v2710, %v2712
    %v2744 = vmul.f32 %v2711, %v2712
    %v2745 = vmul.f32 %v2713, 1.442695
    %v2746 = vpow.pop %v2745
    %v2747 = vmul.f32 %v2714, 1.442695
    %v2748 = vpow.pop %v2747
    %v2749 = vmul.f32 %v2715, 1.442695
    %v2750 = vpow.pop %v2749
    %v2751 = vmul.f32 %v2716, 1.442695
    %v2752 = vpow.pop %v2751
    %v2753 = vmul.f32 %v2717, 1.442695
    %v2754 = vpow.pop %v2753
    %v2755 = vmul.f32 %v2718, 1.442695
    %v2756 = vpow.pop %v2755
    %v2757 = vmul.f32 %v2719, 1.442695
    %v2758 = vpow.pop %v2757
    %v2759 = vmul.f32 %v2720, 1.442695
    %v2760 = vpow.pop %v2759
    %v2761 = vmul.f32 %v2721, 1.442695
    %v2762 = vpow.pop %v2761
    %v2763 = vmul.f32 %v2722, 1.442695
    %v2764 = vpow.pop %v2763
    %v2765 = vmul.f32 %v2723, 1.442695
    %v2766 = vpow.pop %v2765
    %v2767 = vmul.f32 %v2724, 1.442695
    %v2768 = vpow.pop %v2767
    %v2769 = vmul.f32 %v2725, 1.442695
    %v2770 = vpow.pop %v2769
    %v2771 = vmul.f32 %v2726, 1.442695
    %v2772 = vpow.pop %v2771
    %v2773 = vmul.f32 %v2727, 1.442695
    %v2774 = vpow.pop %v2773
    %v2775 = vmul.f32 %v2728, 1.442695
    %v2776 = vpow.pop %v2775
    %v2777 = vmul.f32 %v2729, 1.442695
    %v2778 = vpow.pop %v2777
    %v2779 = vmul.f32 %v2730, 1.442695
    %v2780 = vpow.pop %v2779
    %v2781 = vmul.f32 %v2731, 1.442695
    %v2782 = vpow.pop %v2781
    %v2783 = vmul.f32 %v2732, 1.442695
    %v2784 = vpow.pop %v2783
    %v2785 = vmul.f32 %v2733, 1.442695
    %v2786 = vpow.pop %v2785
    %v2787 = vmul.f32 %v2734, 1.442695
    %v2788 = vpow.pop %v2787
    %v2789 = vmul.f32 %v2735, 1.442695
    %v2790 = vpow.pop %v2789
    %v2791 = vmul.f32 %v2736, 1.442695
    %v2792 = vpow.pop %v2791
    %v2793 = vmul.f32 %v2737, 1.442695
    %v2794 = vpow.pop %v2793
    %v2795 = vmul.f32 %v2738, 1.442695
    %v2796 = vpow.pop %v2795
    %v2797 = vmul.f32 %v2739, 1.442695
    %v2798 = vpow.pop %v2797
    %v2799 = vmul.f32 %v2740, 1.442695
    %v2800 = vpow.pop %v2799
    %v2801 = vmul.f32 %v2741, 1.442695
    %v2802 = vpow.pop %v2801
    %v2803 = vmul.f32 %v2742, 1.442695
    %v2804 = vpow.pop %v2803
    %v2805 = vmul.f32 %v2743, 1.442695
    %v2806 = vpow.pop %v2805
    %v2807 = vmul.f32 %v2744, 1.442695
    %v2808 = vpow.pop %v2807
    %v2809 = vadd.f32 %v2617, %v2746
    %v2810 = vadd.f32 %v2619, %v2748
    %v2811 = vadd.f32 %v2621, %v2750
    %v2812 = vadd.f32 %v2623, %v2752
    %v2813 = vadd.f32 %v2625, %v2754
    %v2814 = vadd.f32 %v2627, %v2756
    %v2815 = vadd.f32 %v2629, %v2758
    %v2816 = vadd.f32 %v2631, %v2760
    %v2817 = vadd.f32 %v2633, %v2762
    %v2818 = vadd.f32 %v2635, %v2764
    %v2819 = vadd.f32 %v2637, %v2766
    %v2820 = vadd.f32 %v2639, %v2768
    %v2821 = vadd.f32 %v2641, %v2770
    %v2822 = vadd.f32 %v2643, %v2772
    %v2823 = vadd.f32 %v2645, %v2774
    %v2824 = vadd.f32 %v2647, %v2776
    %v2825 = vadd.f32 %v2649, %v2778
    %v2826 = vadd.f32 %v2651, %v2780
    %v2827 = vadd.f32 %v2653, %v2782
    %v2828 = vadd.f32 %v2655, %v2784
    %v2829 = vadd.f32 %v2657, %v2786
    %v2830 = vadd.f32 %v2659, %v2788
    %v2831 = vadd.f32 %v2661, %v2790
    %v2832 = vadd.f32 %v2663, %v2792
    %v2833 = vadd.f32 %v2665, %v2794
    %v2834 = vadd.f32 %v2667, %v2796
    %v2835 = vadd.f32 %v2669, %v2798
    %v2836 = vadd.f32 %v2671, %v2800
    %v2837 = vadd.f32 %v2673, %v2802
    %v2838 = vadd.f32 %v2675, %v2804
    %v2839 = vadd.f32 %v2677, %v2806
    %v2840 = vadd.f32 %v2679, %v2808
    %v2841 = vld [vmem:[%s5] sm:$0x77]
    %v2842 = vld [vmem:[%s6] sm:$0x77]
    %v2844 = vcombine.high %v2842, %v2842
    %v2846 = vsel %vm2198, %v1045, 0
    %v2849 = vsel %vm2198, %v1050, 0
    %v2852 = vsel %vm2198, %v1055, 0
    %v2855 = vsel %vm2198, %v1060, 0
    %v2858 = vsel %vm2198, %v1065, 0
    %v2861 = vsel %vm2198, %v1070, 0
    %v2864 = vsel %vm2198, %v1075, 0
    %v2867 = vsel %vm2198, %v1080, 0
    %v2870 = vsel %vm2198, %v1085, 0
    %v2873 = vsel %vm2198, %v1090, 0
    %v2876 = vsel %vm2198, %v1095, 0
    %v2879 = vsel %vm2198, %v1100, 0
    %v2882 = vsel %vm2198, %v1105, 0
    %v2885 = vsel %vm2198, %v1110, 0
    %v2888 = vsel %vm2198, %v1115, 0
    %v2891 = vsel %vm2198, %v1120, 0
    %v2894 = vsel %vm2198, %v1125, 0
    %v2897 = vsel %vm2198, %v1130, 0
    %v2900 = vsel %vm2198, %v1135, 0
    %v2903 = vsel %vm2198, %v1140, 0
    %v2906 = vsel %vm2198, %v1145, 0
    %v2909 = vsel %vm2198, %v1150, 0
    %v2912 = vsel %vm2198, %v1155, 0
    %v2915 = vsel %vm2198, %v1160, 0
    %v2918 = vsel %vm2198, %v1165, 0
    %v2921 = vsel %vm2198, %v1170, 0
    %v2924 = vsel %vm2198, %v1175, 0
    %v2927 = vsel %vm2198, %v1180, 0
    %v2930 = vsel %vm2198, %v1185, 0
    %v2933 = vsel %vm2198, %v1190, 0
    %v2936 = vsel %vm2198, %v1195, 0
    %v2939 = vsel %vm2198, %v1200, 0
    %vm2941 = vcmask 1042432
    %v2942 = vsel %vm2941, %v2842, 0
    %v2944 = vsel %vm2941, %v2844, 0
    %2946 = vmatprep.subr.mxu0 0.0
    %2947 = vmatpush1.msra.mxu0 0.0
    %2948 = vmatprep.subr.mxu0 0.0
    %2949 = vmatpush1.msra.mxu0 0.0
    %2950 = vmatprep.subr.mxu0 0.0
    %2951 = vmatpush1.msra.mxu0 0.0
    %2952 = vmatprep.subr.mxu0 0.0
    %2953 = vmatpush1.msra.mxu0 0.0
    %2954 = vmatprep.subr.mxu0 0.0
    %2955 = vmatpush1.msra.mxu0 0.0
    %2956 = vmatprep.subr.mxu0 0.0
    %2957 = vmatpush1.msra.mxu0 0.0
    %2958 = vmatprep.subr.mxu0 0.0
    %2959 = vmatpush1.msra.mxu0 0.0
    %2960 = vmatprep.subr.mxu0 0.0
    %2961 = vmatpush1.msra.mxu0 0.0
    %2962 = vmatprep.subr.mxu0 0.0
    %2963 = vmatpush1.msra.mxu0 0.0
    %2964 = vmatprep.subr.mxu0 0.0
    %2965 = vmatpush1.msra.mxu0 0.0
    %2966 = vmatprep.subr.mxu0 0.0
    %2967 = vmatpush1.msra.mxu0 0.0
    %2968 = vmatprep.subr.mxu0 0.0
    %2969 = vmatpush1.msra.mxu0 0.0
    %2970 = vmatprep.subr.mxu0 0.0
    %2971 = vmatpush1.msra.mxu0 0.0
    %2972 = vmatprep.subr.mxu0 0.0
    %2973 = vmatpush1.msra.mxu0 0.0
    %2974 = vmatprep.subr.mxu0 0.0
    %2975 = vmatpush1.msra.mxu0 0.0
    %2976 = vmatprep.subr.mxu0 %v2944
    %2977 = vmatpush1.msra.mxu0 %v2942
    %2978 = vmatprep.subr.mxu0 0.0
    %2979 = vmatpush2.msra.mxu0 0.0
    %2980 = vmatprep.subr.mxu0 0.0
    %2981 = vmatpush2.msra.mxu0 0.0
    %2982 = vmatprep.subr.mxu0 0.0
    %2983 = vmatpush2.msra.mxu0 0.0
    %2984 = vmatprep.subr.mxu0 0.0
    %2985 = vmatpush2.msra.mxu0 0.0
    %2986 = vmatprep.subr.mxu0 0.0
    %2987 = vmatpush2.msra.mxu0 0.0
    %2988 = vmatprep.subr.mxu0 0.0
    %2989 = vmatpush2.msra.mxu0 0.0
    %2990 = vmatprep.subr.mxu0 0.0
    %2991 = vmatpush2.msra.mxu0 0.0
    %2992 = vmatprep.subr.mxu0 0.0
    %2993 = vmatpush2.msra.mxu0 0.0
    %2994 = vmatprep.subr.mxu0 0.0
    %2995 = vmatpush2.msra.mxu0 0.0
    %2996 = vmatprep.subr.mxu0 0.0
    %2997 = vmatpush2.msra.mxu0 0.0
    %2998 = vmatprep.subr.mxu0 0.0
    %2999 = vmatpush2.msra.mxu0 0.0
    %3000 = vmatprep.subr.mxu0 0.0
    %3001 = vmatpush2.msra.mxu0 0.0
    %3002 = vmatprep.subr.mxu0 0.0
    %3003 = vmatpush2.msra.mxu0 0.0
    %3004 = vmatprep.subr.mxu0 0.0
    %3005 = vmatpush2.msra.mxu0 0.0
    %3006 = vmatprep.subr.mxu0 0.0
    %3007 = vmatpush2.msra.mxu0 0.0
    %3008 = vmatprep.subr.mxu0 0.0
    %3009 = vmatpush2.msra.mxu0 0.0
    %3010 = vmatprep.mubr.f32.mxu0 0.0
    %3011 = vmatmul.mubr.f32.gmra.mxu0 %v2846
    %v3012 = vpop.f32.mrf.mxu0
    %v3013 = vadd.f32 0.0, %v3012
    %v3014 = vpop.f32.mrf.mxu0
    %v3015 = vadd.f32 0.0, %v3014
    %3016 = vmatprep.mubr.f32.mxu0 0.0
    %3017 = vmatmul.mubr.f32.gmra.mxu0 %v2849
    %v3018 = vpop.f32.mrf.mxu0
    %v3019 = vadd.f32 0.0, %v3018
    %v3020 = vpop.f32.mrf.mxu0
    %v3021 = vadd.f32 0.0, %v3020
    %3022 = vmatprep.mubr.f32.mxu0 0.0
    %3023 = vmatmul.mubr.f32.gmra.mxu0 %v2852
    %v3024 = vpop.f32.mrf.mxu0
    %v3025 = vadd.f32 0.0, %v3024
    %v3026 = vpop.f32.mrf.mxu0
    %v3027 = vadd.f32 0.0, %v3026
    %3028 = vmatprep.mubr.f32.mxu0 0.0
    %3029 = vmatmul.mubr.f32.gmra.mxu0 %v2855
    %v3030 = vpop.f32.mrf.mxu0
    %v3031 = vadd.f32 0.0, %v3030
    %v3032 = vpop.f32.mrf.mxu0
    %v3033 = vadd.f32 0.0, %v3032
    %3034 = vmatprep.mubr.f32.mxu0 0.0
    %3035 = vmatmul.mubr.f32.gmra.mxu0 %v2858
    %v3036 = vpop.f32.mrf.mxu0
    %v3037 = vadd.f32 0.0, %v3036
    %v3038 = vpop.f32.mrf.mxu0
    %v3039 = vadd.f32 0.0, %v3038
    %3040 = vmatprep.mubr.f32.mxu0 0.0
    %3041 = vmatmul.mubr.f32.gmra.mxu0 %v2861
    %v3042 = vpop.f32.mrf.mxu0
    %v3043 = vadd.f32 0.0, %v3042
    %v3044 = vpop.f32.mrf.mxu0
    %v3045 = vadd.f32 0.0, %v3044
    %3046 = vmatprep.mubr.f32.mxu0 0.0
    %3047 = vmatmul.mubr.f32.gmra.mxu0 %v2864
    %v3048 = vpop.f32.mrf.mxu0
    %v3049 = vadd.f32 0.0, %v3048
    %v3050 = vpop.f32.mrf.mxu0
    %v3051 = vadd.f32 0.0, %v3050
    %3052 = vmatprep.mubr.f32.mxu0 0.0
    %3053 = vmatmul.mubr.f32.gmra.mxu0 %v2867
    %v3054 = vpop.f32.mrf.mxu0
    %v3055 = vadd.f32 0.0, %v3054
    %v3056 = vpop.f32.mrf.mxu0
    %v3057 = vadd.f32 0.0, %v3056
    %3058 = vmatprep.mubr.f32.mxu0 0.0
    %3059 = vmatmul.mubr.f32.gmra.mxu0 %v2870
    %v3060 = vpop.f32.mrf.mxu0
    %v3061 = vadd.f32 0.0, %v3060
    %v3062 = vpop.f32.mrf.mxu0
    %v3063 = vadd.f32 0.0, %v3062
    %3064 = vmatprep.mubr.f32.mxu0 0.0
    %3065 = vmatmul.mubr.f32.gmra.mxu0 %v2873
    %v3066 = vpop.f32.mrf.mxu0
    %v3067 = vadd.f32 0.0, %v3066
    %v3068 = vpop.f32.mrf.mxu0
    %v3069 = vadd.f32 0.0, %v3068
    %3070 = vmatprep.mubr.f32.mxu0 0.0
    %3071 = vmatmul.mubr.f32.gmra.mxu0 %v2876
    %v3072 = vpop.f32.mrf.mxu0
    %v3073 = vadd.f32 0.0, %v3072
    %v3074 = vpop.f32.mrf.mxu0
    %v3075 = vadd.f32 0.0, %v3074
    %3076 = vmatprep.mubr.f32.mxu0 0.0
    %3077 = vmatmul.mubr.f32.gmra.mxu0 %v2879
    %v3078 = vpop.f32.mrf.mxu0
    %v3079 = vadd.f32 0.0, %v3078
    %v3080 = vpop.f32.mrf.mxu0
    %v3081 = vadd.f32 0.0, %v3080
    %3082 = vmatprep.mubr.f32.mxu0 0.0
    %3083 = vmatmul.mubr.f32.gmra.mxu0 %v2882
    %v3084 = vpop.f32.mrf.mxu0
    %v3085 = vadd.f32 0.0, %v3084
    %v3086 = vpop.f32.mrf.mxu0
    %v3087 = vadd.f32 0.0, %v3086
    %3088 = vmatprep.mubr.f32.mxu0 0.0
    %3089 = vmatmul.mubr.f32.gmra.mxu0 %v2885
    %v3090 = vpop.f32.mrf.mxu0
    %v3091 = vadd.f32 0.0, %v3090
    %v3092 = vpop.f32.mrf.mxu0
    %v3093 = vadd.f32 0.0, %v3092
    %3094 = vmatprep.mubr.f32.mxu0 0.0
    %3095 = vmatmul.mubr.f32.gmra.mxu0 %v2888
    %v3096 = vpop.f32.mrf.mxu0
    %v3097 = vadd.f32 0.0, %v3096
    %v3098 = vpop.f32.mrf.mxu0
    %v3099 = vadd.f32 0.0, %v3098
    %3100 = vmatprep.mubr.f32.mxu0 0.0
    %3101 = vmatmul.mubr.f32.gmra.mxu0 %v2891
    %v3102 = vpop.f32.mrf.mxu0
    %v3103 = vadd.f32 0.0, %v3102
    %v3104 = vpop.f32.mrf.mxu0
    %v3105 = vadd.f32 0.0, %v3104
    %3106 = vmatprep.mubr.f32.mxu0 0.0
    %3107 = vmatmul.mubr.f32.gmra.mxu0 %v2894
    %v3108 = vpop.f32.mrf.mxu0
    %v3109 = vadd.f32 0.0, %v3108
    %v3110 = vpop.f32.mrf.mxu0
    %v3111 = vadd.f32 0.0, %v3110
    %3112 = vmatprep.mubr.f32.mxu0 0.0
    %3113 = vmatmul.mubr.f32.gmra.mxu0 %v2897
    %v3114 = vpop.f32.mrf.mxu0
    %v3115 = vadd.f32 0.0, %v3114
    %v3116 = vpop.f32.mrf.mxu0
    %v3117 = vadd.f32 0.0, %v3116
    %3118 = vmatprep.mubr.f32.mxu0 0.0
    %3119 = vmatmul.mubr.f32.gmra.mxu0 %v2900
    %v3120 = vpop.f32.mrf.mxu0
    %v3121 = vadd.f32 0.0, %v3120
    %v3122 = vpop.f32.mrf.mxu0
    %v3123 = vadd.f32 0.0, %v3122
    %3124 = vmatprep.mubr.f32.mxu0 0.0
    %3125 = vmatmul.mubr.f32.gmra.mxu0 %v2903
    %v3126 = vpop.f32.mrf.mxu0
    %v3127 = vadd.f32 0.0, %v3126
    %v3128 = vpop.f32.mrf.mxu0
    %v3129 = vadd.f32 0.0, %v3128
    %3130 = vmatprep.mubr.f32.mxu0 0.0
    %3131 = vmatmul.mubr.f32.gmra.mxu0 %v2906
    %v3132 = vpop.f32.mrf.mxu0
    %v3133 = vadd.f32 0.0, %v3132
    %v3134 = vpop.f32.mrf.mxu0
    %v3135 = vadd.f32 0.0, %v3134
    %3136 = vmatprep.mubr.f32.mxu0 0.0
    %3137 = vmatmul.mubr.f32.gmra.mxu0 %v2909
    %v3138 = vpop.f32.mrf.mxu0
    %v3139 = vadd.f32 0.0, %v3138
    %v3140 = vpop.f32.mrf.mxu0
    %v3141 = vadd.f32 0.0, %v3140
    %3142 = vmatprep.mubr.f32.mxu0 0.0
    %3143 = vmatmul.mubr.f32.gmra.mxu0 %v2912
    %v3144 = vpop.f32.mrf.mxu0
    %v3145 = vadd.f32 0.0, %v3144
    %v3146 = vpop.f32.mrf.mxu0
    %v3147 = vadd.f32 0.0, %v3146
    %3148 = vmatprep.mubr.f32.mxu0 0.0
    %3149 = vmatmul.mubr.f32.gmra.mxu0 %v2915
    %v3150 = vpop.f32.mrf.mxu0
    %v3151 = vadd.f32 0.0, %v3150
    %v3152 = vpop.f32.mrf.mxu0
    %v3153 = vadd.f32 0.0, %v3152
    %3154 = vmatprep.mubr.f32.mxu0 0.0
    %3155 = vmatmul.mubr.f32.gmra.mxu0 %v2918
    %v3156 = vpop.f32.mrf.mxu0
    %v3157 = vadd.f32 0.0, %v3156
    %v3158 = vpop.f32.mrf.mxu0
    %v3159 = vadd.f32 0.0, %v3158
    %3160 = vmatprep.mubr.f32.mxu0 0.0
    %3161 = vmatmul.mubr.f32.gmra.mxu0 %v2921
    %v3162 = vpop.f32.mrf.mxu0
    %v3163 = vadd.f32 0.0, %v3162
    %v3164 = vpop.f32.mrf.mxu0
    %v3165 = vadd.f32 0.0, %v3164
    %3166 = vmatprep.mubr.f32.mxu0 0.0
    %3167 = vmatmul.mubr.f32.gmra.mxu0 %v2924
    %v3168 = vpop.f32.mrf.mxu0
    %v3169 = vadd.f32 0.0, %v3168
    %v3170 = vpop.f32.mrf.mxu0
    %v3171 = vadd.f32 0.0, %v3170
    %3172 = vmatprep.mubr.f32.mxu0 0.0
    %3173 = vmatmul.mubr.f32.gmra.mxu0 %v2927
    %v3174 = vpop.f32.mrf.mxu0
    %v3175 = vadd.f32 0.0, %v3174
    %v3176 = vpop.f32.mrf.mxu0
    %v3177 = vadd.f32 0.0, %v3176
    %3178 = vmatprep.mubr.f32.mxu0 0.0
    %3179 = vmatmul.mubr.f32.gmra.mxu0 %v2930
    %v3180 = vpop.f32.mrf.mxu0
    %v3181 = vadd.f32 0.0, %v3180
    %v3182 = vpop.f32.mrf.mxu0
    %v3183 = vadd.f32 0.0, %v3182
    %3184 = vmatprep.mubr.f32.mxu0 0.0
    %3185 = vmatmul.mubr.f32.gmra.mxu0 %v2933
    %v3186 = vpop.f32.mrf.mxu0
    %v3187 = vadd.f32 0.0, %v3186
    %v3188 = vpop.f32.mrf.mxu0
    %v3189 = vadd.f32 0.0, %v3188
    %3190 = vmatprep.mubr.f32.mxu0 0.0
    %3191 = vmatmul.mubr.f32.gmra.mxu0 %v2936
    %v3192 = vpop.f32.mrf.mxu0
    %v3193 = vadd.f32 0.0, %v3192
    %v3194 = vpop.f32.mrf.mxu0
    %v3195 = vadd.f32 0.0, %v3194
    %3196 = vmatprep.mubr.f32.mxu0 0.0
    %3197 = vmatmul.mubr.f32.gmra.mxu0 %v2939
    %v3198 = vpop.f32.mrf.mxu0
    %v3199 = vadd.f32 0.0, %v3198
    %v3200 = vpop.f32.mrf.mxu0
    %v3201 = vadd.f32 0.0, %v3200
    %3202 = vdwg.mxu0
    %v3204 = vcombine.high %v2841, %v2841
    %v3206 = vsel %vm2198, %v724, 0
    %v3209 = vsel %vm2198, %v729, 0
    %v3212 = vsel %vm2198, %v734, 0
    %v3215 = vsel %vm2198, %v739, 0
    %v3218 = vsel %vm2198, %v744, 0
    %v3221 = vsel %vm2198, %v749, 0
    %v3224 = vsel %vm2198, %v754, 0
    %v3227 = vsel %vm2198, %v759, 0
    %v3230 = vsel %vm2198, %v764, 0
    %v3233 = vsel %vm2198, %v769, 0
    %v3236 = vsel %vm2198, %v774, 0
    %v3239 = vsel %vm2198, %v779, 0
    %v3242 = vsel %vm2198, %v784, 0
    %v3245 = vsel %vm2198, %v789, 0
    %v3248 = vsel %vm2198, %v794, 0
    %v3251 = vsel %vm2198, %v799, 0
    %v3254 = vsel %vm2198, %v804, 0
    %v3257 = vsel %vm2198, %v809, 0
    %v3260 = vsel %vm2198, %v814, 0
    %v3263 = vsel %vm2198, %v819, 0
    %v3266 = vsel %vm2198, %v824, 0
    %v3269 = vsel %vm2198, %v829, 0
    %v3272 = vsel %vm2198, %v834, 0
    %v3275 = vsel %vm2198, %v839, 0
    %v3278 = vsel %vm2198, %v844, 0
    %v3281 = vsel %vm2198, %v849, 0
    %v3284 = vsel %vm2198, %v854, 0
    %v3287 = vsel %vm2198, %v859, 0
    %v3290 = vsel %vm2198, %v864, 0
    %v3293 = vsel %vm2198, %v869, 0
    %v3296 = vsel %vm2198, %v874, 0
    %v3299 = vsel %vm2198, %v879, 0
    %v3301 = vsel %vm2941, %v2841, 0
    %v3303 = vsel %vm2941, %v3204, 0
    %3305 = vmatprep.subr.mxu0 0.0
    %3306 = vmatpush1.msra.mxu0 0.0
    %3307 = vmatprep.subr.mxu0 0.0
    %3308 = vmatpush1.msra.mxu0 0.0
    %3309 = vmatprep.subr.mxu0 0.0
    %3310 = vmatpush1.msra.mxu0 0.0
    %3311 = vmatprep.subr.mxu0 0.0
    %3312 = vmatpush1.msra.mxu0 0.0
    %3313 = vmatprep.subr.mxu0 0.0
    %3314 = vmatpush1.msra.mxu0 0.0
    %3315 = vmatprep.subr.mxu0 0.0
    %3316 = vmatpush1.msra.mxu0 0.0
    %3317 = vmatprep.subr.mxu0 0.0
    %3318 = vmatpush1.msra.mxu0 0.0
    %3319 = vmatprep.subr.mxu0 0.0
    %3320 = vmatpush1.msra.mxu0 0.0
    %3321 = vmatprep.subr.mxu0 0.0
    %3322 = vmatpush1.msra.mxu0 0.0
    %3323 = vmatprep.subr.mxu0 0.0
    %3324 = vmatpush1.msra.mxu0 0.0
    %3325 = vmatprep.subr.mxu0 0.0
    %3326 = vmatpush1.msra.mxu0 0.0
    %3327 = vmatprep.subr.mxu0 0.0
    %3328 = vmatpush1.msra.mxu0 0.0
    %3329 = vmatprep.subr.mxu0 0.0
    %3330 = vmatpush1.msra.mxu0 0.0
    %3331 = vmatprep.subr.mxu0 0.0
    %3332 = vmatpush1.msra.mxu0 0.0
    %3333 = vmatprep.subr.mxu0 0.0
    %3334 = vmatpush1.msra.mxu0 0.0
    %3335 = vmatprep.subr.mxu0 %v3303
    %3336 = vmatpush1.msra.mxu0 %v3301
    %3337 = vmatprep.subr.mxu0 0.0
    %3338 = vmatpush2.msra.mxu0 0.0
    %3339 = vmatprep.subr.mxu0 0.0
    %3340 = vmatpush2.msra.mxu0 0.0
    %3341 = vmatprep.subr.mxu0 0.0
    %3342 = vmatpush2.msra.mxu0 0.0
    %3343 = vmatprep.subr.mxu0 0.0
    %3344 = vmatpush2.msra.mxu0 0.0
    %3345 = vmatprep.subr.mxu0 0.0
    %3346 = vmatpush2.msra.mxu0 0.0
    %3347 = vmatprep.subr.mxu0 0.0
    %3348 = vmatpush2.msra.mxu0 0.0
    %3349 = vmatprep.subr.mxu0 0.0
    %3350 = vmatpush2.msra.mxu0 0.0
    %3351 = vmatprep.subr.mxu0 0.0
    %3352 = vmatpush2.msra.mxu0 0.0
    %3353 = vmatprep.subr.mxu0 0.0
    %3354 = vmatpush2.msra.mxu0 0.0
    %3355 = vmatprep.subr.mxu0 0.0
    %3356 = vmatpush2.msra.mxu0 0.0
    %3357 = vmatprep.subr.mxu0 0.0
    %3358 = vmatpush2.msra.mxu0 0.0
    %3359 = vmatprep.subr.mxu0 0.0
    %3360 = vmatpush2.msra.mxu0 0.0
    %3361 = vmatprep.subr.mxu0 0.0
    %3362 = vmatpush2.msra.mxu0 0.0
    %3363 = vmatprep.subr.mxu0 0.0
    %3364 = vmatpush2.msra.mxu0 0.0
    %3365 = vmatprep.subr.mxu0 0.0
    %3366 = vmatpush2.msra.mxu0 0.0
    %3367 = vmatprep.subr.mxu0 0.0
    %3368 = vmatpush2.msra.mxu0 0.0
    %3369 = vmatprep.mubr.f32.mxu0 0.0
    %3370 = vmatmul.mubr.f32.gmra.mxu0 %v3206
    %v3371 = vpop.f32.mrf.mxu0
    %v3372 = vadd.f32 %v3013, %v3371
    %v3373 = vpop.f32.mrf.mxu0
    %v3374 = vadd.f32 %v3015, %v3373
    %3375 = vmatprep.mubr.f32.mxu0 0.0
    %3376 = vmatmul.mubr.f32.gmra.mxu0 %v3209
    %v3377 = vpop.f32.mrf.mxu0
    %v3378 = vadd.f32 %v3019, %v3377
    %v3379 = vpop.f32.mrf.mxu0
    %v3380 = vadd.f32 %v3021, %v3379
    %3381 = vmatprep.mubr.f32.mxu0 0.0
    %3382 = vmatmul.mubr.f32.gmra.mxu0 %v3212
    %v3383 = vpop.f32.mrf.mxu0
    %v3384 = vadd.f32 %v3025, %v3383
    %v3385 = vpop.f32.mrf.mxu0
    %v3386 = vadd.f32 %v3027, %v3385
    %3387 = vmatprep.mubr.f32.mxu0 0.0
    %3388 = vmatmul.mubr.f32.gmra.mxu0 %v3215
    %v3389 = vpop.f32.mrf.mxu0
    %v3390 = vadd.f32 %v3031, %v3389
    %v3391 = vpop.f32.mrf.mxu0
    %v3392 = vadd.f32 %v3033, %v3391
    %3393 = vmatprep.mubr.f32.mxu0 0.0
    %3394 = vmatmul.mubr.f32.gmra.mxu0 %v3218
    %v3395 = vpop.f32.mrf.mxu0
    %v3396 = vadd.f32 %v3037, %v3395
    %v3397 = vpop.f32.mrf.mxu0
    %v3398 = vadd.f32 %v3039, %v3397
    %3399 = vmatprep.mubr.f32.mxu0 0.0
    %3400 = vmatmul.mubr.f32.gmra.mxu0 %v3221
    %v3401 = vpop.f32.mrf.mxu0
    %v3402 = vadd.f32 %v3043, %v3401
    %v3403 = vpop.f32.mrf.mxu0
    %v3404 = vadd.f32 %v3045, %v3403
    %3405 = vmatprep.mubr.f32.mxu0 0.0
    %3406 = vmatmul.mubr.f32.gmra.mxu0 %v3224
    %v3407 = vpop.f32.mrf.mxu0
    %v3408 = vadd.f32 %v3049, %v3407
    %v3409 = vpop.f32.mrf.mxu0
    %v3410 = vadd.f32 %v3051, %v3409
    %3411 = vmatprep.mubr.f32.mxu0 0.0
    %3412 = vmatmul.mubr.f32.gmra.mxu0 %v3227
    %v3413 = vpop.f32.mrf.mxu0
    %v3414 = vadd.f32 %v3055, %v3413
    %v3415 = vpop.f32.mrf.mxu0
    %v3416 = vadd.f32 %v3057, %v3415
    %3417 = vmatprep.mubr.f32.mxu0 0.0
    %3418 = vmatmul.mubr.f32.gmra.mxu0 %v3230
    %v3419 = vpop.f32.mrf.mxu0
    %v3420 = vadd.f32 %v3061, %v3419
    %v3421 = vpop.f32.mrf.mxu0
    %v3422 = vadd.f32 %v3063, %v3421
    %3423 = vmatprep.mubr.f32.mxu0 0.0
    %3424 = vmatmul.mubr.f32.gmra.mxu0 %v3233
    %v3425 = vpop.f32.mrf.mxu0
    %v3426 = vadd.f32 %v3067, %v3425
    %v3427 = vpop.f32.mrf.mxu0
    %v3428 = vadd.f32 %v3069, %v3427
    %3429 = vmatprep.mubr.f32.mxu0 0.0
    %3430 = vmatmul.mubr.f32.gmra.mxu0 %v3236
    %v3431 = vpop.f32.mrf.mxu0
    %v3432 = vadd.f32 %v3073, %v3431
    %v3433 = vpop.f32.mrf.mxu0
    %v3434 = vadd.f32 %v3075, %v3433
    %3435 = vmatprep.mubr.f32.mxu0 0.0
    %3436 = vmatmul.mubr.f32.gmra.mxu0 %v3239
    %v3437 = vpop.f32.mrf.mxu0
    %v3438 = vadd.f32 %v3079, %v3437
    %v3439 = vpop.f32.mrf.mxu0
    %v3440 = vadd.f32 %v3081, %v3439
    %3441 = vmatprep.mubr.f32.mxu0 0.0
    %3442 = vmatmul.mubr.f32.gmra.mxu0 %v3242
    %v3443 = vpop.f32.mrf.mxu0
    %v3444 = vadd.f32 %v3085, %v3443
    %v3445 = vpop.f32.mrf.mxu0
    %v3446 = vadd.f32 %v3087, %v3445
    %3447 = vmatprep.mubr.f32.mxu0 0.0
    %3448 = vmatmul.mubr.f32.gmra.mxu0 %v3245
    %v3449 = vpop.f32.mrf.mxu0
    %v3450 = vadd.f32 %v3091, %v3449
    %v3451 = vpop.f32.mrf.mxu0
    %v3452 = vadd.f32 %v3093, %v3451
    %3453 = vmatprep.mubr.f32.mxu0 0.0
    %3454 = vmatmul.mubr.f32.gmra.mxu0 %v3248
    %v3455 = vpop.f32.mrf.mxu0
    %v3456 = vadd.f32 %v3097, %v3455
    %v3457 = vpop.f32.mrf.mxu0
    %v3458 = vadd.f32 %v3099, %v3457
    %3459 = vmatprep.mubr.f32.mxu0 0.0
    %3460 = vmatmul.mubr.f32.gmra.mxu0 %v3251
    %v3461 = vpop.f32.mrf.mxu0
    %v3462 = vadd.f32 %v3103, %v3461
    %v3463 = vpop.f32.mrf.mxu0
    %v3464 = vadd.f32 %v3105, %v3463
    %3465 = vmatprep.mubr.f32.mxu0 0.0
    %3466 = vmatmul.mubr.f32.gmra.mxu0 %v3254
    %v3467 = vpop.f32.mrf.mxu0
    %v3468 = vadd.f32 %v3109, %v3467
    %v3469 = vpop.f32.mrf.mxu0
    %v3470 = vadd.f32 %v3111, %v3469
    %3471 = vmatprep.mubr.f32.mxu0 0.0
    %3472 = vmatmul.mubr.f32.gmra.mxu0 %v3257
    %v3473 = vpop.f32.mrf.mxu0
    %v3474 = vadd.f32 %v3115, %v3473
    %v3475 = vpop.f32.mrf.mxu0
    %v3476 = vadd.f32 %v3117, %v3475
    %3477 = vmatprep.mubr.f32.mxu0 0.0
    %3478 = vmatmul.mubr.f32.gmra.mxu0 %v3260
    %v3479 = vpop.f32.mrf.mxu0
    %v3480 = vadd.f32 %v3121, %v3479
    %v3481 = vpop.f32.mrf.mxu0
    %v3482 = vadd.f32 %v3123, %v3481
    %3483 = vmatprep.mubr.f32.mxu0 0.0
    %3484 = vmatmul.mubr.f32.gmra.mxu0 %v3263
    %v3485 = vpop.f32.mrf.mxu0
    %v3486 = vadd.f32 %v3127, %v3485
    %v3487 = vpop.f32.mrf.mxu0
    %v3488 = vadd.f32 %v3129, %v3487
    %3489 = vmatprep.mubr.f32.mxu0 0.0
    %3490 = vmatmul.mubr.f32.gmra.mxu0 %v3266
    %v3491 = vpop.f32.mrf.mxu0
    %v3492 = vadd.f32 %v3133, %v3491
    %v3493 = vpop.f32.mrf.mxu0
    %v3494 = vadd.f32 %v3135, %v3493
    %3495 = vmatprep.mubr.f32.mxu0 0.0
    %3496 = vmatmul.mubr.f32.gmra.mxu0 %v3269
    %v3497 = vpop.f32.mrf.mxu0
    %v3498 = vadd.f32 %v3139, %v3497
    %v3499 = vpop.f32.mrf.mxu0
    %v3500 = vadd.f32 %v3141, %v3499
    %3501 = vmatprep.mubr.f32.mxu0 0.0
    %3502 = vmatmul.mubr.f32.gmra.mxu0 %v3272
    %v3503 = vpop.f32.mrf.mxu0
    %v3504 = vadd.f32 %v3145, %v3503
    %v3505 = vpop.f32.mrf.mxu0
    %v3506 = vadd.f32 %v3147, %v3505
    %3507 = vmatprep.mubr.f32.mxu0 0.0
    %3508 = vmatmul.mubr.f32.gmra.mxu0 %v3275
    %v3509 = vpop.f32.mrf.mxu0
    %v3510 = vadd.f32 %v3151, %v3509
    %v3511 = vpop.f32.mrf.mxu0
    %v3512 = vadd.f32 %v3153, %v3511
    %3513 = vmatprep.mubr.f32.mxu0 0.0
    %3514 = vmatmul.mubr.f32.gmra.mxu0 %v3278
    %v3515 = vpop.f32.mrf.mxu0
    %v3516 = vadd.f32 %v3157, %v3515
    %v3517 = vpop.f32.mrf.mxu0
    %v3518 = vadd.f32 %v3159, %v3517
    %3519 = vmatprep.mubr.f32.mxu0 0.0
    %3520 = vmatmul.mubr.f32.gmra.mxu0 %v3281
    %v3521 = vpop.f32.mrf.mxu0
    %v3522 = vadd.f32 %v3163, %v3521
    %v3523 = vpop.f32.mrf.mxu0
    %v3524 = vadd.f32 %v3165, %v3523
    %3525 = vmatprep.mubr.f32.mxu0 0.0
    %3526 = vmatmul.mubr.f32.gmra.mxu0 %v3284
    %v3527 = vpop.f32.mrf.mxu0
    %v3528 = vadd.f32 %v3169, %v3527
    %v3529 = vpop.f32.mrf.mxu0
    %v3530 = vadd.f32 %v3171, %v3529
    %3531 = vmatprep.mubr.f32.mxu0 0.0
    %3532 = vmatmul.mubr.f32.gmra.mxu0 %v3287
    %v3533 = vpop.f32.mrf.mxu0
    %v3534 = vadd.f32 %v3175, %v3533
    %v3535 = vpop.f32.mrf.mxu0
    %v3536 = vadd.f32 %v3177, %v3535
    %3537 = vmatprep.mubr.f32.mxu0 0.0
    %3538 = vmatmul.mubr.f32.gmra.mxu0 %v3290
    %v3539 = vpop.f32.mrf.mxu0
    %v3540 = vadd.f32 %v3181, %v3539
    %v3541 = vpop.f32.mrf.mxu0
    %v3542 = vadd.f32 %v3183, %v3541
    %3543 = vmatprep.mubr.f32.mxu0 0.0
    %3544 = vmatmul.mubr.f32.gmra.mxu0 %v3293
    %v3545 = vpop.f32.mrf.mxu0
    %v3546 = vadd.f32 %v3187, %v3545
    %v3547 = vpop.f32.mrf.mxu0
    %v3548 = vadd.f32 %v3189, %v3547
    %3549 = vmatprep.mubr.f32.mxu0 0.0
    %3550 = vmatmul.mubr.f32.gmra.mxu0 %v3296
    %v3551 = vpop.f32.mrf.mxu0
    %v3552 = vadd.f32 %v3193, %v3551
    %v3553 = vpop.f32.mrf.mxu0
    %v3554 = vadd.f32 %v3195, %v3553
    %3555 = vmatprep.mubr.f32.mxu0 0.0
    %3556 = vmatmul.mubr.f32.gmra.mxu0 %v3299
    %v3557 = vpop.f32.mrf.mxu0
    %v3558 = vadd.f32 %v3199, %v3557
    %v3559 = vpop.f32.mrf.mxu0
    %v3560 = vadd.f32 %v3201, %v3559
    %3561 = vdwg.mxu0
    %v3562 = vld [vmem:[%s7] sm:$0x3]
    %v3564 = vlaneseq
    %v3565 = vshrl.u32 %v3564, 7
    %v3566 = vsub.s32 0, %v3565
    %v3567 = vrot.slane %v3562, %v3566
    %v3568 = vlaneseq
    %v3569 = vshrl.u32 %v3568, 7
    %v3570 = vsub.s32 1, %v3569
    %v3571 = vrot.slane %v3562, %v3570
    %v3574 = vadd.f32 %v3372, %v3567
    %v3575 = vadd.f32 %v3374, %v3571
    %v3576 = vadd.f32 %v3378, %v3567
    %v3577 = vadd.f32 %v3380, %v3571
    %v3578 = vadd.f32 %v3384, %v3567
    %v3579 = vadd.f32 %v3386, %v3571
    %v3580 = vadd.f32 %v3390, %v3567
    %v3581 = vadd.f32 %v3392, %v3571
    %v3582 = vadd.f32 %v3396, %v3567
    %v3583 = vadd.f32 %v3398, %v3571
    %v3584 = vadd.f32 %v3402, %v3567
    %v3585 = vadd.f32 %v3404, %v3571
    %v3586 = vadd.f32 %v3408, %v3567
    %v3587 = vadd.f32 %v3410, %v3571
    %v3588 = vadd.f32 %v3414, %v3567
    %v3589 = vadd.f32 %v3416, %v3571
    %v3590 = vadd.f32 %v3420, %v3567
    %v3591 = vadd.f32 %v3422, %v3571
    %v3592 = vadd.f32 %v3426, %v3567
    %v3593 = vadd.f32 %v3428, %v3571
    %v3594 = vadd.f32 %v3432, %v3567
    %v3595 = vadd.f32 %v3434, %v3571
    %v3596 = vadd.f32 %v3438, %v3567
    %v3597 = vadd.f32 %v3440, %v3571
    %v3598 = vadd.f32 %v3444, %v3567
    %v3599 = vadd.f32 %v3446, %v3571
    %v3600 = vadd.f32 %v3450, %v3567
    %v3601 = vadd.f32 %v3452, %v3571
    %v3602 = vadd.f32 %v3456, %v3567
    %v3603 = vadd.f32 %v3458, %v3571
    %v3604 = vadd.f32 %v3462, %v3567
    %v3605 = vadd.f32 %v3464, %v3571
    %v3606 = vadd.f32 %v3468, %v3567
    %v3607 = vadd.f32 %v3470, %v3571
    %v3608 = vadd.f32 %v3474, %v3567
    %v3609 = vadd.f32 %v3476, %v3571
    %v3610 = vadd.f32 %v3480, %v3567
    %v3611 = vadd.f32 %v3482, %v3571
    %v3612 = vadd.f32 %v3486, %v3567
    %v3613 = vadd.f32 %v3488, %v3571
    %v3614 = vadd.f32 %v3492, %v3567
    %v3615 = vadd.f32 %v3494, %v3571
    %v3616 = vadd.f32 %v3498, %v3567
    %v3617 = vadd.f32 %v3500, %v3571
    %v3618 = vadd.f32 %v3504, %v3567
    %v3619 = vadd.f32 %v3506, %v3571
    %v3620 = vadd.f32 %v3510, %v3567
    %v3621 = vadd.f32 %v3512, %v3571
    %v3622 = vadd.f32 %v3516, %v3567
    %v3623 = vadd.f32 %v3518, %v3571
    %v3624 = vadd.f32 %v3522, %v3567
    %v3625 = vadd.f32 %v3524, %v3571
    %v3626 = vadd.f32 %v3528, %v3567
    %v3627 = vadd.f32 %v3530, %v3571
    %v3628 = vadd.f32 %v3534, %v3567
    %v3629 = vadd.f32 %v3536, %v3571
    %v3630 = vadd.f32 %v3540, %v3567
    %v3631 = vadd.f32 %v3542, %v3571
    %v3632 = vadd.f32 %v3546, %v3567
    %v3633 = vadd.f32 %v3548, %v3571
    %v3634 = vadd.f32 %v3552, %v3567
    %v3635 = vadd.f32 %v3554, %v3571
    %v3636 = vadd.f32 %v3558, %v3567
    %v3637 = vadd.f32 %v3560, %v3571
    %v3638 = vmax.f32 %v3574, 0.0
    %v3639 = vmax.f32 %v3575, 0.0
    %v3640 = vmax.f32 %v3576, 0.0
    %v3641 = vmax.f32 %v3577, 0.0
    %v3642 = vmax.f32 %v3578, 0.0
    %v3643 = vmax.f32 %v3579, 0.0
    %v3644 = vmax.f32 %v3580, 0.0
    %v3645 = vmax.f32 %v3581, 0.0
    %v3646 = vmax.f32 %v3582, 0.0
    %v3647 = vmax.f32 %v3583, 0.0
    %v3648 = vmax.f32 %v3584, 0.0
    %v3649 = vmax.f32 %v3585, 0.0
    %v3650 = vmax.f32 %v3586, 0.0
    %v3651 = vmax.f32 %v3587, 0.0
    %v3652 = vmax.f32 %v3588, 0.0
    %v3653 = vmax.f32 %v3589, 0.0
    %v3654 = vmax.f32 %v3590, 0.0
    %v3655 = vmax.f32 %v3591, 0.0
    %v3656 = vmax.f32 %v3592, 0.0
    %v3657 = vmax.f32 %v3593, 0.0
    %v3658 = vmax.f32 %v3594, 0.0
    %v3659 = vmax.f32 %v3595, 0.0
    %v3660 = vmax.f32 %v3596, 0.0
    %v3661 = vmax.f32 %v3597, 0.0
    %v3662 = vmax.f32 %v3598, 0.0
    %v3663 = vmax.f32 %v3599, 0.0
    %v3664 = vmax.f32 %v3600, 0.0
    %v3665 = vmax.f32 %v3601, 0.0
    %v3666 = vmax.f32 %v3602, 0.0
    %v3667 = vmax.f32 %v3603, 0.0
    %v3668 = vmax.f32 %v3604, 0.0
    %v3669 = vmax.f32 %v3605, 0.0
    %v3670 = vmax.f32 %v3606, 0.0
    %v3671 = vmax.f32 %v3607, 0.0
    %v3672 = vmax.f32 %v3608, 0.0
    %v3673 = vmax.f32 %v3609, 0.0
    %v3674 = vmax.f32 %v3610, 0.0
    %v3675 = vmax.f32 %v3611, 0.0
    %v3676 = vmax.f32 %v3612, 0.0
    %v3677 = vmax.f32 %v3613, 0.0
    %v3678 = vmax.f32 %v3614, 0.0
    %v3679 = vmax.f32 %v3615, 0.0
    %v3680 = vmax.f32 %v3616, 0.0
    %v3681 = vmax.f32 %v3617, 0.0
    %v3682 = vmax.f32 %v3618, 0.0
    %v3683 = vmax.f32 %v3619, 0.0
    %v3684 = vmax.f32 %v3620, 0.0
    %v3685 = vmax.f32 %v3621, 0.0
    %v3686 = vmax.f32 %v3622, 0.0
    %v3687 = vmax.f32 %v3623, 0.0
    %v3688 = vmax.f32 %v3624, 0.0
    %v3689 = vmax.f32 %v3625, 0.0
    %v3690 = vmax.f32 %v3626, 0.0
    %v3691 = vmax.f32 %v3627, 0.0
    %v3692 = vmax.f32 %v3628, 0.0
    %v3693 = vmax.f32 %v3629, 0.0
    %v3694 = vmax.f32 %v3630, 0.0
    %v3695 = vmax.f32 %v3631, 0.0
    %v3696 = vmax.f32 %v3632, 0.0
    %v3697 = vmax.f32 %v3633, 0.0
    %v3698 = vmax.f32 %v3634, 0.0
    %v3699 = vmax.f32 %v3635, 0.0
    %v3700 = vmax.f32 %v3636, 0.0
    %v3701 = vmax.f32 %v3637, 0.0
    %v3702 = vld [vmem:[%s8] sm:$0xff]
    %v3703 = vld [vmem:[%s8 + $0x8] sm:$0xff]
    %v3704 = vld [vmem:[%s8 + $0x10] sm:$0xff]
    %v3705 = vld [vmem:[%s8 + $0x18] sm:$0xff]
    %v3706 = vld [vmem:[%s8 + $0x20] sm:$0xff]
    %v3707 = vld [vmem:[%s8 + $0x28] sm:$0xff]
    %v3708 = vld [vmem:[%s8 + $0x30] sm:$0xff]
    %v3709 = vld [vmem:[%s8 + $0x38] sm:$0xff]
    %v3710 = vld [vmem:[%s8 + $0x40] sm:$0xff]
    %v3711 = vld [vmem:[%s8 + $0x48] sm:$0xff]
    %v3712 = vld [vmem:[%s8 + $0x50] sm:$0xff]
    %v3713 = vld [vmem:[%s8 + $0x58] sm:$0xff]
    %v3714 = vld [vmem:[%s8 + $0x60] sm:$0xff]
    %v3715 = vld [vmem:[%s8 + $0x68] sm:$0xff]
    %v3716 = vld [vmem:[%s8 + $0x70] sm:$0xff]
    %v3717 = vld [vmem:[%s8 + $0x78] sm:$0xff]
    %v3718 = vld [vmem:[%s8 + $0x80] sm:$0xff]
    %v3719 = vld [vmem:[%s8 + $0x88] sm:$0xff]
    %v3720 = vld [vmem:[%s8 + $0x90] sm:$0xff]
    %v3721 = vld [vmem:[%s8 + $0x98] sm:$0xff]
    %v3722 = vld [vmem:[%s8 + $0xa0] sm:$0xff]
    %v3723 = vld [vmem:[%s8 + $0xa8] sm:$0xff]
    %v3724 = vld [vmem:[%s8 + $0xb0] sm:$0xff]
    %v3725 = vld [vmem:[%s8 + $0xb8] sm:$0xff]
    %v3726 = vld [vmem:[%s8 + $0xc0] sm:$0xff]
    %v3727 = vld [vmem:[%s8 + $0xc8] sm:$0xff]
    %v3728 = vld [vmem:[%s8 + $0xd0] sm:$0xff]
    %v3729 = vld [vmem:[%s8 + $0xd8] sm:$0xff]
    %v3730 = vld [vmem:[%s8 + $0xe0] sm:$0xff]
    %v3731 = vld [vmem:[%s8 + $0xe8] sm:$0xff]
    %v3732 = vld [vmem:[%s8 + $0xf0] sm:$0xff]
    %v3733 = vld [vmem:[%s8 + $0xf8] sm:$0xff]
    %v3734 = vld [vmem:[%s8 + $0x100] sm:$0xff]
    %v3735 = vld [vmem:[%s8 + $0x108] sm:$0xff]
    %v3736 = vld [vmem:[%s8 + $0x110] sm:$0xff]
    %v3737 = vld [vmem:[%s8 + $0x118] sm:$0xff]
    %v3738 = vld [vmem:[%s8 + $0x120] sm:$0xff]
    %v3739 = vld [vmem:[%s8 + $0x128] sm:$0xff]
    %v3740 = vld [vmem:[%s8 + $0x130] sm:$0xff]
    %v3741 = vld [vmem:[%s8 + $0x138] sm:$0xff]
    %v3742 = vld [vmem:[%s9] sm:$0x3]
    %v3744 = vlaneseq
    %v3745 = vshrl.u32 %v3744, 7
    %v3746 = vsub.s32 0, %v3745
    %v3747 = vrot.slane %v3742, %v3746
    %v3748 = vlaneseq
    %v3749 = vshrl.u32 %v3748, 7
    %v3750 = vsub.s32 1, %v3749
    %v3751 = vrot.slane %v3742, %v3750
    %vm3754 = vcmask 261120
    %v3756 = vsel %vm3754, %v3639, 0
    %v3759 = vsel %vm3754, %v3641, 0
    %v3762 = vsel %vm3754, %v3643, 0
    %v3765 = vsel %vm3754, %v3645, 0
    %v3768 = vsel %vm3754, %v3647, 0
    %v3771 = vsel %vm3754, %v3649, 0
    %v3774 = vsel %vm3754, %v3651, 0
    %v3777 = vsel %vm3754, %v3653, 0
    %v3780 = vsel %vm3754, %v3655, 0
    %v3783 = vsel %vm3754, %v3657, 0
    %v3786 = vsel %vm3754, %v3659, 0
    %v3789 = vsel %vm3754, %v3661, 0
    %v3792 = vsel %vm3754, %v3663, 0
    %v3795 = vsel %vm3754, %v3665, 0
    %v3798 = vsel %vm3754, %v3667, 0
    %v3801 = vsel %vm3754, %v3669, 0
    %v3804 = vsel %vm3754, %v3671, 0
    %v3807 = vsel %vm3754, %v3673, 0
    %v3810 = vsel %vm3754, %v3675, 0
    %v3813 = vsel %vm3754, %v3677, 0
    %v3816 = vsel %vm3754, %v3679, 0
    %v3819 = vsel %vm3754, %v3681, 0
    %v3822 = vsel %vm3754, %v3683, 0
    %v3825 = vsel %vm3754, %v3685, 0
    %v3828 = vsel %vm3754, %v3687, 0
    %v3831 = vsel %vm3754, %v3689, 0
    %v3834 = vsel %vm3754, %v3691, 0
    %v3837 = vsel %vm3754, %v3693, 0
    %v3840 = vsel %vm3754, %v3695, 0
    %v3843 = vsel %vm3754, %v3697, 0
    %v3846 = vsel %vm3754, %v3699, 0
    %v3849 = vsel %vm3754, %v3701, 0
    %3851 = vmatprep.subr.mxu0 %v3733
    %3852 = vmatpush1.msra.mxu0 %v3732
    %3853 = vmatprep.subr.mxu0 %v3731
    %3854 = vmatpush1.msra.mxu0 %v3730
    %3855 = vmatprep.subr.mxu0 %v3729
    %3856 = vmatpush1.msra.mxu0 %v3728
    %3857 = vmatprep.subr.mxu0 %v3727
    %3858 = vmatpush1.msra.mxu0 %v3726
    %3859 = vmatprep.subr.mxu0 %v3725
    %3860 = vmatpush1.msra.mxu0 %v3724
    %3861 = vmatprep.subr.mxu0 %v3723
    %3862 = vmatpush1.msra.mxu0 %v3722
    %3863 = vmatprep.subr.mxu0 %v3721
    %3864 = vmatpush1.msra.mxu0 %v3720
    %3865 = vmatprep.subr.mxu0 %v3719
    %3866 = vmatpush1.msra.mxu0 %v3718
    %3867 = vmatprep.subr.mxu0 %v3717
    %3868 = vmatpush1.msra.mxu0 %v3716
    %3869 = vmatprep.subr.mxu0 %v3715
    %3870 = vmatpush1.msra.mxu0 %v3714
    %3871 = vmatprep.subr.mxu0 %v3713
    %3872 = vmatpush1.msra.mxu0 %v3712
    %3873 = vmatprep.subr.mxu0 %v3711
    %3874 = vmatpush1.msra.mxu0 %v3710
    %3875 = vmatprep.subr.mxu0 %v3709
    %3876 = vmatpush1.msra.mxu0 %v3708
    %3877 = vmatprep.subr.mxu0 %v3707
    %3878 = vmatpush1.msra.mxu0 %v3706
    %3879 = vmatprep.subr.mxu0 %v3705
    %3880 = vmatpush1.msra.mxu0 %v3704
    %3881 = vmatprep.subr.mxu0 %v3703
    %3882 = vmatpush1.msra.mxu0 %v3702
    %3883 = vmatprep.subr.mxu0 0.0
    %3884 = vmatpush2.msra.mxu0 0.0
    %3885 = vmatprep.subr.mxu0 0.0
    %3886 = vmatpush2.msra.mxu0 0.0
    %3887 = vmatprep.subr.mxu0 0.0
    %3888 = vmatpush2.msra.mxu0 0.0
    %3889 = vmatprep.subr.mxu0 0.0
    %3890 = vmatpush2.msra.mxu0 0.0
    %3891 = vmatprep.subr.mxu0 0.0
    %3892 = vmatpush2.msra.mxu0 0.0
    %3893 = vmatprep.subr.mxu0 0.0
    %3894 = vmatpush2.msra.mxu0 0.0
    %3895 = vmatprep.subr.mxu0 0.0
    %3896 = vmatpush2.msra.mxu0 0.0
    %3897 = vmatprep.subr.mxu0 0.0
    %3898 = vmatpush2.msra.mxu0 0.0
    %3899 = vmatprep.subr.mxu0 0.0
    %3900 = vmatpush2.msra.mxu0 0.0
    %3901 = vmatprep.subr.mxu0 0.0
    %3902 = vmatpush2.msra.mxu0 0.0
    %3903 = vmatprep.subr.mxu0 0.0
    %3904 = vmatpush2.msra.mxu0 0.0
    %3905 = vmatprep.subr.mxu0 0.0
    %3906 = vmatpush2.msra.mxu0 0.0
    %3907 = vmatprep.subr.mxu0 %v3741
    %3908 = vmatpush2.msra.mxu0 %v3740
    %3909 = vmatprep.subr.mxu0 %v3739
    %3910 = vmatpush2.msra.mxu0 %v3738
    %3911 = vmatprep.subr.mxu0 %v3737
    %3912 = vmatpush2.msra.mxu0 %v3736
    %3913 = vmatprep.subr.mxu0 %v3735
    %3914 = vmatpush2.msra.mxu0 %v3734
    %3915 = vmatprep.mubr.f32.mxu0 %v3756
    %3916 = vmatmul.mubr.f32.gmra.mxu0 %v3638
    %v3917 = vpop.f32.mrf.mxu0
    %v3918 = vadd.f32 %v3747, %v3917
    %v3919 = vpop.f32.mrf.mxu0
    %v3920 = vadd.f32 %v3751, %v3919
    %3921 = vmatprep.mubr.f32.mxu0 %v3759
    %3922 = vmatmul.mubr.f32.gmra.mxu0 %v3640
    %v3923 = vpop.f32.mrf.mxu0
    %v3924 = vadd.f32 %v3747, %v3923
    %v3925 = vpop.f32.mrf.mxu0
    %v3926 = vadd.f32 %v3751, %v3925
    %3927 = vmatprep.mubr.f32.mxu0 %v3762
    %3928 = vmatmul.mubr.f32.gmra.mxu0 %v3642
    %v3929 = vpop.f32.mrf.mxu0
    %v3930 = vadd.f32 %v3747, %v3929
    %v3931 = vpop.f32.mrf.mxu0
    %v3932 = vadd.f32 %v3751, %v3931
    %3933 = vmatprep.mubr.f32.mxu0 %v3765
    %3934 = vmatmul.mubr.f32.gmra.mxu0 %v3644
    %v3935 = vpop.f32.mrf.mxu0
    %v3936 = vadd.f32 %v3747, %v3935
    %v3937 = vpop.f32.mrf.mxu0
    %v3938 = vadd.f32 %v3751, %v3937
    %3939 = vmatprep.mubr.f32.mxu0 %v3768
    %3940 = vmatmul.mubr.f32.gmra.mxu0 %v3646
    %v3941 = vpop.f32.mrf.mxu0
    %v3942 = vadd.f32 %v3747, %v3941
    %v3943 = vpop.f32.mrf.mxu0
    %v3944 = vadd.f32 %v3751, %v3943
    %3945 = vmatprep.mubr.f32.mxu0 %v3771
    %3946 = vmatmul.mubr.f32.gmra.mxu0 %v3648
    %v3947 = vpop.f32.mrf.mxu0
    %v3948 = vadd.f32 %v3747, %v3947
    %v3949 = vpop.f32.mrf.mxu0
    %v3950 = vadd.f32 %v3751, %v3949
    %3951 = vmatprep.mubr.f32.mxu0 %v3774
    %3952 = vmatmul.mubr.f32.gmra.mxu0 %v3650
    %v3953 = vpop.f32.mrf.mxu0
    %v3954 = vadd.f32 %v3747, %v3953
    %v3955 = vpop.f32.mrf.mxu0
    %v3956 = vadd.f32 %v3751, %v3955
    %3957 = vmatprep.mubr.f32.mxu0 %v3777
    %3958 = vmatmul.mubr.f32.gmra.mxu0 %v3652
    %v3959 = vpop.f32.mrf.mxu0
    %v3960 = vadd.f32 %v3747, %v3959
    %v3961 = vpop.f32.mrf.mxu0
    %v3962 = vadd.f32 %v3751, %v3961
    %3963 = vmatprep.mubr.f32.mxu0 %v3780
    %3964 = vmatmul.mubr.f32.gmra.mxu0 %v3654
    %v3965 = vpop.f32.mrf.mxu0
    %v3966 = vadd.f32 %v3747, %v3965
    %v3967 = vpop.f32.mrf.mxu0
    %v3968 = vadd.f32 %v3751, %v3967
    %3969 = vmatprep.mubr.f32.mxu0 %v3783
    %3970 = vmatmul.mubr.f32.gmra.mxu0 %v3656
    %v3971 = vpop.f32.mrf.mxu0
    %v3972 = vadd.f32 %v3747, %v3971
    %v3973 = vpop.f32.mrf.mxu0
    %v3974 = vadd.f32 %v3751, %v3973
    %3975 = vmatprep.mubr.f32.mxu0 %v3786
    %3976 = vmatmul.mubr.f32.gmra.mxu0 %v3658
    %v3977 = vpop.f32.mrf.mxu0
    %v3978 = vadd.f32 %v3747, %v3977
    %v3979 = vpop.f32.mrf.mxu0
    %v3980 = vadd.f32 %v3751, %v3979
    %3981 = vmatprep.mubr.f32.mxu0 %v3789
    %3982 = vmatmul.mubr.f32.gmra.mxu0 %v3660
    %v3983 = vpop.f32.mrf.mxu0
    %v3984 = vadd.f32 %v3747, %v3983
    %v3985 = vpop.f32.mrf.mxu0
    %v3986 = vadd.f32 %v3751, %v3985
    %3987 = vmatprep.mubr.f32.mxu0 %v3792
    %3988 = vmatmul.mubr.f32.gmra.mxu0 %v3662
    %v3989 = vpop.f32.mrf.mxu0
    %v3990 = vadd.f32 %v3747, %v3989
    %v3991 = vpop.f32.mrf.mxu0
    %v3992 = vadd.f32 %v3751, %v3991
    %3993 = vmatprep.mubr.f32.mxu0 %v3795
    %3994 = vmatmul.mubr.f32.gmra.mxu0 %v3664
    %v3995 = vpop.f32.mrf.mxu0
    %v3996 = vadd.f32 %v3747, %v3995
    %v3997 = vpop.f32.mrf.mxu0
    %v3998 = vadd.f32 %v3751, %v3997
    %3999 = vmatprep.mubr.f32.mxu0 %v3798
    %4000 = vmatmul.mubr.f32.gmra.mxu0 %v3666
    %v4001 = vpop.f32.mrf.mxu0
    %v4002 = vadd.f32 %v3747, %v4001
    %v4003 = vpop.f32.mrf.mxu0
    %v4004 = vadd.f32 %v3751, %v4003
    %4005 = vmatprep.mubr.f32.mxu0 %v3801
    %4006 = vmatmul.mubr.f32.gmra.mxu0 %v3668
    %v4007 = vpop.f32.mrf.mxu0
    %v4008 = vadd.f32 %v3747, %v4007
    %v4009 = vpop.f32.mrf.mxu0
    %v4010 = vadd.f32 %v3751, %v4009
    %4011 = vmatprep.mubr.f32.mxu0 %v3804
    %4012 = vmatmul.mubr.f32.gmra.mxu0 %v3670
    %v4013 = vpop.f32.mrf.mxu0
    %v4014 = vadd.f32 %v3747, %v4013
    %v4015 = vpop.f32.mrf.mxu0
    %v4016 = vadd.f32 %v3751, %v4015
    %4017 = vmatprep.mubr.f32.mxu0 %v3807
    %4018 = vmatmul.mubr.f32.gmra.mxu0 %v3672
    %v4019 = vpop.f32.mrf.mxu0
    %v4020 = vadd.f32 %v3747, %v4019
    %v4021 = vpop.f32.mrf.mxu0
    %v4022 = vadd.f32 %v3751, %v4021
    %4023 = vmatprep.mubr.f32.mxu0 %v3810
    %4024 = vmatmul.mubr.f32.gmra.mxu0 %v3674
    %v4025 = vpop.f32.mrf.mxu0
    %v4026 = vadd.f32 %v3747, %v4025
    %v4027 = vpop.f32.mrf.mxu0
    %v4028 = vadd.f32 %v3751, %v4027
    %4029 = vmatprep.mubr.f32.mxu0 %v3813
    %4030 = vmatmul.mubr.f32.gmra.mxu0 %v3676
    %v4031 = vpop.f32.mrf.mxu0
    %v4032 = vadd.f32 %v3747, %v4031
    %v4033 = vpop.f32.mrf.mxu0
    %v4034 = vadd.f32 %v3751, %v4033
    %4035 = vmatprep.mubr.f32.mxu0 %v3816
    %4036 = vmatmul.mubr.f32.gmra.mxu0 %v3678
    %v4037 = vpop.f32.mrf.mxu0
    %v4038 = vadd.f32 %v3747, %v4037
    %v4039 = vpop.f32.mrf.mxu0
    %v4040 = vadd.f32 %v3751, %v4039
    %4041 = vmatprep.mubr.f32.mxu0 %v3819
    %4042 = vmatmul.mubr.f32.gmra.mxu0 %v3680
    %v4043 = vpop.f32.mrf.mxu0
    %v4044 = vadd.f32 %v3747, %v4043
    %v4045 = vpop.f32.mrf.mxu0
    %v4046 = vadd.f32 %v3751, %v4045
    %4047 = vmatprep.mubr.f32.mxu0 %v3822
    %4048 = vmatmul.mubr.f32.gmra.mxu0 %v3682
    %v4049 = vpop.f32.mrf.mxu0
    %v4050 = vadd.f32 %v3747, %v4049
    %v4051 = vpop.f32.mrf.mxu0
    %v4052 = vadd.f32 %v3751, %v4051
    %4053 = vmatprep.mubr.f32.mxu0 %v3825
    %4054 = vmatmul.mubr.f32.gmra.mxu0 %v3684
    %v4055 = vpop.f32.mrf.mxu0
    %v4056 = vadd.f32 %v3747, %v4055
    %v4057 = vpop.f32.mrf.mxu0
    %v4058 = vadd.f32 %v3751, %v4057
    %4059 = vmatprep.mubr.f32.mxu0 %v3828
    %4060 = vmatmul.mubr.f32.gmra.mxu0 %v3686
    %v4061 = vpop.f32.mrf.mxu0
    %v4062 = vadd.f32 %v3747, %v4061
    %v4063 = vpop.f32.mrf.mxu0
    %v4064 = vadd.f32 %v3751, %v4063
    %4065 = vmatprep.mubr.f32.mxu0 %v3831
    %4066 = vmatmul.mubr.f32.gmra.mxu0 %v3688
    %v4067 = vpop.f32.mrf.mxu0
    %v4068 = vadd.f32 %v3747, %v4067
    %v4069 = vpop.f32.mrf.mxu0
    %v4070 = vadd.f32 %v3751, %v4069
    %4071 = vmatprep.mubr.f32.mxu0 %v3834
    %4072 = vmatmul.mubr.f32.gmra.mxu0 %v3690
    %v4073 = vpop.f32.mrf.mxu0
    %v4074 = vadd.f32 %v3747, %v4073
    %v4075 = vpop.f32.mrf.mxu0
    %v4076 = vadd.f32 %v3751, %v4075
    %4077 = vmatprep.mubr.f32.mxu0 %v3837
    %4078 = vmatmul.mubr.f32.gmra.mxu0 %v3692
    %v4079 = vpop.f32.mrf.mxu0
    %v4080 = vadd.f32 %v3747, %v4079
    %v4081 = vpop.f32.mrf.mxu0
    %v4082 = vadd.f32 %v3751, %v4081
    %4083 = vmatprep.mubr.f32.mxu0 %v3840
    %4084 = vmatmul.mubr.f32.gmra.mxu0 %v3694
    %v4085 = vpop.f32.mrf.mxu0
    %v4086 = vadd.f32 %v3747, %v4085
    %v4087 = vpop.f32.mrf.mxu0
    %v4088 = vadd.f32 %v3751, %v4087
    %4089 = vmatprep.mubr.f32.mxu0 %v3843
    %4090 = vmatmul.mubr.f32.gmra.mxu0 %v3696
    %v4091 = vpop.f32.mrf.mxu0
    %v4092 = vadd.f32 %v3747, %v4091
    %v4093 = vpop.f32.mrf.mxu0
    %v4094 = vadd.f32 %v3751, %v4093
    %4095 = vmatprep.mubr.f32.mxu0 %v3846
    %4096 = vmatmul.mubr.f32.gmra.mxu0 %v3698
    %v4097 = vpop.f32.mrf.mxu0
    %v4098 = vadd.f32 %v3747, %v4097
    %v4099 = vpop.f32.mrf.mxu0
    %v4100 = vadd.f32 %v3751, %v4099
    %4101 = vmatprep.mubr.f32.mxu0 %v3849
    %4102 = vmatmul.mubr.f32.gmra.mxu0 %v3700
    %v4103 = vpop.f32.mrf.mxu0
    %v4104 = vadd.f32 %v3747, %v4103
    %v4105 = vpop.f32.mrf.mxu0
    %v4106 = vadd.f32 %v3751, %v4105
    %4107 = vdwg.mxu0
    %v4108 = vld [vmem:[%s10] sm:$0x3]
    %v4110 = vlaneseq
    %v4111 = vshrl.u32 %v4110, 7
    %v4112 = vsub.s32 0, %v4111
    %v4113 = vrot.slane %v4108, %v4112
    %v4114 = vlaneseq
    %v4115 = vshrl.u32 %v4114, 7
    %v4116 = vsub.s32 1, %v4115
    %v4117 = vrot.slane %v4108, %v4116
    %vm4120 = vcmp.ge.f32.partialorder %v2809, %v4113
    %vm4121 = vcmp.ge.f32.partialorder %v2809, %v4117
    %vm4122 = vcmp.ge.f32.partialorder %v2810, %v4113
    %vm4123 = vcmp.ge.f32.partialorder %v2810, %v4117
    %vm4124 = vcmp.ge.f32.partialorder %v2811, %v4113
    %vm4125 = vcmp.ge.f32.partialorder %v2811, %v4117
    %vm4126 = vcmp.ge.f32.partialorder %v2812, %v4113
    %vm4127 = vcmp.ge.f32.partialorder %v2812, %v4117
    %vm4128 = vcmp.ge.f32.partialorder %v2813, %v4113
    %vm4129 = vcmp.ge.f32.partialorder %v2813, %v4117
    %vm4130 = vcmp.ge.f32.partialorder %v2814, %v4113
    %vm4131 = vcmp.ge.f32.partialorder %v2814, %v4117
    %vm4132 = vcmp.ge.f32.partialorder %v2815, %v4113
    %vm4133 = vcmp.ge.f32.partialorder %v2815, %v4117
    %vm4134 = vcmp.ge.f32.partialorder %v2816, %v4113
    %vm4135 = vcmp.ge.f32.partialorder %v2816, %v4117
    %vm4136 = vcmp.ge.f32.partialorder %v2817, %v4113
    %vm4137 = vcmp.ge.f32.partialorder %v2817, %v4117
    %vm4138 = vcmp.ge.f32.partialorder %v2818, %v4113
    %vm4139 = vcmp.ge.f32.partialorder %v2818, %v4117
    %vm4140 = vcmp.ge.f32.partialorder %v2819, %v4113
    %vm4141 = vcmp.ge.f32.partialorder %v2819, %v4117
    %vm4142 = vcmp.ge.f32.partialorder %v2820, %v4113
    %vm4143 = vcmp.ge.f32.partialorder %v2820, %v4117
    %vm4144 = vcmp.ge.f32.partialorder %v2821, %v4113
    %vm4145 = vcmp.ge.f32.partialorder %v2821, %v4117
    %vm4146 = vcmp.ge.f32.partialorder %v2822, %v4113
    %vm4147 = vcmp.ge.f32.partialorder %v2822, %v4117
    %vm4148 = vcmp.ge.f32.partialorder %v2823, %v4113
    %vm4149 = vcmp.ge.f32.partialorder %v2823, %v4117
    %vm4150 = vcmp.ge.f32.partialorder %v2824, %v4113
    %vm4151 = vcmp.ge.f32.partialorder %v2824, %v4117
    %vm4152 = vcmp.ge.f32.partialorder %v2825, %v4113
    %vm4153 = vcmp.ge.f32.partialorder %v2825, %v4117
    %vm4154 = vcmp.ge.f32.partialorder %v2826, %v4113
    %vm4155 = vcmp.ge.f32.partialorder %v2826, %v4117
    %vm4156 = vcmp.ge.f32.partialorder %v2827, %v4113
    %vm4157 = vcmp.ge.f32.partialorder %v2827, %v4117
    %vm4158 = vcmp.ge.f32.partialorder %v2828, %v4113
    %vm4159 = vcmp.ge.f32.partialorder %v2828, %v4117
    %vm4160 = vcmp.ge.f32.partialorder %v2829, %v4113
    %vm4161 = vcmp.ge.f32.partialorder %v2829, %v4117
    %vm4162 = vcmp.ge.f32.partialorder %v2830, %v4113
    %vm4163 = vcmp.ge.f32.partialorder %v2830, %v4117
    %vm4164 = vcmp.ge.f32.partialorder %v2831, %v4113
    %vm4165 = vcmp.ge.f32.partialorder %v2831, %v4117
    %vm4166 = vcmp.ge.f32.partialorder %v2832, %v4113
    %vm4167 = vcmp.ge.f32.partialorder %v2832, %v4117
    %vm4168 = vcmp.ge.f32.partialorder %v2833, %v4113
    %vm4169 = vcmp.ge.f32.partialorder %v2833, %v4117
    %vm4170 = vcmp.ge.f32.partialorder %v2834, %v4113
    %vm4171 = vcmp.ge.f32.partialorder %v2834, %v4117
    %vm4172 = vcmp.ge.f32.partialorder %v2835, %v4113
    %vm4173 = vcmp.ge.f32.partialorder %v2835, %v4117
    %vm4174 = vcmp.ge.f32.partialorder %v2836, %v4113
    %vm4175 = vcmp.ge.f32.partialorder %v2836, %v4117
    %vm4176 = vcmp.ge.f32.partialorder %v2837, %v4113
    %vm4177 = vcmp.ge.f32.partialorder %v2837, %v4117
    %vm4178 = vcmp.ge.f32.partialorder %v2838, %v4113
    %vm4179 = vcmp.ge.f32.partialorder %v2838, %v4117
    %vm4180 = vcmp.ge.f32.partialorder %v2839, %v4113
    %vm4181 = vcmp.ge.f32.partialorder %v2839, %v4117
    %vm4182 = vcmp.ge.f32.partialorder %v2840, %v4113
    %vm4183 = vcmp.ge.f32.partialorder %v2840, %v4117
    %v4184 = vsel %vm4120, 1, 0
    %v4185 = vsel %vm4121, 1, 0
    %v4186 = vsel %vm4122, 1, 0
    %v4187 = vsel %vm4123, 1, 0
    %v4188 = vsel %vm4124, 1, 0
    %v4189 = vsel %vm4125, 1, 0
    %v4190 = vsel %vm4126, 1, 0
    %v4191 = vsel %vm4127, 1, 0
    %v4192 = vsel %vm4128, 1, 0
    %v4193 = vsel %vm4129, 1, 0
    %v4194 = vsel %vm4130, 1, 0
    %v4195 = vsel %vm4131, 1, 0
    %v4196 = vsel %vm4132, 1, 0
    %v4197 = vsel %vm4133, 1, 0
    %v4198 = vsel %vm4134, 1, 0
    %v4199 = vsel %vm4135, 1, 0
    %v4200 = vsel %vm4136, 1, 0
    %v4201 = vsel %vm4137, 1, 0
    %v4202 = vsel %vm4138, 1, 0
    %v4203 = vsel %vm4139, 1, 0
    %v4204 = vsel %vm4140, 1, 0
    %v4205 = vsel %vm4141, 1, 0
    %v4206 = vsel %vm4142, 1, 0
    %v4207 = vsel %vm4143, 1, 0
    %v4208 = vsel %vm4144, 1, 0
    %v4209 = vsel %vm4145, 1, 0
    %v4210 = vsel %vm4146, 1, 0
    %v4211 = vsel %vm4147, 1, 0
    %v4212 = vsel %vm4148, 1, 0
    %v4213 = vsel %vm4149, 1, 0
    %v4214 = vsel %vm4150, 1, 0
    %v4215 = vsel %vm4151, 1, 0
    %v4216 = vsel %vm4152, 1, 0
    %v4217 = vsel %vm4153, 1, 0
    %v4218 = vsel %vm4154, 1, 0
    %v4219 = vsel %vm4155, 1, 0
    %v4220 = vsel %vm4156, 1, 0
    %v4221 = vsel %vm4157, 1, 0
    %v4222 = vsel %vm4158, 1, 0
    %v4223 = vsel %vm4159, 1, 0
    %v4224 = vsel %vm4160, 1, 0
    %v4225 = vsel %vm4161, 1, 0
    %v4226 = vsel %vm4162, 1, 0
    %v4227 = vsel %vm4163, 1, 0
    %v4228 = vsel %vm4164, 1, 0
    %v4229 = vsel %vm4165, 1, 0
    %v4230 = vsel %vm4166, 1, 0
    %v4231 = vsel %vm4167, 1, 0
    %v4232 = vsel %vm4168, 1, 0
    %v4233 = vsel %vm4169, 1, 0
    %v4234 = vsel %vm4170, 1, 0
    %v4235 = vsel %vm4171, 1, 0
    %v4236 = vsel %vm4172, 1, 0
    %v4237 = vsel %vm4173, 1, 0
    %v4238 = vsel %vm4174, 1, 0
    %v4239 = vsel %vm4175, 1, 0
    %v4240 = vsel %vm4176, 1, 0
    %v4241 = vsel %vm4177, 1, 0
    %v4242 = vsel %vm4178, 1, 0
    %v4243 = vsel %vm4179, 1, 0
    %v4244 = vsel %vm4180, 1, 0
    %v4245 = vsel %vm4181, 1, 0
    %v4246 = vsel %vm4182, 1, 0
    %v4247 = vsel %vm4183, 1, 0
    %v4248 = vcvt.s32.f32 %v4184
    %v4249 = vcvt.s32.f32 %v4185
    %v4250 = vcvt.s32.f32 %v4186
    %v4251 = vcvt.s32.f32 %v4187
    %v4252 = vcvt.s32.f32 %v4188
    %v4253 = vcvt.s32.f32 %v4189
    %v4254 = vcvt.s32.f32 %v4190
    %v4255 = vcvt.s32.f32 %v4191
    %v4256 = vcvt.s32.f32 %v4192
    %v4257 = vcvt.s32.f32 %v4193
    %v4258 = vcvt.s32.f32 %v4194
    %v4259 = vcvt.s32.f32 %v4195
    %v4260 = vcvt.s32.f32 %v4196
    %v4261 = vcvt.s32.f32 %v4197
    %v4262 = vcvt.s32.f32 %v4198
    %v4263 = vcvt.s32.f32 %v4199
    %v4264 = vcvt.s32.f32 %v4200
    %v4265 = vcvt.s32.f32 %v4201
    %v4266 = vcvt.s32.f32 %v4202
    %v4267 = vcvt.s32.f32 %v4203
    %v4268 = vcvt.s32.f32 %v4204
    %v4269 = vcvt.s32.f32 %v4205
    %v4270 = vcvt.s32.f32 %v4206
    %v4271 = vcvt.s32.f32 %v4207
    %v4272 = vcvt.s32.f32 %v4208
    %v4273 = vcvt.s32.f32 %v4209
    %v4274 = vcvt.s32.f32 %v4210
    %v4275 = vcvt.s32.f32 %v4211
    %v4276 = vcvt.s32.f32 %v4212
    %v4277 = vcvt.s32.f32 %v4213
    %v4278 = vcvt.s32.f32 %v4214
    %v4279 = vcvt.s32.f32 %v4215
    %v4280 = vcvt.s32.f32 %v4216
    %v4281 = vcvt.s32.f32 %v4217
    %v4282 = vcvt.s32.f32 %v4218
    %v4283 = vcvt.s32.f32 %v4219
    %v4284 = vcvt.s32.f32 %v4220
    %v4285 = vcvt.s32.f32 %v4221
    %v4286 = vcvt.s32.f32 %v4222
    %v4287 = vcvt.s32.f32 %v4223
    %v4288 = vcvt.s32.f32 %v4224
    %v4289 = vcvt.s32.f32 %v4225
    %v4290 = vcvt.s32.f32 %v4226
    %v4291 = vcvt.s32.f32 %v4227
    %v4292 = vcvt.s32.f32 %v4228
    %v4293 = vcvt.s32.f32 %v4229
    %v4294 = vcvt.s32.f32 %v4230
    %v4295 = vcvt.s32.f32 %v4231
    %v4296 = vcvt.s32.f32 %v4232
    %v4297 = vcvt.s32.f32 %v4233
    %v4298 = vcvt.s32.f32 %v4234
    %v4299 = vcvt.s32.f32 %v4235
    %v4300 = vcvt.s32.f32 %v4236
    %v4301 = vcvt.s32.f32 %v4237
    %v4302 = vcvt.s32.f32 %v4238
    %v4303 = vcvt.s32.f32 %v4239
    %v4304 = vcvt.s32.f32 %v4240
    %v4305 = vcvt.s32.f32 %v4241
    %v4306 = vcvt.s32.f32 %v4242
    %v4307 = vcvt.s32.f32 %v4243
    %v4308 = vcvt.s32.f32 %v4244
    %v4309 = vcvt.s32.f32 %v4245
    %v4310 = vcvt.s32.f32 %v4246
    %v4311 = vcvt.s32.f32 %v4247
    %v4312 = vmul.f32 %v3918, %v4248
    %v4313 = vmul.f32 %v3920, %v4249
    %v4314 = vmul.f32 %v3924, %v4250
    %v4315 = vmul.f32 %v3926, %v4251
    %v4316 = vmul.f32 %v3930, %v4252
    %v4317 = vmul.f32 %v3932, %v4253
    %v4318 = vmul.f32 %v3936, %v4254
    %v4319 = vmul.f32 %v3938, %v4255
    %v4320 = vmul.f32 %v3942, %v4256
    %v4321 = vmul.f32 %v3944, %v4257
    %v4322 = vmul.f32 %v3948, %v4258
    %v4323 = vmul.f32 %v3950, %v4259
    %v4324 = vmul.f32 %v3954, %v4260
    %v4325 = vmul.f32 %v3956, %v4261
    %v4326 = vmul.f32 %v3960, %v4262
    %v4327 = vmul.f32 %v3962, %v4263
    %v4328 = vmul.f32 %v3966, %v4264
    %v4329 = vmul.f32 %v3968, %v4265
    %v4330 = vmul.f32 %v3972, %v4266
    %v4331 = vmul.f32 %v3974, %v4267
    %v4332 = vmul.f32 %v3978, %v4268
    %v4333 = vmul.f32 %v3980, %v4269
    %v4334 = vmul.f32 %v3984, %v4270
    %v4335 = vmul.f32 %v3986, %v4271
    %v4336 = vmul.f32 %v3990, %v4272
    %v4337 = vmul.f32 %v3992, %v4273
    %v4338 = vmul.f32 %v3996, %v4274
    %v4339 = vmul.f32 %v3998, %v4275
    %v4340 = vmul.f32 %v4002, %v4276
    %v4341 = vmul.f32 %v4004, %v4277
    %v4342 = vmul.f32 %v4008, %v4278
    %v4343 = vmul.f32 %v4010, %v4279
    %v4344 = vmul.f32 %v4014, %v4280
    %v4345 = vmul.f32 %v4016, %v4281
    %v4346 = vmul.f32 %v4020, %v4282
    %v4347 = vmul.f32 %v4022, %v4283
    %v4348 = vmul.f32 %v4026, %v4284
    %v4349 = vmul.f32 %v4028, %v4285
    %v4350 = vmul.f32 %v4032, %v4286
    %v4351 = vmul.f32 %v4034, %v4287
    %v4352 = vmul.f32 %v4038, %v4288
    %v4353 = vmul.f32 %v4040, %v4289
    %v4354 = vmul.f32 %v4044, %v4290
    %v4355 = vmul.f32 %v4046, %v4291
    %v4356 = vmul.f32 %v4050, %v4292
    %v4357 = vmul.f32 %v4052, %v4293
    %v4358 = vmul.f32 %v4056, %v4294
    %v4359 = vmul.f32 %v4058, %v4295
    %v4360 = vmul.f32 %v4062, %v4296
    %v4361 = vmul.f32 %v4064, %v4297
    %v4362 = vmul.f32 %v4068, %v4298
    %v4363 = vmul.f32 %v4070, %v4299
    %v4364 = vmul.f32 %v4074, %v4300
    %v4365 = vmul.f32 %v4076, %v4301
    %v4366 = vmul.f32 %v4080, %v4302
    %v4367 = vmul.f32 %v4082, %v4303
    %v4368 = vmul.f32 %v4086, %v4304
    %v4369 = vmul.f32 %v4088, %v4305
    %v4370 = vmul.f32 %v4092, %v4306
    %v4371 = vmul.f32 %v4094, %v4307
    %v4372 = vmul.f32 %v4098, %v4308
    %v4373 = vmul.f32 %v4100, %v4309
    %v4374 = vmul.f32 %v4104, %v4310
    %v4375 = vmul.f32 %v4106, %v4311
    %4376 = vmatprep.subr.mxu0 %v4343
    %4377 = vmatpush1.msra.mxu0 %v4342
    %4378 = vmatprep.subr.mxu0 %v4341
    %4379 = vmatpush1.msra.mxu0 %v4340
    %4380 = vmatprep.subr.mxu0 %v4339
    %4381 = vmatpush1.msra.mxu0 %v4338
    %4382 = vmatprep.subr.mxu0 %v4337
    %4383 = vmatpush1.msra.mxu0 %v4336
    %4384 = vmatprep.subr.mxu0 %v4335
    %4385 = vmatpush1.msra.mxu0 %v4334
    %4386 = vmatprep.subr.mxu0 %v4333
    %4387 = vmatpush1.msra.mxu0 %v4332
    %4388 = vmatprep.subr.mxu0 %v4331
    %4389 = vmatpush1.msra.mxu0 %v4330
    %4390 = vmatprep.subr.mxu0 %v4329
    %4391 = vmatpush1.msra.mxu0 %v4328
    %4392 = vmatprep.subr.mxu0 %v4327
    %4393 = vmatpush1.msra.mxu0 %v4326
    %4394 = vmatprep.subr.mxu0 %v4325
    %4395 = vmatpush1.msra.mxu0 %v4324
    %4396 = vmatprep.subr.mxu0 %v4323
    %4397 = vmatpush1.msra.mxu0 %v4322
    %4398 = vmatprep.subr.mxu0 %v4321
    %4399 = vmatpush1.msra.mxu0 %v4320
    %4400 = vmatprep.subr.mxu0 %v4319
    %4401 = vmatpush1.msra.mxu0 %v4318
    %4402 = vmatprep.subr.mxu0 %v4317
    %4403 = vmatpush1.msra.mxu0 %v4316
    %4404 = vmatprep.subr.mxu0 %v4315
    %4405 = vmatpush1.msra.mxu0 %v4314
    %4406 = vmatprep.subr.mxu0 %v4313
    %4407 = vmatpush1.msra.mxu0 %v4312
    %4408 = vmatprep.subr.mxu0 %v4375
    %4409 = vmatpush2.msra.mxu0 %v4374
    %4410 = vmatprep.subr.mxu0 %v4373
    %4411 = vmatpush2.msra.mxu0 %v4372
    %4412 = vmatprep.subr.mxu0 %v4371
    %4413 = vmatpush2.msra.mxu0 %v4370
    %4414 = vmatprep.subr.mxu0 %v4369
    %4415 = vmatpush2.msra.mxu0 %v4368
    %4416 = vmatprep.subr.mxu0 %v4367
    %4417 = vmatpush2.msra.mxu0 %v4366
    %4418 = vmatprep.subr.mxu0 %v4365
    %4419 = vmatpush2.msra.mxu0 %v4364
    %4420 = vmatprep.subr.mxu0 %v4363
    %4421 = vmatpush2.msra.mxu0 %v4362
    %4422 = vmatprep.subr.mxu0 %v4361
    %4423 = vmatpush2.msra.mxu0 %v4360
    %4424 = vmatprep.subr.mxu0 %v4359
    %4425 = vmatpush2.msra.mxu0 %v4358
    %4426 = vmatprep.subr.mxu0 %v4357
    %4427 = vmatpush2.msra.mxu0 %v4356
    %4428 = vmatprep.subr.mxu0 %v4355
    %4429 = vmatpush2.msra.mxu0 %v4354
    %4430 = vmatprep.subr.mxu0 %v4353
    %4431 = vmatpush2.msra.mxu0 %v4352
    %4432 = vmatprep.subr.mxu0 %v4351
    %4433 = vmatpush2.msra.mxu0 %v4350
    %4434 = vmatprep.subr.mxu0 %v4349
    %4435 = vmatpush2.msra.mxu0 %v4348
    %4436 = vmatprep.subr.mxu0 %v4347
    %4437 = vmatpush2.msra.mxu0 %v4346
    %4438 = vmatprep.subr.mxu0 %v4345
    %4439 = vmatpush2.msra.mxu0 %v4344
    %4440 = vmatprep.mubr.f32.mxu0 %v545
    %4441 = vmatmul.mubr.f32.gmra.mxu0 %v544
    %v4442 = vpop.f32.mrf.mxu0
    %v4443 = vadd.f32 0.0, %v4442
    %v4444 = vpop.f32.mrf.mxu0
    %v4445 = vadd.f32 0.0, %v4444
    %4446 = vmatprep.mubr.f32.mxu0 %v547
    %4447 = vmatmul.mubr.f32.gmra.mxu0 %v546
    %v4448 = vpop.f32.mrf.mxu0
    %v4449 = vadd.f32 0.0, %v4448
    %v4450 = vpop.f32.mrf.mxu0
    %v4451 = vadd.f32 0.0, %v4450
    %4452 = vmatprep.mubr.f32.mxu0 %v549
    %4453 = vmatmul.mubr.f32.gmra.mxu0 %v548
    %v4454 = vpop.f32.mrf.mxu0
    %v4455 = vadd.f32 0.0, %v4454
    %v4456 = vpop.f32.mrf.mxu0
    %v4457 = vadd.f32 0.0, %v4456
    %4458 = vmatprep.mubr.f32.mxu0 %v551
    %4459 = vmatmul.mubr.f32.gmra.mxu0 %v550
    %v4460 = vpop.f32.mrf.mxu0
    %v4461 = vadd.f32 0.0, %v4460
    %v4462 = vpop.f32.mrf.mxu0
    %v4463 = vadd.f32 0.0, %v4462
    %4464 = vmatprep.mubr.f32.mxu0 %v553
    %4465 = vmatmul.mubr.f32.gmra.mxu0 %v552
    %v4466 = vpop.f32.mrf.mxu0
    %v4467 = vadd.f32 0.0, %v4466
    %v4468 = vpop.f32.mrf.mxu0
    %v4469 = vadd.f32 0.0, %v4468
    %4470 = vmatprep.mubr.f32.mxu0 %v555
    %4471 = vmatmul.mubr.f32.gmra.mxu0 %v554
    %v4472 = vpop.f32.mrf.mxu0
    %v4473 = vadd.f32 0.0, %v4472
    %v4474 = vpop.f32.mrf.mxu0
    %v4475 = vadd.f32 0.0, %v4474
    %4476 = vmatprep.mubr.f32.mxu0 %v557
    %4477 = vmatmul.mubr.f32.gmra.mxu0 %v556
    %v4478 = vpop.f32.mrf.mxu0
    %v4479 = vadd.f32 0.0, %v4478
    %v4480 = vpop.f32.mrf.mxu0
    %v4481 = vadd.f32 0.0, %v4480
    %4482 = vmatprep.mubr.f32.mxu0 %v559
    %4483 = vmatmul.mubr.f32.gmra.mxu0 %v558
    %v4484 = vpop.f32.mrf.mxu0
    %v4485 = vadd.f32 0.0, %v4484
    %v4486 = vpop.f32.mrf.mxu0
    %v4487 = vadd.f32 0.0, %v4486
    %4488 = vdwg.mxu0
    %vm4489 = vcmp.eq.s32.totalorder %v496, %v110
    %vm4490 = vcmp.eq.s32.totalorder %v497, %v110
    %vm4491 = vcmp.eq.s32.totalorder %v498, %v110
    %vm4492 = vcmp.eq.s32.totalorder %v499, %v110
    %vm4493 = vcmp.eq.s32.totalorder %v500, %v110
    %vm4494 = vcmp.eq.s32.totalorder %v501, %v110
    %vm4495 = vcmp.eq.s32.totalorder %v502, %v110
    %vm4496 = vcmp.eq.s32.totalorder %v503, %v110
    %v4497 = vsel %vm4489, 1, 0
    %v4498 = vsel %vm4490, 1, 0
    %v4499 = vsel %vm4491, 1, 0
    %v4500 = vsel %vm4492, 1, 0
    %v4501 = vsel %vm4493, 1, 0
    %v4502 = vsel %vm4494, 1, 0
    %v4503 = vsel %vm4495, 1, 0
    %v4504 = vsel %vm4496, 1, 0
    %v4505 = vcvt.s32.f32 %v4497
    %v4506 = vcvt.s32.f32 %v4498
    %v4507 = vcvt.s32.f32 %v4499
    %v4508 = vcvt.s32.f32 %v4500
    %v4509 = vcvt.s32.f32 %v4501
    %v4510 = vcvt.s32.f32 %v4502
    %v4511 = vcvt.s32.f32 %v4503
    %v4512 = vcvt.s32.f32 %v4504
    %4513 = vmatprep.subr.mxu0 0.0
    %4514 = vmatpush1.msra.mxu0 %v286
    %4515 = vmatprep.subr.mxu0 0.0
    %4516 = vmatpush1.msra.mxu0 %v285
    %4517 = vmatprep.subr.mxu0 0.0
    %4518 = vmatpush1.msra.mxu0 %v284
    %4519 = vmatprep.subr.mxu0 0.0
    %4520 = vmatpush1.msra.mxu0 %v283
    %4521 = vmatprep.subr.mxu0 0.0
    %4522 = vmatpush1.msra.mxu0 %v282
    %4523 = vmatprep.subr.mxu0 0.0
    %4524 = vmatpush1.msra.mxu0 %v281
    %4525 = vmatprep.subr.mxu0 0.0
    %4526 = vmatpush1.msra.mxu0 %v280
    %4527 = vmatprep.subr.mxu0 0.0
    %4528 = vmatpush1.msra.mxu0 %v279
    %4529 = vmatprep.subr.mxu0 0.0
    %4530 = vmatpush1.msra.mxu0 %v278
    %4531 = vmatprep.subr.mxu0 0.0
    %4532 = vmatpush1.msra.mxu0 %v277
    %4533 = vmatprep.subr.mxu0 0.0
    %4534 = vmatpush1.msra.mxu0 %v276
    %4535 = vmatprep.subr.mxu0 0.0
    %4536 = vmatpush1.msra.mxu0 %v275
    %4537 = vmatprep.subr.mxu0 0.0
    %4538 = vmatpush1.msra.mxu0 %v274
    %4539 = vmatprep.subr.mxu0 0.0
    %4540 = vmatpush1.msra.mxu0 %v273
    %4541 = vmatprep.subr.mxu0 0.0
    %4542 = vmatpush1.msra.mxu0 %v272
    %4543 = vmatprep.subr.mxu0 0.0
    %4544 = vmatpush1.msra.mxu0 %v271
    %4545 = vmatprep.subr.mxu0 0.0
    %4546 = vmatpush2.msra.mxu0 %v302
    %4547 = vmatprep.subr.mxu0 0.0
    %4548 = vmatpush2.msra.mxu0 %v301
    %4549 = vmatprep.subr.mxu0 0.0
    %4550 = vmatpush2.msra.mxu0 %v300
    %4551 = vmatprep.subr.mxu0 0.0
    %4552 = vmatpush2.msra.mxu0 %v299
    %4553 = vmatprep.subr.mxu0 0.0
    %4554 = vmatpush2.msra.mxu0 %v298
    %4555 = vmatprep.subr.mxu0 0.0
    %4556 = vmatpush2.msra.mxu0 %v297
    %4557 = vmatprep.subr.mxu0 0.0
    %4558 = vmatpush2.msra.mxu0 %v296
    %4559 = vmatprep.subr.mxu0 0.0
    %4560 = vmatpush2.msra.mxu0 %v295
    %4561 = vmatprep.subr.mxu0 0.0
    %4562 = vmatpush2.msra.mxu0 %v294
    %4563 = vmatprep.subr.mxu0 0.0
    %4564 = vmatpush2.msra.mxu0 %v293
    %4565 = vmatprep.subr.mxu0 0.0
    %4566 = vmatpush2.msra.mxu0 %v292
    %4567 = vmatprep.subr.mxu0 0.0
    %4568 = vmatpush2.msra.mxu0 %v291
    %4569 = vmatprep.subr.mxu0 0.0
    %4570 = vmatpush2.msra.mxu0 %v290
    %4571 = vmatprep.subr.mxu0 0.0
    %4572 = vmatpush2.msra.mxu0 %v289
    %4573 = vmatprep.subr.mxu0 0.0
    %4574 = vmatpush2.msra.mxu0 %v288
    %4575 = vmatprep.subr.mxu0 0.0
    %4576 = vmatpush2.msra.mxu0 %v287
    %4577 = vmatprep.mubr.f32.mxu0 %v545
    %4578 = vmatmul.mubr.f32.gmra.mxu0 %v544
    %v4579 = vpop.f32.mrf.mxu0
    %v4580 = vadd.f32 %v4505, %v4579
    %v4581 = vpop.f32.mrf.mxu0
    %4582 = vmatprep.mubr.f32.mxu0 %v547
    %4583 = vmatmul.mubr.f32.gmra.mxu0 %v546
    %v4584 = vpop.f32.mrf.mxu0
    %v4585 = vadd.f32 %v4506, %v4584
    %v4586 = vpop.f32.mrf.mxu0
    %4587 = vmatprep.mubr.f32.mxu0 %v549
    %4588 = vmatmul.mubr.f32.gmra.mxu0 %v548
    %v4589 = vpop.f32.mrf.mxu0
    %v4590 = vadd.f32 %v4507, %v4589
    %v4591 = vpop.f32.mrf.mxu0
    %4592 = vmatprep.mubr.f32.mxu0 %v551
    %4593 = vmatmul.mubr.f32.gmra.mxu0 %v550
    %v4594 = vpop.f32.mrf.mxu0
    %v4595 = vadd.f32 %v4508, %v4594
    %v4596 = vpop.f32.mrf.mxu0
    %4597 = vmatprep.mubr.f32.mxu0 %v553
    %4598 = vmatmul.mubr.f32.gmra.mxu0 %v552
    %v4599 = vpop.f32.mrf.mxu0
    %v4600 = vadd.f32 %v4509, %v4599
    %v4601 = vpop.f32.mrf.mxu0
    %4602 = vmatprep.mubr.f32.mxu0 %v555
    %4603 = vmatmul.mubr.f32.gmra.mxu0 %v554
    %v4604 = vpop.f32.mrf.mxu0
    %v4605 = vadd.f32 %v4510, %v4604
    %v4606 = vpop.f32.mrf.mxu0
    %4607 = vmatprep.mubr.f32.mxu0 %v557
    %4608 = vmatmul.mubr.f32.gmra.mxu0 %v556
    %v4609 = vpop.f32.mrf.mxu0
    %v4610 = vadd.f32 %v4511, %v4609
    %v4611 = vpop.f32.mrf.mxu0
    %4612 = vmatprep.mubr.f32.mxu0 %v559
    %4613 = vmatmul.mubr.f32.gmra.mxu0 %v558
    %v4614 = vpop.f32.mrf.mxu0
    %v4615 = vadd.f32 %v4512, %v4614
    %v4616 = vpop.f32.mrf.mxu0
    %4617 = vdwg.mxu0
    %v4618 = vsel %vm560, %v4580, 0.0
    %4619 = vadd.xlane.f32.xlu0 %v4618
    %v4620 = vpop.xlane.xlu0 %4619
    %v4621 = vsel %vm560, %v4585, 0.0
    %4622 = vadd.xlane.f32.xlu0 %v4621
    %v4623 = vpop.xlane.xlu0 %4622
    %v4624 = vsel %vm560, %v4590, 0.0
    %4625 = vadd.xlane.f32.xlu0 %v4624
    %v4626 = vpop.xlane.xlu0 %4625
    %v4627 = vsel %vm560, %v4595, 0.0
    %4628 = vadd.xlane.f32.xlu0 %v4627
    %v4629 = vpop.xlane.xlu0 %4628
    %v4630 = vsel %vm560, %v4600, 0.0
    %4631 = vadd.xlane.f32.xlu0 %v4630
    %v4632 = vpop.xlane.xlu0 %4631
    %v4633 = vsel %vm560, %v4605, 0.0
    %4634 = vadd.xlane.f32.xlu0 %v4633
    %v4635 = vpop.xlane.xlu0 %4634
    %v4636 = vsel %vm560, %v4610, 0.0
    %4637 = vadd.xlane.f32.xlu0 %v4636
    %v4638 = vpop.xlane.xlu0 %4637
    %v4639 = vsel %vm560, %v4615, 0.0
    %4640 = vadd.xlane.f32.xlu0 %v4639
    %v4641 = vpop.xlane.xlu0 %4640
    %vm4642 = vcmp.gt.f32.partialorder %v4620, 0.0
    %vm4643 = vcmp.gt.f32.partialorder %v4623, 0.0
    %vm4644 = vcmp.gt.f32.partialorder %v4626, 0.0
    %vm4645 = vcmp.gt.f32.partialorder %v4629, 0.0
    %vm4646 = vcmp.gt.f32.partialorder %v4632, 0.0
    %vm4647 = vcmp.gt.f32.partialorder %v4635, 0.0
    %vm4648 = vcmp.gt.f32.partialorder %v4638, 0.0
    %vm4649 = vcmp.gt.f32.partialorder %v4641, 0.0
    %v4650 = vrsqrt.pop %v4620
    %v4651 = vrsqrt.pop %v4623
    %v4652 = vrsqrt.pop %v4626
    %v4653 = vrsqrt.pop %v4629
    %v4654 = vrsqrt.pop %v4632
    %v4655 = vrsqrt.pop %v4635
    %v4656 = vrsqrt.pop %v4638
    %v4657 = vrsqrt.pop %v4641
    %v4658 = vsel %vm4642, %v4650, 0.0
    %v4659 = vsel %vm4643, %v4651, 0.0
    %v4660 = vsel %vm4644, %v4652, 0.0
    %v4661 = vsel %vm4645, %v4653, 0.0
    %v4662 = vsel %vm4646, %v4654, 0.0
    %v4663 = vsel %vm4647, %v4655, 0.0
    %v4664 = vsel %vm4648, %v4656, 0.0
    %v4665 = vsel %vm4649, %v4657, 0.0
    %v4666 = vld [vmem:[%s11] sm:$0x7]
    %v4667 = vld [vmem:[%s12] sm:$0xff]
    %v4668 = vld [vmem:[%s12 + $0x8] sm:$0xff]
    %v4669 = vld [vmem:[%s12 + $0x10] sm:$0xff]
    %v4670 = vld [vmem:[%s12 + $0x18] sm:$0xff]
    %v4671 = vld [vmem:[%s12 + $0x20] sm:$0xff]
    %v4672 = vld [vmem:[%s12 + $0x28] sm:$0xff]
    %v4673 = vld [vmem:[%s12 + $0x30] sm:$0xff]
    %v4674 = vld [vmem:[%s12 + $0x38] sm:$0xff]
    %v4675 = vld [vmem:[%s12 + $0x40] sm:$0xff]
    %v4676 = vld [vmem:[%s12 + $0x48] sm:$0xff]
    %v4677 = vld [vmem:[%s12 + $0x50] sm:$0xff]
    %v4678 = vld [vmem:[%s12 + $0x58] sm:$0xff]
    %v4679 = vld [vmem:[%s12 + $0x60] sm:$0xff]
    %v4680 = vld [vmem:[%s12 + $0x68] sm:$0xff]
    %v4681 = vld [vmem:[%s12 + $0x70] sm:$0xff]
    %v4682 = vld [vmem:[%s12 + $0x78] sm:$0xff]
    %v4683 = vld [vmem:[%s12 + $0x80] sm:$0xff]
    %v4684 = vld [vmem:[%s12 + $0x88] sm:$0xff]
    %v4685 = vld [vmem:[%s12 + $0x90] sm:$0xff]
    %v4686 = vld [vmem:[%s12 + $0x98] sm:$0xff]
    %v4688 = vsel %vm3754, %v4445, 0
    %v4691 = vsel %vm3754, %v4451, 0
    %v4694 = vsel %vm3754, %v4457, 0
    %v4697 = vsel %vm3754, %v4463, 0
    %v4700 = vsel %vm3754, %v4469, 0
    %v4703 = vsel %vm3754, %v4475, 0
    %v4706 = vsel %vm3754, %v4481, 0
    %v4709 = vsel %vm3754, %v4487, 0
    %4711 = vmatprep.subr.mxu0 0.0
    %4712 = vmatpush1.msra.mxu0 %v4682
    %4713 = vmatprep.subr.mxu0 0.0
    %4714 = vmatpush1.msra.mxu0 %v4681
    %4715 = vmatprep.subr.mxu0 0.0
    %4716 = vmatpush1.msra.mxu0 %v4680
    %4717 = vmatprep.subr.mxu0 0.0
    %4718 = vmatpush1.msra.mxu0 %v4679
    %4719 = vmatprep.subr.mxu0 0.0
    %4720 = vmatpush1.msra.mxu0 %v4678
    %4721 = vmatprep.subr.mxu0 0.0
    %4722 = vmatpush1.msra.mxu0 %v4677
    %4723 = vmatprep.subr.mxu0 0.0
    %4724 = vmatpush1.msra.mxu0 %v4676
    %4725 = vmatprep.subr.mxu0 0.0
    %4726 = vmatpush1.msra.mxu0 %v4675
    %4727 = vmatprep.subr.mxu0 0.0
    %4728 = vmatpush1.msra.mxu0 %v4674
    %4729 = vmatprep.subr.mxu0 0.0
    %4730 = vmatpush1.msra.mxu0 %v4673
    %4731 = vmatprep.subr.mxu0 0.0
    %4732 = vmatpush1.msra.mxu0 %v4672
    %4733 = vmatprep.subr.mxu0 0.0
    %4734 = vmatpush1.msra.mxu0 %v4671
    %4735 = vmatprep.subr.mxu0 0.0
    %4736 = vmatpush1.msra.mxu0 %v4670
    %4737 = vmatprep.subr.mxu0 0.0
    %4738 = vmatpush1.msra.mxu0 %v4669
    %4739 = vmatprep.subr.mxu0 0.0
    %4740 = vmatpush1.msra.mxu0 %v4668
    %4741 = vmatprep.subr.mxu0 0.0
    %4742 = vmatpush1.msra.mxu0 %v4667
    %4743 = vmatprep.subr.mxu0 0.0
    %4744 = vmatpush2.msra.mxu0 0.0
    %4745 = vmatprep.subr.mxu0 0.0
    %4746 = vmatpush2.msra.mxu0 0.0
    %4747 = vmatprep.subr.mxu0 0.0
    %4748 = vmatpush2.msra.mxu0 0.0
    %4749 = vmatprep.subr.mxu0 0.0
    %4750 = vmatpush2.msra.mxu0 0.0
    %4751 = vmatprep.subr.mxu0 0.0
    %4752 = vmatpush2.msra.mxu0 0.0
    %4753 = vmatprep.subr.mxu0 0.0
    %4754 = vmatpush2.msra.mxu0 0.0
    %4755 = vmatprep.subr.mxu0 0.0
    %4756 = vmatpush2.msra.mxu0 0.0
    %4757 = vmatprep.subr.mxu0 0.0
    %4758 = vmatpush2.msra.mxu0 0.0
    %4759 = vmatprep.subr.mxu0 0.0
    %4760 = vmatpush2.msra.mxu0 0.0
    %4761 = vmatprep.subr.mxu0 0.0
    %4762 = vmatpush2.msra.mxu0 0.0
    %4763 = vmatprep.subr.mxu0 0.0
    %4764 = vmatpush2.msra.mxu0 0.0
    %4765 = vmatprep.subr.mxu0 0.0
    %4766 = vmatpush2.msra.mxu0 0.0
    %4767 = vmatprep.subr.mxu0 0.0
    %4768 = vmatpush2.msra.mxu0 %v4686
    %4769 = vmatprep.subr.mxu0 0.0
    %4770 = vmatpush2.msra.mxu0 %v4685
    %4771 = vmatprep.subr.mxu0 0.0
    %4772 = vmatpush2.msra.mxu0 %v4684
    %4773 = vmatprep.subr.mxu0 0.0
    %4774 = vmatpush2.msra.mxu0 %v4683
    %4775 = vmatprep.mubr.f32.mxu0 %v4688
    %4776 = vmatmul.mubr.f32.gmra.mxu0 %v4443
    %v4777 = vpop.f32.mrf.mxu0
    %v4778 = vadd.f32 0.0, %v4777
    %v4779 = vpop.f32.mrf.mxu0
    %4780 = vmatprep.mubr.f32.mxu0 %v4691
    %4781 = vmatmul.mubr.f32.gmra.mxu0 %v4449
    %v4782 = vpop.f32.mrf.mxu0
    %v4783 = vadd.f32 0.0, %v4782
    %v4784 = vpop.f32.mrf.mxu0
    %4785 = vmatprep.mubr.f32.mxu0 %v4694
    %4786 = vmatmul.mubr.f32.gmra.mxu0 %v4455
    %v4787 = vpop.f32.mrf.mxu0
    %v4788 = vadd.f32 0.0, %v4787
    %v4789 = vpop.f32.mrf.mxu0
    %4790 = vmatprep.mubr.f32.mxu0 %v4697
    %4791 = vmatmul.mubr.f32.gmra.mxu0 %v4461
    %v4792 = vpop.f32.mrf.mxu0
    %v4793 = vadd.f32 0.0, %v4792
    %v4794 = vpop.f32.mrf.mxu0
    %4795 = vmatprep.mubr.f32.mxu0 %v4700
    %4796 = vmatmul.mubr.f32.gmra.mxu0 %v4467
    %v4797 = vpop.f32.mrf.mxu0
    %v4798 = vadd.f32 0.0, %v4797
    %v4799 = vpop.f32.mrf.mxu0
    %4800 = vmatprep.mubr.f32.mxu0 %v4703
    %4801 = vmatmul.mubr.f32.gmra.mxu0 %v4473
    %v4802 = vpop.f32.mrf.mxu0
    %v4803 = vadd.f32 0.0, %v4802
    %v4804 = vpop.f32.mrf.mxu0
    %4805 = vmatprep.mubr.f32.mxu0 %v4706
    %4806 = vmatmul.mubr.f32.gmra.mxu0 %v4479
    %v4807 = vpop.f32.mrf.mxu0
    %v4808 = vadd.f32 0.0, %v4807
    %v4809 = vpop.f32.mrf.mxu0
    %4810 = vmatprep.mubr.f32.mxu0 %v4709
    %4811 = vmatmul.mubr.f32.gmra.mxu0 %v4485
    %v4812 = vpop.f32.mrf.mxu0
    %v4813 = vadd.f32 0.0, %v4812
    %v4814 = vpop.f32.mrf.mxu0
    %4815 = vdwg.mxu0
    %v4817 = vsel %vm2198, %v60, 0
    %v4820 = vsel %vm2198, %v61, 0
    %v4823 = vsel %vm2198, %v62, 0
    %v4826 = vsel %vm2198, %v63, 0
    %v4829 = vsel %vm2198, %v64, 0
    %v4832 = vsel %vm2198, %v65, 0
    %v4835 = vsel %vm2198, %v66, 0
    %v4838 = vsel %vm2198, %v67, 0
    %v4841 = vsel %vm2941, %v4666, 0
    %4843 = vmatprep.subr.mxu0 0.0
    %4844 = vmatpush1.msra.mxu0 0.0
    %4845 = vmatprep.subr.mxu0 0.0
    %4846 = vmatpush1.msra.mxu0 0.0
    %4847 = vmatprep.subr.mxu0 0.0
    %4848 = vmatpush1.msra.mxu0 0.0
    %4849 = vmatprep.subr.mxu0 0.0
    %4850 = vmatpush1.msra.mxu0 0.0
    %4851 = vmatprep.subr.mxu0 0.0
    %4852 = vmatpush1.msra.mxu0 0.0
    %4853 = vmatprep.subr.mxu0 0.0
    %4854 = vmatpush1.msra.mxu0 0.0
    %4855 = vmatprep.subr.mxu0 0.0
    %4856 = vmatpush1.msra.mxu0 0.0
    %4857 = vmatprep.subr.mxu0 0.0
    %4858 = vmatpush1.msra.mxu0 0.0
    %4859 = vmatprep.subr.mxu0 0.0
    %4860 = vmatpush1.msra.mxu0 0.0
    %4861 = vmatprep.subr.mxu0 0.0
    %4862 = vmatpush1.msra.mxu0 0.0
    %4863 = vmatprep.subr.mxu0 0.0
    %4864 = vmatpush1.msra.mxu0 0.0
    %4865 = vmatprep.subr.mxu0 0.0
    %4866 = vmatpush1.msra.mxu0 0.0
    %4867 = vmatprep.subr.mxu0 0.0
    %4868 = vmatpush1.msra.mxu0 0.0
    %4869 = vmatprep.subr.mxu0 0.0
    %4870 = vmatpush1.msra.mxu0 0.0
    %4871 = vmatprep.subr.mxu0 0.0
    %4872 = vmatpush1.msra.mxu0 0.0
    %4873 = vmatprep.subr.mxu0 0.0
    %4874 = vmatpush1.msra.mxu0 %v4841
    %4875 = vmatprep.subr.mxu0 0.0
    %4876 = vmatpush2.msra.mxu0 0.0
    %4877 = vmatprep.subr.mxu0 0.0
    %4878 = vmatpush2.msra.mxu0 0.0
    %4879 = vmatprep.subr.mxu0 0.0
    %4880 = vmatpush2.msra.mxu0 0.0
    %4881 = vmatprep.subr.mxu0 0.0
    %4882 = vmatpush2.msra.mxu0 0.0
    %4883 = vmatprep.subr.mxu0 0.0
    %4884 = vmatpush2.msra.mxu0 0.0
    %4885 = vmatprep.subr.mxu0 0.0
    %4886 = vmatpush2.msra.mxu0 0.0
    %4887 = vmatprep.subr.mxu0 0.0
    %4888 = vmatpush2.msra.mxu0 0.0
    %4889 = vmatprep.subr.mxu0 0.0
    %4890 = vmatpush2.msra.mxu0 0.0
    %4891 = vmatprep.subr.mxu0 0.0
    %4892 = vmatpush2.msra.mxu0 0.0
    %4893 = vmatprep.subr.mxu0 0.0
    %4894 = vmatpush2.msra.mxu0 0.0
    %4895 = vmatprep.subr.mxu0 0.0
    %4896 = vmatpush2.msra.mxu0 0.0
    %4897 = vmatprep.subr.mxu0 0.0
    %4898 = vmatpush2.msra.mxu0 0.0
    %4899 = vmatprep.subr.mxu0 0.0
    %4900 = vmatpush2.msra.mxu0 0.0
    %4901 = vmatprep.subr.mxu0 0.0
    %4902 = vmatpush2.msra.mxu0 0.0
    %4903 = vmatprep.subr.mxu0 0.0
    %4904 = vmatpush2.msra.mxu0 0.0
    %4905 = vmatprep.subr.mxu0 0.0
    %4906 = vmatpush2.msra.mxu0 0.0
    %4907 = vmatprep.mubr.f32.mxu0 0.0
    %4908 = vmatmul.mubr.f32.gmra.mxu0 %v4817
    %v4909 = vpop.f32.mrf.mxu0
    %v4910 = vadd.f32 %v4778, %v4909
    %v4911 = vpop.f32.mrf.mxu0
    %4912 = vmatprep.mubr.f32.mxu0 0.0
    %4913 = vmatmul.mubr.f32.gmra.mxu0 %v4820
    %v4914 = vpop.f32.mrf.mxu0
    %v4915 = vadd.f32 %v4783, %v4914
    %v4916 = vpop.f32.mrf.mxu0
    %4917 = vmatprep.mubr.f32.mxu0 0.0
    %4918 = vmatmul.mubr.f32.gmra.mxu0 %v4823
    %v4919 = vpop.f32.mrf.mxu0
    %v4920 = vadd.f32 %v4788, %v4919
    %v4921 = vpop.f32.mrf.mxu0
    %4922 = vmatprep.mubr.f32.mxu0 0.0
    %4923 = vmatmul.mubr.f32.gmra.mxu0 %v4826
    %v4924 = vpop.f32.mrf.mxu0
    %v4925 = vadd.f32 %v4793, %v4924
    %v4926 = vpop.f32.mrf.mxu0
    %4927 = vmatprep.mubr.f32.mxu0 0.0
    %4928 = vmatmul.mubr.f32.gmra.mxu0 %v4829
    %v4929 = vpop.f32.mrf.mxu0
    %v4930 = vadd.f32 %v4798, %v4929
    %v4931 = vpop.f32.mrf.mxu0
    %4932 = vmatprep.mubr.f32.mxu0 0.0
    %4933 = vmatmul.mubr.f32.gmra.mxu0 %v4832
    %v4934 = vpop.f32.mrf.mxu0
    %v4935 = vadd.f32 %v4803, %v4934
    %v4936 = vpop.f32.mrf.mxu0
    %4937 = vmatprep.mubr.f32.mxu0 0.0
    %4938 = vmatmul.mubr.f32.gmra.mxu0 %v4835
    %v4939 = vpop.f32.mrf.mxu0
    %v4940 = vadd.f32 %v4808, %v4939
    %v4941 = vpop.f32.mrf.mxu0
    %4942 = vmatprep.mubr.f32.mxu0 0.0
    %4943 = vmatmul.mubr.f32.gmra.mxu0 %v4838
    %v4944 = vpop.f32.mrf.mxu0
    %v4945 = vadd.f32 %v4813, %v4944
    %v4946 = vpop.f32.mrf.mxu0
    %4947 = vdwg.mxu0
    %v4948 = vmul.f32 %v4658, %v4910
    %v4949 = vmul.f32 %v4659, %v4915
    %v4950 = vmul.f32 %v4660, %v4920
    %v4951 = vmul.f32 %v4661, %v4925
    %v4952 = vmul.f32 %v4662, %v4930
    %v4953 = vmul.f32 %v4663, %v4935
    %v4954 = vmul.f32 %v4664, %v4940
    %v4955 = vmul.f32 %v4665, %v4945
    %v4957 = vsel %vm560, %v4580, 0
    %v4960 = vsel %vm560, %v4585, 0
    %v4963 = vsel %vm560, %v4590, 0
    %v4966 = vsel %vm560, %v4595, 0
    %v4969 = vsel %vm560, %v4600, 0
    %v4972 = vsel %vm560, %v4605, 0
    %v4975 = vsel %vm560, %v4610, 0
    %v4978 = vsel %vm560, %v4615, 0
    %4980 = vmatprep.subr.mxu0 0.0
    %4981 = vmatpush1.msra.mxu0 0.0
    %4982 = vmatprep.subr.mxu0 0.0
    %4983 = vmatpush1.msra.mxu0 0.0
    %4984 = vmatprep.subr.mxu0 0.0
    %4985 = vmatpush1.msra.mxu0 0.0
    %4986 = vmatprep.subr.mxu0 0.0
    %4987 = vmatpush1.msra.mxu0 0.0
    %4988 = vmatprep.subr.mxu0 0.0
    %4989 = vmatpush1.msra.mxu0 0.0
    %4990 = vmatprep.subr.mxu0 0.0
    %4991 = vmatpush1.msra.mxu0 0.0
    %4992 = vmatprep.subr.mxu0 0.0
    %4993 = vmatpush1.msra.mxu0 0.0
    %4994 = vmatprep.subr.mxu0 0.0
    %4995 = vmatpush1.msra.mxu0 0.0
    %4996 = vmatprep.subr.mxu0 0.0
    %4997 = vmatpush1.msra.mxu0 %v4955
    %4998 = vmatprep.subr.mxu0 0.0
    %4999 = vmatpush1.msra.mxu0 %v4954
    %5000 = vmatprep.subr.mxu0 0.0
    %5001 = vmatpush1.msra.mxu0 %v4953
    %5002 = vmatprep.subr.mxu0 0.0
    %5003 = vmatpush1.msra.mxu0 %v4952
    %5004 = vmatprep.subr.mxu0 0.0
    %5005 = vmatpush1.msra.mxu0 %v4951
    %5006 = vmatprep.subr.mxu0 0.0
    %5007 = vmatpush1.msra.mxu0 %v4950
    %5008 = vmatprep.subr.mxu0 0.0
    %5009 = vmatpush1.msra.mxu0 %v4949
    %5010 = vmatprep.subr.mxu0 0.0
    %5011 = vmatpush1.msra.mxu0 %v4948
    %5012 = vmatprep.subr.mxu0 0.0
    %5013 = vmatpush2.msra.mxu0 0.0
    %5014 = vmatprep.subr.mxu0 0.0
    %5015 = vmatpush2.msra.mxu0 0.0
    %5016 = vmatprep.subr.mxu0 0.0
    %5017 = vmatpush2.msra.mxu0 0.0
    %5018 = vmatprep.subr.mxu0 0.0
    %5019 = vmatpush2.msra.mxu0 0.0
    %5020 = vmatprep.subr.mxu0 0.0
    %5021 = vmatpush2.msra.mxu0 0.0
    %5022 = vmatprep.subr.mxu0 0.0
    %5023 = vmatpush2.msra.mxu0 0.0
    %5024 = vmatprep.subr.mxu0 0.0
    %5025 = vmatpush2.msra.mxu0 0.0
    %5026 = vmatprep.subr.mxu0 0.0
    %5027 = vmatpush2.msra.mxu0 0.0
    %5028 = vmatprep.subr.mxu0 0.0
    %5029 = vmatpush2.msra.mxu0 0.0
    %5030 = vmatprep.subr.mxu0 0.0
    %5031 = vmatpush2.msra.mxu0 0.0
    %5032 = vmatprep.subr.mxu0 0.0
    %5033 = vmatpush2.msra.mxu0 0.0
    %5034 = vmatprep.subr.mxu0 0.0
    %5035 = vmatpush2.msra.mxu0 0.0
    %5036 = vmatprep.subr.mxu0 0.0
    %5037 = vmatpush2.msra.mxu0 0.0
    %5038 = vmatprep.subr.mxu0 0.0
    %5039 = vmatpush2.msra.mxu0 0.0
    %5040 = vmatprep.subr.mxu0 0.0
    %5041 = vmatpush2.msra.mxu0 0.0
    %5042 = vmatprep.subr.mxu0 0.0
    %5043 = vmatpush2.msra.mxu0 0.0
    %5044 = vmatprep.mubr.f32.mxu0 0.0
    %5045 = vmatmul.mubr.f32.gmra.mxu0 %v4957
    %v5046 = vpop.f32.mrf.mxu0
    %v5047 = vadd.f32 0.0, %v5046
    %v5048 = vpop.f32.mrf.mxu0
    %5049 = vmatprep.mubr.f32.mxu0 0.0
    %5050 = vmatmul.mubr.f32.gmra.mxu0 %v4960
    %v5051 = vpop.f32.mrf.mxu0
    %v5052 = vadd.f32 0.0, %v5051
    %v5053 = vpop.f32.mrf.mxu0
    %5054 = vmatprep.mubr.f32.mxu0 0.0
    %5055 = vmatmul.mubr.f32.gmra.mxu0 %v4963
    %v5056 = vpop.f32.mrf.mxu0
    %v5057 = vadd.f32 0.0, %v5056
    %v5058 = vpop.f32.mrf.mxu0
    %5059 = vmatprep.mubr.f32.mxu0 0.0
    %5060 = vmatmul.mubr.f32.gmra.mxu0 %v4966
    %v5061 = vpop.f32.mrf.mxu0
    %v5062 = vadd.f32 0.0, %v5061
    %v5063 = vpop.f32.mrf.mxu0
    %5064 = vmatprep.mubr.f32.mxu0 0.0
    %5065 = vmatmul.mubr.f32.gmra.mxu0 %v4969
    %v5066 = vpop.f32.mrf.mxu0
    %v5067 = vadd.f32 0.0, %v5066
    %v5068 = vpop.f32.mrf.mxu0
    %5069 = vmatprep.mubr.f32.mxu0 0.0
    %5070 = vmatmul.mubr.f32.gmra.mxu0 %v4972
    %v5071 = vpop.f32.mrf.mxu0
    %v5072 = vadd.f32 0.0, %v5071
    %v5073 = vpop.f32.mrf.mxu0
    %5074 = vmatprep.mubr.f32.mxu0 0.0
    %5075 = vmatmul.mubr.f32.gmra.mxu0 %v4975
    %v5076 = vpop.f32.mrf.mxu0
    %v5077 = vadd.f32 0.0, %v5076
    %v5078 = vpop.f32.mrf.mxu0
    %5079 = vmatprep.mubr.f32.mxu0 0.0
    %5080 = vmatmul.mubr.f32.gmra.mxu0 %v4978
    %v5081 = vpop.f32.mrf.mxu0
    %v5082 = vadd.f32 0.0, %v5081
    %v5083 = vpop.f32.mrf.mxu0
    %5084 = vdwg.mxu0
    %v5085 = vmul.f32 %v4658, %v5047
    %v5086 = vmul.f32 %v4659, %v5052
    %v5087 = vmul.f32 %v4660, %v5057
    %v5088 = vmul.f32 %v4661, %v5062
    %v5089 = vmul.f32 %v4662, %v5067
    %v5090 = vmul.f32 %v4663, %v5072
    %v5091 = vmul.f32 %v4664, %v5077
    %v5092 = vmul.f32 %v4665, %v5082
    %v5093 = vld [vmem:[%s13] sm:$0x1]
    %v5095 = vlaneseq
    %v5096 = vshrl.u32 %v5095, 7
    %v5097 = vsub.s32 0, %v5096
    %v5098 = vrot.slane %v5093, %v5097
    %v5100 = vadd.f32 %v5085, %v5098
    %v5101 = vadd.f32 %v5086, %v5098
    %v5102 = vadd.f32 %v5087, %v5098
    %v5103 = vadd.f32 %v5088, %v5098
    %v5104 = vadd.f32 %v5089, %v5098
    %v5105 = vadd.f32 %v5090, %v5098
    %v5106 = vadd.f32 %v5091, %v5098
    %v5107 = vadd.f32 %v5092, %v5098
    %v5108 = vmax.f32 %v5100, 0.0
    %v5109 = vmax.f32 %v5101, 0.0
    %v5110 = vmax.f32 %v5102, 0.0
    %v5111 = vmax.f32 %v5103, 0.0
    %v5112 = vmax.f32 %v5104, 0.0
    %v5113 = vmax.f32 %v5105, 0.0
    %v5114 = vmax.f32 %v5106, 0.0
    %v5115 = vmax.f32 %v5107, 0.0
    %v5116 = vld [vmem:[%s14] sm:$0xff]
    %v5117 = vld [vmem:[%s14 + $0x8] sm:$0xff]
    %vm5118 = vcmask 130048
    %v5120 = vsel %vm5118, %v5108, 0
    %v5123 = vsel %vm5118, %v5109, 0
    %v5126 = vsel %vm5118, %v5110, 0
    %v5129 = vsel %vm5118, %v5111, 0
    %v5132 = vsel %vm5118, %v5112, 0
    %v5135 = vsel %vm5118, %v5113, 0
    %v5138 = vsel %vm5118, %v5114, 0
    %v5141 = vsel %vm5118, %v5115, 0
    %5143 = vmatprep.subr.mxu0 0.0
    %5144 = vmatpush1.msra.mxu0 0.0
    %5145 = vmatprep.subr.mxu0 0.0
    %5146 = vmatpush1.msra.mxu0 0.0
    %5147 = vmatprep.subr.mxu0 0.0
    %5148 = vmatpush1.msra.mxu0 0.0
    %5149 = vmatprep.subr.mxu0 0.0
    %5150 = vmatpush1.msra.mxu0 0.0
    %5151 = vmatprep.subr.mxu0 0.0
    %5152 = vmatpush1.msra.mxu0 0.0
    %5153 = vmatprep.subr.mxu0 0.0
    %5154 = vmatpush1.msra.mxu0 0.0
    %5155 = vmatprep.subr.mxu0 0.0
    %5156 = vmatpush1.msra.mxu0 0.0
    %5157 = vmatprep.subr.mxu0 0.0
    %5158 = vmatpush1.msra.mxu0 0.0
    %5159 = vmatprep.subr.mxu0 0.0
    %5160 = vmatpush1.msra.mxu0 0.0
    %5161 = vmatprep.subr.mxu0 0.0
    %5162 = vmatpush1.msra.mxu0 0.0
    %5163 = vmatprep.subr.mxu0 0.0
    %5164 = vmatpush1.msra.mxu0 0.0
    %5165 = vmatprep.subr.mxu0 0.0
    %5166 = vmatpush1.msra.mxu0 0.0
    %5167 = vmatprep.subr.mxu0 0.0
    %5168 = vmatpush1.msra.mxu0 0.0
    %5169 = vmatprep.subr.mxu0 0.0
    %5170 = vmatpush1.msra.mxu0 0.0
    %5171 = vmatprep.subr.mxu0 0.0
    %5172 = vmatpush1.msra.mxu0 %v5117
    %5173 = vmatprep.subr.mxu0 0.0
    %5174 = vmatpush1.msra.mxu0 %v5116
    %5175 = vmatprep.subr.mxu0 0.0
    %5176 = vmatpush2.msra.mxu0 0.0
    %5177 = vmatprep.subr.mxu0 0.0
    %5178 = vmatpush2.msra.mxu0 0.0
    %5179 = vmatprep.subr.mxu0 0.0
    %5180 = vmatpush2.msra.mxu0 0.0
    %5181 = vmatprep.subr.mxu0 0.0
    %5182 = vmatpush2.msra.mxu0 0.0
    %5183 = vmatprep.subr.mxu0 0.0
    %5184 = vmatpush2.msra.mxu0 0.0
    %5185 = vmatprep.subr.mxu0 0.0
    %5186 = vmatpush2.msra.mxu0 0.0
    %5187 = vmatprep.subr.mxu0 0.0
    %5188 = vmatpush2.msra.mxu0 0.0
    %5189 = vmatprep.subr.mxu0 0.0
    %5190 = vmatpush2.msra.mxu0 0.0
    %5191 = vmatprep.subr.mxu0 0.0
    %5192 = vmatpush2.msra.mxu0 0.0
    %5193 = vmatprep.subr.mxu0 0.0
    %5194 = vmatpush2.msra.mxu0 0.0
    %5195 = vmatprep.subr.mxu0 0.0
    %5196 = vmatpush2.msra.mxu0 0.0
    %5197 = vmatprep.subr.mxu0 0.0
    %5198 = vmatpush2.msra.mxu0 0.0
    %5199 = vmatprep.subr.mxu0 0.0
    %5200 = vmatpush2.msra.mxu0 0.0
    %5201 = vmatprep.subr.mxu0 0.0
    %5202 = vmatpush2.msra.mxu0 0.0
    %5203 = vmatprep.subr.mxu0 0.0
    %5204 = vmatpush2.msra.mxu0 0.0
    %5205 = vmatprep.subr.mxu0 0.0
    %5206 = vmatpush2.msra.mxu0 0.0
    %5207 = vmatprep.mubr.f32.mxu0 0.0
    %5208 = vmatmul.mubr.f32.gmra.mxu0 %v5120
    %v5209 = vpop.f32.mrf.mxu0
    %v5210 = vadd.f32 0.0, %v5209
    %v5211 = vpop.f32.mrf.mxu0
    %5212 = vmatprep.mubr.f32.mxu0 0.0
    %5213 = vmatmul.mubr.f32.gmra.mxu0 %v5123
    %v5214 = vpop.f32.mrf.mxu0
    %v5215 = vadd.f32 0.0, %v5214
    %v5216 = vpop.f32.mrf.mxu0
    %5217 = vmatprep.mubr.f32.mxu0 0.0
    %5218 = vmatmul.mubr.f32.gmra.mxu0 %v5126
    %v5219 = vpop.f32.mrf.mxu0
    %v5220 = vadd.f32 0.0, %v5219
    %v5221 = vpop.f32.mrf.mxu0
    %5222 = vmatprep.mubr.f32.mxu0 0.0
    %5223 = vmatmul.mubr.f32.gmra.mxu0 %v5129
    %v5224 = vpop.f32.mrf.mxu0
    %v5225 = vadd.f32 0.0, %v5224
    %v5226 = vpop.f32.mrf.mxu0
    %5227 = vmatprep.mubr.f32.mxu0 0.0
    %5228 = vmatmul.mubr.f32.gmra.mxu0 %v5132
    %v5229 = vpop.f32.mrf.mxu0
    %v5230 = vadd.f32 0.0, %v5229
    %v5231 = vpop.f32.mrf.mxu0
    %5232 = vmatprep.mubr.f32.mxu0 0.0
    %5233 = vmatmul.mubr.f32.gmra.mxu0 %v5135
    %v5234 = vpop.f32.mrf.mxu0
    %v5235 = vadd.f32 0.0, %v5234
    %v5236 = vpop.f32.mrf.mxu0
    %5237 = vmatprep.mubr.f32.mxu0 0.0
    %5238 = vmatmul.mubr.f32.gmra.mxu0 %v5138
    %v5239 = vpop.f32.mrf.mxu0
    %v5240 = vadd.f32 0.0, %v5239
    %v5241 = vpop.f32.mrf.mxu0
    %5242 = vmatprep.mubr.f32.mxu0 0.0
    %5243 = vmatmul.mubr.f32.gmra.mxu0 %v5141
    %v5244 = vpop.f32.mrf.mxu0
    %v5245 = vadd.f32 0.0, %v5244
    %v5246 = vpop.f32.mrf.mxu0
    %5247 = vdwg.mxu0
    %v5248 = vmul.f32 %v4658, %v5210
    %v5249 = vmul.f32 %v4659, %v5215
    %v5250 = vmul.f32 %v4660, %v5220
    %v5251 = vmul.f32 %v4661, %v5225
    %v5252 = vmul.f32 %v4662, %v5230
    %v5253 = vmul.f32 %v4663, %v5235
    %v5254 = vmul.f32 %v4664, %v5240
    %v5255 = vmul.f32 %v4665, %v5245
    %5256 = vmatprep.subr.mxu0 0.0
    %5257 = vmatpush1.msra.mxu0 0.0
    %5258 = vmatprep.subr.mxu0 0.0
    %5259 = vmatpush1.msra.mxu0 0.0
    %5260 = vmatprep.subr.mxu0 0.0
    %5261 = vmatpush1.msra.mxu0 0.0
    %5262 = vmatprep.subr.mxu0 0.0
    %5263 = vmatpush1.msra.mxu0 0.0
    %5264 = vmatprep.subr.mxu0 0.0
    %5265 = vmatpush1.msra.mxu0 0.0
    %5266 = vmatprep.subr.mxu0 0.0
    %5267 = vmatpush1.msra.mxu0 0.0
    %5268 = vmatprep.subr.mxu0 0.0
    %5269 = vmatpush1.msra.mxu0 0.0
    %5270 = vmatprep.subr.mxu0 0.0
    %5271 = vmatpush1.msra.mxu0 0.0
    %5272 = vmatprep.subr.mxu0 0.0
    %5273 = vmatpush1.msra.mxu0 %v5255
    %5274 = vmatprep.subr.mxu0 0.0
    %5275 = vmatpush1.msra.mxu0 %v5254
    %5276 = vmatprep.subr.mxu0 0.0
    %5277 = vmatpush1.msra.mxu0 %v5253
    %5278 = vmatprep.subr.mxu0 0.0
    %5279 = vmatpush1.msra.mxu0 %v5252
    %5280 = vmatprep.subr.mxu0 0.0
    %5281 = vmatpush1.msra.mxu0 %v5251
    %5282 = vmatprep.subr.mxu0 0.0
    %5283 = vmatpush1.msra.mxu0 %v5250
    %5284 = vmatprep.subr.mxu0 0.0
    %5285 = vmatpush1.msra.mxu0 %v5249
    %5286 = vmatprep.subr.mxu0 0.0
    %5287 = vmatpush1.msra.mxu0 %v5248
    %5288 = vmatprep.subr.mxu0 0.0
    %5289 = vmatpush2.msra.mxu0 0.0
    %5290 = vmatprep.subr.mxu0 0.0
    %5291 = vmatpush2.msra.mxu0 0.0
    %5292 = vmatprep.subr.mxu0 0.0
    %5293 = vmatpush2.msra.mxu0 0.0
    %5294 = vmatprep.subr.mxu0 0.0
    %5295 = vmatpush2.msra.mxu0 0.0
    %5296 = vmatprep.subr.mxu0 0.0
    %5297 = vmatpush2.msra.mxu0 0.0
    %5298 = vmatprep.subr.mxu0 0.0
    %5299 = vmatpush2.msra.mxu0 0.0
    %5300 = vmatprep.subr.mxu0 0.0
    %5301 = vmatpush2.msra.mxu0 0.0
    %5302 = vmatprep.subr.mxu0 0.0
    %5303 = vmatpush2.msra.mxu0 0.0
    %5304 = vmatprep.subr.mxu0 0.0
    %5305 = vmatpush2.msra.mxu0 0.0
    %5306 = vmatprep.subr.mxu0 0.0
    %5307 = vmatpush2.msra.mxu0 0.0
    %5308 = vmatprep.subr.mxu0 0.0
    %5309 = vmatpush2.msra.mxu0 0.0
    %5310 = vmatprep.subr.mxu0 0.0
    %5311 = vmatpush2.msra.mxu0 0.0
    %5312 = vmatprep.subr.mxu0 0.0
    %5313 = vmatpush2.msra.mxu0 0.0
    %5314 = vmatprep.subr.mxu0 0.0
    %5315 = vmatpush2.msra.mxu0 0.0
    %5316 = vmatprep.subr.mxu0 0.0
    %5317 = vmatpush2.msra.mxu0 0.0
    %5318 = vmatprep.subr.mxu0 0.0
    %5319 = vmatpush2.msra.mxu0 0.0
    %5320 = vmatprep.mubr.f32.mxu0 0.0
    %5321 = vmatmul.mubr.f32.gmra.mxu0 %v4957
    %v5322 = vpop.f32.mrf.mxu0
    %v5323 = vadd.f32 0.0, %v5322
    %v5324 = vpop.f32.mrf.mxu0
    %5325 = vmatprep.mubr.f32.mxu0 0.0
    %5326 = vmatmul.mubr.f32.gmra.mxu0 %v4960
    %v5327 = vpop.f32.mrf.mxu0
    %v5328 = vadd.f32 0.0, %v5327
    %v5329 = vpop.f32.mrf.mxu0
    %5330 = vmatprep.mubr.f32.mxu0 0.0
    %5331 = vmatmul.mubr.f32.gmra.mxu0 %v4963
    %v5332 = vpop.f32.mrf.mxu0
    %v5333 = vadd.f32 0.0, %v5332
    %v5334 = vpop.f32.mrf.mxu0
    %5335 = vmatprep.mubr.f32.mxu0 0.0
    %5336 = vmatmul.mubr.f32.gmra.mxu0 %v4966
    %v5337 = vpop.f32.mrf.mxu0
    %v5338 = vadd.f32 0.0, %v5337
    %v5339 = vpop.f32.mrf.mxu0
    %5340 = vmatprep.mubr.f32.mxu0 0.0
    %5341 = vmatmul.mubr.f32.gmra.mxu0 %v4969
    %v5342 = vpop.f32.mrf.mxu0
    %v5343 = vadd.f32 0.0, %v5342
    %v5344 = vpop.f32.mrf.mxu0
    %5345 = vmatprep.mubr.f32.mxu0 0.0
    %5346 = vmatmul.mubr.f32.gmra.mxu0 %v4972
    %v5347 = vpop.f32.mrf.mxu0
    %v5348 = vadd.f32 0.0, %v5347
    %v5349 = vpop.f32.mrf.mxu0
    %5350 = vmatprep.mubr.f32.mxu0 0.0
    %5351 = vmatmul.mubr.f32.gmra.mxu0 %v4975
    %v5352 = vpop.f32.mrf.mxu0
    %v5353 = vadd.f32 0.0, %v5352
    %v5354 = vpop.f32.mrf.mxu0
    %5355 = vmatprep.mubr.f32.mxu0 0.0
    %5356 = vmatmul.mubr.f32.gmra.mxu0 %v4978
    %v5357 = vpop.f32.mrf.mxu0
    %v5358 = vadd.f32 0.0, %v5357
    %v5359 = vpop.f32.mrf.mxu0
    %5360 = vdwg.mxu0
    %v5361 = vmul.f32 %v4658, %v5323
    %v5362 = vmul.f32 %v4659, %v5328
    %v5363 = vmul.f32 %v4660, %v5333
    %v5364 = vmul.f32 %v4661, %v5338
    %v5365 = vmul.f32 %v4662, %v5343
    %v5366 = vmul.f32 %v4663, %v5348
    %v5367 = vmul.f32 %v4664, %v5353
    %v5368 = vmul.f32 %v4665, %v5358
    %v5369 = vld [vmem:[%s15] sm:$0x1]
    %v5371 = vlaneseq
    %v5372 = vshrl.u32 %v5371, 7
    %v5373 = vsub.s32 0, %v5372
    %v5374 = vrot.slane %v5369, %v5373
    %v5376 = vadd.f32 %v5361, %v5374
    %v5377 = vadd.f32 %v5362, %v5374
    %v5378 = vadd.f32 %v5363, %v5374
    %v5379 = vadd.f32 %v5364, %v5374
    %v5380 = vadd.f32 %v5365, %v5374
    %v5381 = vadd.f32 %v5366, %v5374
    %v5382 = vadd.f32 %v5367, %v5374
    %v5383 = vadd.f32 %v5368, %v5374
    %v5384 = vmax.f32 %v5376, 0.0
    %v5385 = vmax.f32 %v5377, 0.0
    %v5386 = vmax.f32 %v5378, 0.0
    %v5387 = vmax.f32 %v5379, 0.0
    %v5388 = vmax.f32 %v5380, 0.0
    %v5389 = vmax.f32 %v5381, 0.0
    %v5390 = vmax.f32 %v5382, 0.0
    %v5391 = vmax.f32 %v5383, 0.0
    %v5392 = vld [vmem:[%s4] sm:$0x1]
    %v5393 = vlaneseq
    %v5394 = vshrl.u32 %v5393, 7
    %v5395 = vsub.s32 0, %v5394
    %v5396 = vrot.slane %v5392, %v5395
    %vm5397 = vcmp.eq.s32.totalorder %v496, %v5396
    %v5398 = vsel %vm5397, 1, 0
    %v5399 = vcvt.s32.f32 %v5398
    %vm5400 = vcmask 517120
    %v5401 = vsel %vm5400, %v5399, 0.0
    %5402 = vadd.xlane.f32.xlu0 %v5401
    %v5403 = vpop.xlane.xlu0 %5402
    %v5405 = vsel %vm560, %v5399, 0
    %5407 = vmatprep.subr.mxu0 0.0
    %5408 = vmatpush1.msra.mxu0 0.0
    %5409 = vmatprep.subr.mxu0 0.0
    %5410 = vmatpush1.msra.mxu0 0.0
    %5411 = vmatprep.subr.mxu0 0.0
    %5412 = vmatpush1.msra.mxu0 0.0
    %5413 = vmatprep.subr.mxu0 0.0
    %5414 = vmatpush1.msra.mxu0 0.0
    %5415 = vmatprep.subr.mxu0 0.0
    %5416 = vmatpush1.msra.mxu0 0.0
    %5417 = vmatprep.subr.mxu0 0.0
    %5418 = vmatpush1.msra.mxu0 0.0
    %5419 = vmatprep.subr.mxu0 0.0
    %5420 = vmatpush1.msra.mxu0 0.0
    %5421 = vmatprep.subr.mxu0 0.0
    %5422 = vmatpush1.msra.mxu0 0.0
    %5423 = vmatprep.subr.mxu0 0.0
    %5424 = vmatpush1.msra.mxu0 %v5391
    %5425 = vmatprep.subr.mxu0 0.0
    %5426 = vmatpush1.msra.mxu0 %v5390
    %5427 = vmatprep.subr.mxu0 0.0
    %5428 = vmatpush1.msra.mxu0 %v5389
    %5429 = vmatprep.subr.mxu0 0.0
    %5430 = vmatpush1.msra.mxu0 %v5388
    %5431 = vmatprep.subr.mxu0 0.0
    %5432 = vmatpush1.msra.mxu0 %v5387
    %5433 = vmatprep.subr.mxu0 0.0
    %5434 = vmatpush1.msra.mxu0 %v5386
    %5435 = vmatprep.subr.mxu0 0.0
    %5436 = vmatpush1.msra.mxu0 %v5385
    %5437 = vmatprep.subr.mxu0 0.0
    %5438 = vmatpush1.msra.mxu0 %v5384
    %5439 = vmatprep.subr.mxu0 0.0
    %5440 = vmatpush2.msra.mxu0 0.0
    %5441 = vmatprep.subr.mxu0 0.0
    %5442 = vmatpush2.msra.mxu0 0.0
    %5443 = vmatprep.subr.mxu0 0.0
    %5444 = vmatpush2.msra.mxu0 0.0
    %5445 = vmatprep.subr.mxu0 0.0
    %5446 = vmatpush2.msra.mxu0 0.0
    %5447 = vmatprep.subr.mxu0 0.0
    %5448 = vmatpush2.msra.mxu0 0.0
    %5449 = vmatprep.subr.mxu0 0.0
    %5450 = vmatpush2.msra.mxu0 0.0
    %5451 = vmatprep.subr.mxu0 0.0
    %5452 = vmatpush2.msra.mxu0 0.0
    %5453 = vmatprep.subr.mxu0 0.0
    %5454 = vmatpush2.msra.mxu0 0.0
    %5455 = vmatprep.subr.mxu0 0.0
    %5456 = vmatpush2.msra.mxu0 0.0
    %5457 = vmatprep.subr.mxu0 0.0
    %5458 = vmatpush2.msra.mxu0 0.0
    %5459 = vmatprep.subr.mxu0 0.0
    %5460 = vmatpush2.msra.mxu0 0.0
    %5461 = vmatprep.subr.mxu0 0.0
    %5462 = vmatpush2.msra.mxu0 0.0
    %5463 = vmatprep.subr.mxu0 0.0
    %5464 = vmatpush2.msra.mxu0 0.0
    %5465 = vmatprep.subr.mxu0 0.0
    %5466 = vmatpush2.msra.mxu0 0.0
    %5467 = vmatprep.subr.mxu0 0.0
    %5468 = vmatpush2.msra.mxu0 0.0
    %5469 = vmatprep.subr.mxu0 0.0
    %5470 = vmatpush2.msra.mxu0 0.0
    %5471 = vmatprep.mubr.f32.mxu0 0.0
    %5472 = vmatmul.mubr.f32.gmra.mxu0 %v5405
    %v5473 = vpop.f32.mrf.mxu0
    %v5474 = vadd.f32 0.0, %v5473
    %v5475 = vpop.f32.mrf.mxu0
    %5476 = vdwg.mxu0
    %v5477 = vmax.f32 %v5403, 1.0
    %v5478 = vrcp.pop %v5477
    %v5479 = vmul.f32 %v5474, %v5478
    %v5480 = vld [vmem:[%s16] sm:$0xff]
    %v5481 = vld [vmem:[%s16 + $0x8] sm:$0xff]
    %v5482 = vld [vmem:[%s17] sm:$0x1]
    %v5484 = vlaneseq
    %v5485 = vshrl.u32 %v5484, 7
    %v5486 = vsub.s32 0, %v5485
    %v5487 = vrot.slane %v5482, %v5486
    %v5490 = vsel %vm5118, %v5479, 0
    %5492 = vmatprep.subr.mxu0 0.0
    %5493 = vmatpush1.msra.mxu0 0.0
    %5494 = vmatprep.subr.mxu0 0.0
    %5495 = vmatpush1.msra.mxu0 0.0
    %5496 = vmatprep.subr.mxu0 0.0
    %5497 = vmatpush1.msra.mxu0 0.0
    %5498 = vmatprep.subr.mxu0 0.0
    %5499 = vmatpush1.msra.mxu0 0.0
    %5500 = vmatprep.subr.mxu0 0.0
    %5501 = vmatpush1.msra.mxu0 0.0
    %5502 = vmatprep.subr.mxu0 0.0
    %5503 = vmatpush1.msra.mxu0 0.0
    %5504 = vmatprep.subr.mxu0 0.0
    %5505 = vmatpush1.msra.mxu0 0.0
    %5506 = vmatprep.subr.mxu0 0.0
    %5507 = vmatpush1.msra.mxu0 0.0
    %5508 = vmatprep.subr.mxu0 0.0
    %5509 = vmatpush1.msra.mxu0 0.0
    %5510 = vmatprep.subr.mxu0 0.0
    %5511 = vmatpush1.msra.mxu0 0.0
    %5512 = vmatprep.subr.mxu0 0.0
    %5513 = vmatpush1.msra.mxu0 0.0
    %5514 = vmatprep.subr.mxu0 0.0
    %5515 = vmatpush1.msra.mxu0 0.0
    %5516 = vmatprep.subr.mxu0 0.0
    %5517 = vmatpush1.msra.mxu0 0.0
    %5518 = vmatprep.subr.mxu0 0.0
    %5519 = vmatpush1.msra.mxu0 0.0
    %5520 = vmatprep.subr.mxu0 0.0
    %5521 = vmatpush1.msra.mxu0 %v5481
    %5522 = vmatprep.subr.mxu0 0.0
    %5523 = vmatpush1.msra.mxu0 %v5480
    %5524 = vmatprep.subr.mxu0 0.0
    %5525 = vmatpush2.msra.mxu0 0.0
    %5526 = vmatprep.subr.mxu0 0.0
    %5527 = vmatpush2.msra.mxu0 0.0
    %5528 = vmatprep.subr.mxu0 0.0
    %5529 = vmatpush2.msra.mxu0 0.0
    %5530 = vmatprep.subr.mxu0 0.0
    %5531 = vmatpush2.msra.mxu0 0.0
    %5532 = vmatprep.subr.mxu0 0.0
    %5533 = vmatpush2.msra.mxu0 0.0
    %5534 = vmatprep.subr.mxu0 0.0
    %5535 = vmatpush2.msra.mxu0 0.0
    %5536 = vmatprep.subr.mxu0 0.0
    %5537 = vmatpush2.msra.mxu0 0.0
    %5538 = vmatprep.subr.mxu0 0.0
    %5539 = vmatpush2.msra.mxu0 0.0
    %5540 = vmatprep.subr.mxu0 0.0
    %5541 = vmatpush2.msra.mxu0 0.0
    %5542 = vmatprep.subr.mxu0 0.0
    %5543 = vmatpush2.msra.mxu0 0.0
    %5544 = vmatprep.subr.mxu0 0.0
    %5545 = vmatpush2.msra.mxu0 0.0
    %5546 = vmatprep.subr.mxu0 0.0
    %5547 = vmatpush2.msra.mxu0 0.0
    %5548 = vmatprep.subr.mxu0 0.0
    %5549 = vmatpush2.msra.mxu0 0.0
    %5550 = vmatprep.subr.mxu0 0.0
    %5551 = vmatpush2.msra.mxu0 0.0
    %5552 = vmatprep.subr.mxu0 0.0
    %5553 = vmatpush2.msra.mxu0 0.0
    %5554 = vmatprep.subr.mxu0 0.0
    %5555 = vmatpush2.msra.mxu0 0.0
    %5556 = vmatprep.mubr.f32.mxu0 0.0
    %5557 = vmatmul.mubr.f32.gmra.mxu0 %v5490
    %v5558 = vpop.f32.mrf.mxu0
    %v5559 = vadd.f32 %v5487, %v5558
    %v5560 = vpop.f32.mrf.mxu0
    %5561 = vdwg.mxu0
    %vm5562 = vcmask 74752
    %5563 = vst.msk [vmem:[#allocation2] sm:$0x3] %vm5562, %v5559
    // Predicated region
    $region74: #{tpu_custom_call.1} parent=1 // pred_check
      _
    $region75: #{tpu_custom_call.1} parent=1 // pred_check_branch
      %5565 = sbr.rel (0) target = $region77
    $region76: #{tpu_custom_call.1} parent=1 // pred_region
      %s5567 = ssub.s32 32, 32
      %5568 = vsyncadd [#allocation3], %s5567
      %s5570 = sshll.u32 [#allocation2], 4
      %s5571 = int_to_ptr.vmem [resolvable:$true] %s5570
      %5573 = dma.vmem_to_hbm [thread:$0]  %s5571, 32, %s18, [#allocation3]
    $region77: #{tpu_custom_call.1} parent=1 // pred_fallthru
      _
    // Predicated region
    $region78: #{tpu_custom_call.1} parent=1 // pred_check
      _
    $region79: #{tpu_custom_call.1} parent=1 // pred_check_branch
      %5575 = sbr.rel (0) target = $region81
    $region80: #{tpu_custom_call.1} parent=1 // pred_region
      %5576 = dma.done [#allocation3], 32
    $region81: #{tpu_custom_call.1} parent=1 // pred_fallthru
      _
    %5577 = vsyncpa [#allocation3], 1

</llo_original>
